<compile_context>
chip_gen: v5e
topology: v5e:2x2
jax: 0.10.0
libtpu: 0.0.40
codegen_flags: <defaults>
</compile_context>

<pallas_src>
import jax
import jax.numpy as jnp
import numpy as np
from jax.experimental import pallas as pl
from jax.experimental.pallas import tpu as pltpu

HIDDEN = 1024
EPS = 1e-5            # PyTorch BatchNorm1d default eps
LANE = 128
SUBLANE_BF16 = 16     # bf16 packs 2 rows per sublane -> native (16,128) tile
TILE_B_MAX = 256      # batch tile for the "parallel" grid axis


def _round_up(n, m):
    return ((n + m - 1) // m) * m


def _dnn_fused_kernel(x_ref, w1_ref, t1_ref, w2q_ref, s2_ref, t2_ref,
                      w3q_ref, s3_ref, b3_ref, o_ref):
    """Whole network for one batch tile.

    BN scale is pre-folded into the weight columns, so each hidden layer is
    relu(x @ W + shift).  W1 is bf16 (tiny); W2/W3 are streamed as int8 and
    dequantized in-kernel (per-column scale applied to the f32 accumulator).
    The shared W2 is cast to bf16 once and reused for both of its matmuls.
    All matmuls accumulate in f32 on the MXU via preferred_element_type."""
    h = x_ref[...].astype(jnp.bfloat16)

    # layer 1: Linear(num_genes, 1024) + BN + ReLU  (scale folded into W1)
    h = jnp.dot(h, w1_ref[...], preferred_element_type=jnp.float32)
    h = jnp.maximum(h + t1_ref[...], 0.0)

    # shared Linear(1024,1024)+BN: int8 weight streamed from HBM, dequantized
    # to bf16 ONCE, reused for both applications of the same layer.
    w2 = w2q_ref[...].astype(jnp.bfloat16)

    # layer 2
    h = jnp.dot(h.astype(jnp.bfloat16), w2, preferred_element_type=jnp.float32)
    h = jnp.maximum(h * s2_ref[...] + t2_ref[...], 0.0)
    # layer 3: the SAME Linear / BN applied again
    h = jnp.dot(h.astype(jnp.bfloat16), w2, preferred_element_type=jnp.float32)
    h = jnp.maximum(h * s2_ref[...] + t2_ref[...], 0.0)

    # final Linear(1024, num_classes padded to 128 lanes), int8 weight
    w3 = w3q_ref[...].astype(jnp.bfloat16)
    h = jnp.dot(h.astype(jnp.bfloat16), w3, preferred_element_type=jnp.float32)
    o_ref[...] = (h * s3_ref[...] + b3_ref[...]).astype(o_ref.dtype)


def init_params(key, num_genes, num_classes):
    """Deterministic synthetic parameters matching the module's shapes.
    Mirrors the sharing in the original module: one h2 Linear (used twice) and
    one BatchNorm1d (used three times)."""
    ks = jax.random.split(key, 10)
    b_in = 1.0 / np.sqrt(num_genes)
    b_h = 1.0 / np.sqrt(HIDDEN)
    return dict(
        W1=jax.random.uniform(ks[0], (num_genes, HIDDEN), jnp.float32, -b_in, b_in),
        b1=jax.random.uniform(ks[1], (HIDDEN,), jnp.float32, -b_in, b_in),
        W2=jax.random.uniform(ks[2], (HIDDEN, HIDDEN), jnp.float32, -b_h, b_h),
        b2=jax.random.uniform(ks[3], (HIDDEN,), jnp.float32, -b_h, b_h),
        W3=jax.random.uniform(ks[4], (HIDDEN, num_classes), jnp.float32, -b_h, b_h),
        b3=jax.random.uniform(ks[5], (num_classes,), jnp.float32, -b_h, b_h),
        gamma=1.0 + 0.1 * jax.random.normal(ks[6], (HIDDEN,), jnp.float32),
        beta=0.1 * jax.random.normal(ks[7], (HIDDEN,), jnp.float32),
        mean=0.1 * jax.random.normal(ks[8], (HIDDEN,), jnp.float32),
        var=jnp.abs(1.0 + 0.1 * jax.random.normal(ks[9], (HIDDEN,), jnp.float32)),
    )


def _quantize_int8_cols(w):
    """Symmetric per-output-column int8 quantization: w ~= wq * scale[col]."""
    amax = jnp.max(jnp.abs(w), axis=0)
    scale = jnp.where(amax > 0, amax / 127.0, jnp.float32(1.0))
    wq = jnp.clip(jnp.round(w / scale[None, :]), -127, 127).astype(jnp.int8)
    return wq, scale.astype(jnp.float32)


def prepare_inference_params(raw):
    """One-time (offline) parameter prep — done outside the hot path:
      * fold BN (gamma, beta, running mean/var) and the Linear bias into the
        weight columns + a per-feature shift:
            relu(bn(xW + b)) == relu(x (W*s) + t),  s = gamma/sqrt(var+eps),
                                                    t = (b - mean)*s + beta
      * W1 -> bf16 (tiny); W2 (BN-folded) and W3 -> per-column int8 + f32
        scale vectors (halves the dominant streamed weight bytes),
      * pad the final output features to a lane-aligned multiple of 128."""
    bn_s = raw["gamma"] / jnp.sqrt(raw["var"] + EPS)                  # (1024,)
    w1 = (raw["W1"] * bn_s[None, :]).astype(jnp.bfloat16)
    t1 = ((raw["b1"] - raw["mean"]) * bn_s + raw["beta"]).astype(jnp.float32)

    w2f = raw["W2"] * bn_s[None, :]
    w2q, s2 = _quantize_int8_cols(w2f)
    t2 = ((raw["b2"] - raw["mean"]) * bn_s + raw["beta"]).astype(jnp.float32)

    nc = raw["W3"].shape[1]
    ncp = _round_up(nc, LANE)
    w3p = jnp.pad(raw["W3"], ((0, 0), (0, ncp - nc)))
    w3q, s3 = _quantize_int8_cols(w3p)
    b3 = jnp.pad(raw["b3"], (0, ncp - nc)).astype(jnp.float32)

    return dict(W1=w1, t1=t1.reshape(1, HIDDEN),
                W2q=w2q, s2=s2.reshape(1, HIDDEN), t2=t2.reshape(1, HIDDEN),
                W3q=w3q, s3=s3.reshape(1, ncp), b3=b3.reshape(1, ncp),
                num_classes=nc)


def dnn_forward(x, prep):
    """Run the fused network.  x: (B, num_genes) f32 -> (B, num_classes) f32."""
    B, G = x.shape
    ncp = prep["W3q"].shape[1]

    # Pad batch to the bf16 sublane tile (16) and to a whole number of tiles.
    Bp = _round_up(B, SUBLANE_BF16)
    tile_b = min(Bp, TILE_B_MAX)
    Bp = _round_up(Bp, tile_b)
    xp = jnp.pad(x, ((0, Bp - B), (0, 0))) if Bp != B else x
    grid = (Bp // tile_b,)

    # Advisory cost so XLA schedules the surrounding pad/slice around the call.
    weight_bytes = (prep["W1"].size * 2 + prep["W2q"].size + prep["W3q"].size
                    + 4 * (prep["t1"].size + prep["s2"].size + prep["t2"].size
                           + prep["s3"].size + prep["b3"].size))
    flops = 2 * Bp * (G * HIDDEN + 2 * HIDDEN * HIDDEN + HIDDEN * ncp)
    cost = pl.CostEstimate(flops=flops, transcendentals=0,
                           bytes_accessed=weight_bytes + xp.size * 4 + Bp * ncp * 4)

    const = lambda i: (0, 0)   # weights/params stay resident across batch tiles
    out = pl.pallas_call(
        _dnn_fused_kernel,
        out_shape=jax.ShapeDtypeStruct((Bp, ncp), jnp.float32),
        grid=grid,
        in_specs=[
            pl.BlockSpec((tile_b, G), lambda i: (i, 0)),      # x tile
            pl.BlockSpec((G, HIDDEN), const),                 # W1 (bf16)
            pl.BlockSpec((1, HIDDEN), const),                 # t1
            pl.BlockSpec((HIDDEN, HIDDEN), const),            # W2 (int8)
            pl.BlockSpec((1, HIDDEN), const),                 # s2
            pl.BlockSpec((1, HIDDEN), const),                 # t2
            pl.BlockSpec((HIDDEN, ncp), const),               # W3 (int8)
            pl.BlockSpec((1, ncp), const),                    # s3
            pl.BlockSpec((1, ncp), const),                    # b3
        ],
        out_specs=pl.BlockSpec((tile_b, ncp), lambda i: (i, 0)),
        compiler_params=pltpu.CompilerParams(
            dimension_semantics=("parallel",),    # megacore-shard batch tiles
            vmem_limit_bytes=16 * 1024 * 1024),   # ~5 MiB actual; headroom on v7x
        cost_estimate=cost,
    )(xp, prep["W1"], prep["t1"], prep["W2q"], prep["s2"], prep["t2"],
      prep["W3q"], prep["s3"], prep["b3"])
    return out[:B, :prep["num_classes"]]


def dnn_reference(x, raw):
    """Plain-JAX eval-mode reference (f32, highest matmul precision)."""
    hp = jax.lax.Precision.HIGHEST

    def bn(y):
        return ((y - raw["mean"]) / jnp.sqrt(raw["var"] + EPS)
                * raw["gamma"] + raw["beta"])

    h = jnp.maximum(bn(jnp.dot(x, raw["W1"], precision=hp) + raw["b1"]), 0.0)
    h = jnp.maximum(bn(jnp.dot(h, raw["W2"], precision=hp) + raw["b2"]), 0.0)
    h = jnp.maximum(bn(jnp.dot(h, raw["W2"], precision=hp) + raw["b2"]), 0.0)
    return jnp.dot(h, raw["W3"], precision=hp) + raw["b3"]


if __name__ == "__main__":
    num_genes, num_classes, batch = 32, 10, 8
    key = jax.random.PRNGKey(0)
    key, kx = jax.random.split(key)
    x = jax.random.normal(kx, (batch, num_genes), jnp.float32)

    raw = init_params(key, num_genes, num_classes)
    prep = prepare_inference_params(raw)

    out = jax.block_until_ready(dnn_forward(x, prep))
    assert out.shape == (batch, num_classes)

    ref = jax.block_until_ready(dnn_reference(x, raw))
    np.testing.assert_allclose(np.asarray(out), np.asarray(ref),
                               rtol=2e-2, atol=2e-2)
    print("KERNEL_OK")
</pallas_src>

<mosaic_0001>
module attributes {stable_mosaic.version = 11 : i64} {
  func.func @_dnn_fused_kernel(%arg0: i32, %arg1: memref<16x32xf32, #tpu.memory_space<vmem>>, %arg2: memref<32x1024xbf16, #tpu.memory_space<vmem>>, %arg3: memref<1x1024xf32, #tpu.memory_space<vmem>>, %arg4: memref<1024x1024xi8, #tpu.memory_space<vmem>>, %arg5: memref<1x1024xf32, #tpu.memory_space<vmem>>, %arg6: memref<1x1024xf32, #tpu.memory_space<vmem>>, %arg7: memref<1024x128xi8, #tpu.memory_space<vmem>>, %arg8: memref<1x128xf32, #tpu.memory_space<vmem>>, %arg9: memref<1x128xf32, #tpu.memory_space<vmem>>, %arg10: memref<16x128xf32, #tpu.memory_space<vmem>>) attributes {dimension_semantics = [#tpu.dimension_semantics<parallel>], iteration_bounds = array<i64: 1>, scalar_prefetch = 0 : i64, scratch_operands = 0 : i64, tpu.core_type = #tpu.core_type<tc>, window_params = [{transform_indices = @transform_0, window_bounds = array<i64: 16, 32>}, {pipeline_mode = #tpu.pipeline_mode<synchronous>, transform_indices = @transform_1, window_bounds = array<i64: 32, 1024>}, {pipeline_mode = #tpu.pipeline_mode<synchronous>, transform_indices = @transform_2, window_bounds = array<i64: 1, 1024>}, {pipeline_mode = #tpu.pipeline_mode<synchronous>, transform_indices = @transform_3, window_bounds = array<i64: 1024, 1024>}, {pipeline_mode = #tpu.pipeline_mode<synchronous>, transform_indices = @transform_4, window_bounds = array<i64: 1, 1024>}, {pipeline_mode = #tpu.pipeline_mode<synchronous>, transform_indices = @transform_5, window_bounds = array<i64: 1, 1024>}, {pipeline_mode = #tpu.pipeline_mode<synchronous>, transform_indices = @transform_6, window_bounds = array<i64: 1024, 128>}, {pipeline_mode = #tpu.pipeline_mode<synchronous>, transform_indices = @transform_7, window_bounds = array<i64: 1, 128>}, {pipeline_mode = #tpu.pipeline_mode<synchronous>, transform_indices = @transform_8, window_bounds = array<i64: 1, 128>}, {transform_indices = @transform_9, window_bounds = array<i64: 16, 128>}]} {
    %c0 = arith.constant 0 : index
    %c0_0 = arith.constant 0 : index
    %0 = vector.load %arg1[%c0, %c0_0] : memref<16x32xf32, #tpu.memory_space<vmem>>, vector<16x32xf32>
    %1 = arith.truncf %0 : vector<16x32xf32> to vector<16x32xbf16>
    %c0_1 = arith.constant 0 : index
    %c0_2 = arith.constant 0 : index
    %2 = vector.load %arg2[%c0_1, %c0_2] : memref<32x1024xbf16, #tpu.memory_space<vmem>>, vector<32x1024xbf16>
    %cst = arith.constant dense<0.000000e+00> : vector<16x1024xf32>
    %3 = tpu.matmul %1, %2, %cst {dimension_numbers = #tpu.dot_dimension_numbers<[1], [0], [0], [1], [0, 0, 1, 1], [], []>} : vector<16x32xbf16>, vector<32x1024xbf16>, vector<16x1024xf32> -> vector<16x1024xf32>
    %c0_3 = arith.constant 0 : index
    %c0_4 = arith.constant 0 : index
    %4 = vector.load %arg3[%c0_3, %c0_4] : memref<1x1024xf32, #tpu.memory_space<vmem>>, vector<1x1024xf32>
    %5 = vector.broadcast %4 : vector<1x1024xf32> to vector<16x1024xf32>
    %6 = arith.addf %3, %5 : vector<16x1024xf32>
    %cst_5 = arith.constant 0.000000e+00 : f32
    %7 = vector.broadcast %cst_5 : f32 to vector<16x1024xf32>
    %8 = arith.maximumf %6, %7 : vector<16x1024xf32>
    %c0_6 = arith.constant 0 : index
    %c0_7 = arith.constant 0 : index
    %9 = vector.load %arg4[%c0_6, %c0_7] : memref<1024x1024xi8, #tpu.memory_space<vmem>>, vector<1024x1024xi8>
    %10 = arith.sitofp %9 : vector<1024x1024xi8> to vector<1024x1024xbf16>
    %11 = arith.truncf %8 : vector<16x1024xf32> to vector<16x1024xbf16>
    %cst_8 = arith.constant dense<0.000000e+00> : vector<16x1024xf32>
    %12 = tpu.matmul %11, %10, %cst_8 {dimension_numbers = #tpu.dot_dimension_numbers<[1], [0], [0], [1], [0, 0, 1, 1], [], []>} : vector<16x1024xbf16>, vector<1024x1024xbf16>, vector<16x1024xf32> -> vector<16x1024xf32>
    %c0_9 = arith.constant 0 : index
    %c0_10 = arith.constant 0 : index
    %13 = vector.load %arg5[%c0_9, %c0_10] : memref<1x1024xf32, #tpu.memory_space<vmem>>, vector<1x1024xf32>
    %14 = vector.broadcast %13 : vector<1x1024xf32> to vector<16x1024xf32>
    %15 = arith.mulf %12, %14 : vector<16x1024xf32>
    %c0_11 = arith.constant 0 : index
    %c0_12 = arith.constant 0 : index
    %16 = vector.load %arg6[%c0_11, %c0_12] : memref<1x1024xf32, #tpu.memory_space<vmem>>, vector<1x1024xf32>
    %17 = vector.broadcast %16 : vector<1x1024xf32> to vector<16x1024xf32>
    %18 = arith.addf %15, %17 : vector<16x1024xf32>
    %cst_13 = arith.constant 0.000000e+00 : f32
    %19 = vector.broadcast %cst_13 : f32 to vector<16x1024xf32>
    %20 = arith.maximumf %18, %19 : vector<16x1024xf32>
    %21 = arith.truncf %20 : vector<16x1024xf32> to vector<16x1024xbf16>
    %cst_14 = arith.constant dense<0.000000e+00> : vector<16x1024xf32>
    %22 = tpu.matmul %21, %10, %cst_14 {dimension_numbers = #tpu.dot_dimension_numbers<[1], [0], [0], [1], [0, 0, 1, 1], [], []>} : vector<16x1024xbf16>, vector<1024x1024xbf16>, vector<16x1024xf32> -> vector<16x1024xf32>
    %c0_15 = arith.constant 0 : index
    %c0_16 = arith.constant 0 : index
    %23 = vector.load %arg5[%c0_15, %c0_16] : memref<1x1024xf32, #tpu.memory_space<vmem>>, vector<1x1024xf32>
    %24 = vector.broadcast %23 : vector<1x1024xf32> to vector<16x1024xf32>
    %25 = arith.mulf %22, %24 : vector<16x1024xf32>
    %c0_17 = arith.constant 0 : index
    %c0_18 = arith.constant 0 : index
    %26 = vector.load %arg6[%c0_17, %c0_18] : memref<1x1024xf32, #tpu.memory_space<vmem>>, vector<1x1024xf32>
    %27 = vector.broadcast %26 : vector<1x1024xf32> to vector<16x1024xf32>
    %28 = arith.addf %25, %27 : vector<16x1024xf32>
    %cst_19 = arith.constant 0.000000e+00 : f32
    %29 = vector.broadcast %cst_19 : f32 to vector<16x1024xf32>
    %30 = arith.maximumf %28, %29 : vector<16x1024xf32>
    %c0_20 = arith.constant 0 : index
    %c0_21 = arith.constant 0 : index
    %31 = vector.load %arg7[%c0_20, %c0_21] : memref<1024x128xi8, #tpu.memory_space<vmem>>, vector<1024x128xi8>
    %32 = arith.sitofp %31 : vector<1024x128xi8> to vector<1024x128xbf16>
    %33 = arith.truncf %30 : vector<16x1024xf32> to vector<16x1024xbf16>
    %cst_22 = arith.constant dense<0.000000e+00> : vector<16x128xf32>
    %34 = tpu.matmul %33, %32, %cst_22 {dimension_numbers = #tpu.dot_dimension_numbers<[1], [0], [0], [1], [0, 0, 1, 1], [], []>} : vector<16x1024xbf16>, vector<1024x128xbf16>, vector<16x128xf32> -> vector<16x128xf32>
    %c0_23 = arith.constant 0 : index
    %c0_24 = arith.constant 0 : index
    %35 = vector.load %arg8[%c0_23, %c0_24] : memref<1x128xf32, #tpu.memory_space<vmem>>, vector<1x128xf32>
    %36 = vector.broadcast %35 : vector<1x128xf32> to vector<16x128xf32>
    %37 = arith.mulf %34, %36 : vector<16x128xf32>
    %c0_25 = arith.constant 0 : index
    %c0_26 = arith.constant 0 : index
    %38 = vector.load %arg9[%c0_25, %c0_26] : memref<1x128xf32, #tpu.memory_space<vmem>>, vector<1x128xf32>
    %39 = vector.broadcast %38 : vector<1x128xf32> to vector<16x128xf32>
    %40 = arith.addf %37, %39 : vector<16x128xf32>
    %c0_27 = arith.constant 0 : index
    %c0_28 = arith.constant 0 : index
    %41 = vector.load %arg10[%c0_27, %c0_28] : memref<16x128xf32, #tpu.memory_space<vmem>>, vector<16x128xf32>
    tpu.vector_store %arg10[%c0_27, %c0_28], %40 {strides = array<i32>} : memref<16x128xf32, #tpu.memory_space<vmem>>, vector<16x128xf32>,
    return
  }
  func.func @transform_0(%arg0: i32) -> (i32, i32) {
    %c0_i32 = arith.constant 0 : i32
    %c0_i32_0 = arith.constant 0 : i32
    return %arg0, %c0_i32 : i32, i32
  }
  func.func @transform_1(%arg0: i32) -> (i32, i32) {
    %c0_i32 = arith.constant 0 : i32
    %c0_i32_0 = arith.constant 0 : i32
    %c0_i32_1 = arith.constant 0 : i32
    return %c0_i32, %c0_i32_0 : i32, i32
  }
  func.func @transform_2(%arg0: i32) -> (i32, i32) {
    %c0_i32 = arith.constant 0 : i32
    %c0_i32_0 = arith.constant 0 : i32
    %c0_i32_1 = arith.constant 0 : i32
    return %c0_i32, %c0_i32_0 : i32, i32
  }
  func.func @transform_3(%arg0: i32) -> (i32, i32) {
    %c0_i32 = arith.constant 0 : i32
    %c0_i32_0 = arith.constant 0 : i32
    %c0_i32_1 = arith.constant 0 : i32
    return %c0_i32, %c0_i32_0 : i32, i32
  }
  func.func @transform_4(%arg0: i32) -> (i32, i32) {
    %c0_i32 = arith.constant 0 : i32
    %c0_i32_0 = arith.constant 0 : i32
    %c0_i32_1 = arith.constant 0 : i32
    return %c0_i32, %c0_i32_0 : i32, i32
  }
  func.func @transform_5(%arg0: i32) -> (i32, i32) {
    %c0_i32 = arith.constant 0 : i32
    %c0_i32_0 = arith.constant 0 : i32
    %c0_i32_1 = arith.constant 0 : i32
    return %c0_i32, %c0_i32_0 : i32, i32
  }
  func.func @transform_6(%arg0: i32) -> (i32, i32) {
    %c0_i32 = arith.constant 0 : i32
    %c0_i32_0 = arith.constant 0 : i32
    %c0_i32_1 = arith.constant 0 : i32
    return %c0_i32, %c0_i32_0 : i32, i32
  }
  func.func @transform_7(%arg0: i32) -> (i32, i32) {
    %c0_i32 = arith.constant 0 : i32
    %c0_i32_0 = arith.constant 0 : i32
    %c0_i32_1 = arith.constant 0 : i32
    return %c0_i32, %c0_i32_0 : i32, i32
  }
  func.func @transform_8(%arg0: i32) -> (i32, i32) {
    %c0_i32 = arith.constant 0 : i32
    %c0_i32_0 = arith.constant 0 : i32
    %c0_i32_1 = arith.constant 0 : i32
    return %c0_i32, %c0_i32_0 : i32, i32
  }
  func.func @transform_9(%arg0: i32) -> (i32, i32) {
    %c0_i32 = arith.constant 0 : i32
    %c0_i32_0 = arith.constant 0 : i32
    return %arg0, %c0_i32 : i32, i32
  }
}

</mosaic_0001>

<llo_original>
// kernel: tpu_custom_call.1
$region0: #{tpu_custom_call.1}
  #allocation0 [shape = 'u32[]', space=smem, size = 0x4, offset = 0x4, fixed_abs, tag = 'smem constant byte address 0x4 - core index']
  #allocation1 [shape = 'u32[72,128]{1,0:T(1,128)}', space=vmem, size = 0x9000, scoped, tag = 'internal scratch']
  %s0 = inlined_call_operand.hbm [shape: f32[16,32], index: 0, kind: input, shape index: {}]
  %s1 = inlined_call_operand.hbm [shape: bf16[32,1024], index: 1, kind: input, shape index: {}]
  %s2 = inlined_call_operand.hbm [shape: f32[1,1024], index: 2, kind: input, shape index: {}]
  %s3 = inlined_call_operand.hbm [shape: s8[1024,1024], index: 3, kind: input, shape index: {}]
  %s4 = inlined_call_operand.hbm [shape: f32[1,1024], index: 4, kind: input, shape index: {}]
  %s5 = inlined_call_operand.hbm [shape: f32[1,1024], index: 5, kind: input, shape index: {}]
  %s6 = inlined_call_operand.hbm [shape: s8[1024,128], index: 6, kind: input, shape index: {}]
  %s7 = inlined_call_operand.vmem [shape: f32[1,128], index: 7, kind: input, shape index: {}]
  %s8 = inlined_call_operand.vmem [shape: f32[1,128], index: 8, kind: input, shape index: {}]
  %s9 = inlined_call_operand.hbm [shape: f32[16,128], index: 9, kind: output, shape index: {}]
  %s10 = sld [smem:[#allocation0]]
  $region74: #{tpu_custom_call.1} parent=0
    _
  %s12 = ssub.s32 1, %s10
  %s13 = scalar_select 0, %s12, %s10
  $region1: #{tpu_custom_call.1} parent=0
    #allocation2 [shape = 'u8[8192]{0}', space=vmem, size = 0x2000, scoped, tag = 'input window, operand 0, single buffered']
    #allocation3 [shape = 's32[1]{0}', space=sflag, size = 0x4, scoped, tag = 'scoped memory for tpu_custom_call.1']
    #allocation4 [shape = 's32[1]{0}', space=sflag, size = 0x4, scoped, tag = 'scoped memory for tpu_custom_call.1']
    #allocation5 [shape = 'u8[65536]{0}', space=vmem, size = 0x10000, scoped, tag = 'input window, operand 1, single buffered']
    #allocation6 [shape = 's32[1]{0}', space=sflag, size = 0x4, scoped, tag = 'scoped memory for tpu_custom_call.1']
    #allocation7 [shape = 'u8[4096]{0}', space=vmem, size = 0x1000, scoped, tag = 'input window, operand 2, single buffered']
    #allocation8 [shape = 'u8[1048576]{0}', space=vmem, size = 0x100000, scoped, tag = 'input window, operand 3, single buffered']
    #allocation9 [shape = 's32[1]{0}', space=sflag, size = 0x4, scoped, tag = 'scoped memory for tpu_custom_call.1']
    #allocation10 [shape = 'u8[4096]{0}', space=vmem, size = 0x1000, scoped, tag = 'input window, operand 4, single buffered']
    #allocation11 [shape = 'u8[4096]{0}', space=vmem, size = 0x1000, scoped, tag = 'input window, operand 5, single buffered']
    #allocation12 [shape = 's32[1]{0}', space=sflag, size = 0x4, scoped, tag = 'scoped memory for tpu_custom_call.1']
    #allocation13 [shape = 'u8[131072]{0}', space=vmem, size = 0x20000, scoped, tag = 'input window, operand 6, single buffered']
    #allocation14 [shape = 'u8[8192]{0}', space=vmem, size = 0x2000, scoped, tag = 'output window, operand 0, single buffered']
    %14 = vsyncpa [#allocation3], 0
    %15 = vsyncpa [#allocation6], 0
    %16 = vsyncpa [#allocation9], 0
    %17 = vsyncpa [#allocation12], 0
    %18 = vsyncpa [#allocation4], 0
    // Predicated region
    $region2: #{tpu_custom_call.1} parent=1 // pred_check
      _
    $region3: #{tpu_custom_call.1} parent=1 // pred_check_branch
      %20 = sbr.rel (0) target = $region5
    $region4: #{tpu_custom_call.1} parent=1 // pred_region
      %22 = vsyncadd [#allocation3], 0
      %s23 = sshll.u32 %s0, 4
      %s24 = int_to_ptr.hbm [resolvable:$true] %s23
      %s25 = sshll.u32 [#allocation2], 4
      %s26 = int_to_ptr.vmem [resolvable:$true] %s25
      %31 = dma.hbm_to_vmem [thread:$0]  %s24, 256, %s26, [#allocation3], 128, 128, 8
    $region5: #{tpu_custom_call.1} parent=1 // pred_fallthru
      _
    // Predicated region
    $region6: #{tpu_custom_call.1} parent=1 // pred_check
      _
    $region7: #{tpu_custom_call.1} parent=1 // pred_check_branch
      %33 = sbr.rel (0) target = $region9
    $region8: #{tpu_custom_call.1} parent=1 // pred_region
      %35 = vsyncadd [#allocation6], 0
      %s36 = sshll.u32 %s1, 4
      %s37 = int_to_ptr.hbm [resolvable:$true] %s36
      %s38 = sshll.u32 [#allocation5], 4
      %s39 = int_to_ptr.vmem [resolvable:$true] %s38
      %44 = dma.hbm_to_vmem [thread:$0]  %s37, 2048, %s39, [#allocation6], 512, 512, 32
    $region9: #{tpu_custom_call.1} parent=1 // pred_fallthru
      _
    // Predicated region
    $region10: #{tpu_custom_call.1} parent=1 // pred_check
      _
    $region11: #{tpu_custom_call.1} parent=1 // pred_check_branch
      %46 = sbr.rel (0) target = $region13
    $region12: #{tpu_custom_call.1} parent=1 // pred_region
      %48 = vsyncadd [#allocation6], 0
      %s50 = sshll.u32 %s2, 4
      %s51 = int_to_ptr.hbm [resolvable:$true] %s50
      %s52 = sshll.u32 [#allocation7], 4
      %s53 = int_to_ptr.vmem [resolvable:$true] %s52
      %55 = dma.hbm_to_vmem [thread:$0]  %s51, 128, %s53, [#allocation6]
    $region13: #{tpu_custom_call.1} parent=1 // pred_fallthru
      _
    // Predicated region
    $region14: #{tpu_custom_call.1} parent=1 // pred_check
      _
    $region15: #{tpu_custom_call.1} parent=1 // pred_check_branch
      %57 = sbr.rel (0) target = $region17
    $region16: #{tpu_custom_call.1} parent=1 // pred_region
      %59 = vsyncadd [#allocation9], 0
      %s60 = sshll.u32 %s3, 4
      %s61 = int_to_ptr.hbm [resolvable:$true] %s60
      %s62 = sshll.u32 [#allocation8], 4
      %s63 = int_to_ptr.vmem [resolvable:$true] %s62
      %68 = dma.hbm_to_vmem [thread:$0]  %s61, 32768, %s63, [#allocation9], 1024, 1024, 64
    $region17: #{tpu_custom_call.1} parent=1 // pred_fallthru
      _
    // Predicated region
    $region18: #{tpu_custom_call.1} parent=1 // pred_check
      _
    $region19: #{tpu_custom_call.1} parent=1 // pred_check_branch
      %70 = sbr.rel (0) target = $region21
    $region20: #{tpu_custom_call.1} parent=1 // pred_region
      %72 = vsyncadd [#allocation9], 0
      %s74 = sshll.u32 %s4, 4
      %s75 = int_to_ptr.hbm [resolvable:$true] %s74
      %s76 = sshll.u32 [#allocation10], 4
      %s77 = int_to_ptr.vmem [resolvable:$true] %s76
      %79 = dma.hbm_to_vmem [thread:$0]  %s75, 128, %s77, [#allocation9]
    $region21: #{tpu_custom_call.1} parent=1 // pred_fallthru
      _
    // Predicated region
    $region22: #{tpu_custom_call.1} parent=1 // pred_check
      _
    $region23: #{tpu_custom_call.1} parent=1 // pred_check_branch
      %81 = sbr.rel (0) target = $region25
    $region24: #{tpu_custom_call.1} parent=1 // pred_region
      %83 = vsyncadd [#allocation12], 0
      %s85 = sshll.u32 %s5, 4
      %s86 = int_to_ptr.hbm [resolvable:$true] %s85
      %s87 = sshll.u32 [#allocation11], 4
      %s88 = int_to_ptr.vmem [resolvable:$true] %s87
      %90 = dma.hbm_to_vmem [thread:$0]  %s86, 128, %s88, [#allocation12]
    $region25: #{tpu_custom_call.1} parent=1 // pred_fallthru
      _
    // Predicated region
    $region26: #{tpu_custom_call.1} parent=1 // pred_check
      _
    $region27: #{tpu_custom_call.1} parent=1 // pred_check_branch
      %92 = sbr.rel (0) target = $region29
    $region28: #{tpu_custom_call.1} parent=1 // pred_region
      %94 = vsyncadd [#allocation12], 0
      %s95 = sshll.u32 %s6, 4
      %s96 = int_to_ptr.hbm [resolvable:$true] %s95
      %s97 = sshll.u32 [#allocation13], 4
      %s98 = int_to_ptr.vmem [resolvable:$true] %s97
      %103 = dma.hbm_to_vmem [thread:$0]  %s96, 4096, %s98, [#allocation12], 128, 128, 8
    $region29: #{tpu_custom_call.1} parent=1 // pred_fallthru
      _
    // Predicated region
    $region30: #{tpu_custom_call.1} parent=1 // pred_check
      _
    $region31: #{tpu_custom_call.1} parent=1 // pred_check_branch
      %105 = sbr.rel (0) target = $region33
    $region32: #{tpu_custom_call.1} parent=1 // pred_region
      _
    $region33: #{tpu_custom_call.1} parent=1 // pred_fallthru
      _
    // Predicated region
    $region34: #{tpu_custom_call.1} parent=1 // pred_check
      _
    $region35: #{tpu_custom_call.1} parent=1 // pred_check_branch
      %107 = sbr.rel (0) target = $region37
    $region36: #{tpu_custom_call.1} parent=1 // pred_region
      _
    $region37: #{tpu_custom_call.1} parent=1 // pred_fallthru
      _
    // Predicated region
    $region38: #{tpu_custom_call.1} parent=1 // pred_check
      _
    $region39: #{tpu_custom_call.1} parent=1 // pred_check_branch
      %109 = sbr.rel (0) target = $region41
    $region40: #{tpu_custom_call.1} parent=1 // pred_region
      %111 = dma.done [#allocation3], 256
    $region41: #{tpu_custom_call.1} parent=1 // pred_fallthru
      _
    // Predicated region
    $region42: #{tpu_custom_call.1} parent=1 // pred_check
      _
    $region43: #{tpu_custom_call.1} parent=1 // pred_check_branch
      %113 = sbr.rel (0) target = $region45
    $region44: #{tpu_custom_call.1} parent=1 // pred_region
      %115 = dma.done [#allocation6], 2048
    $region45: #{tpu_custom_call.1} parent=1 // pred_fallthru
      _
    // Predicated region
    $region46: #{tpu_custom_call.1} parent=1 // pred_check
      _
    $region47: #{tpu_custom_call.1} parent=1 // pred_check_branch
      %117 = sbr.rel (0) target = $region49
    $region48: #{tpu_custom_call.1} parent=1 // pred_region
      %119 = dma.done [#allocation6], 128
    $region49: #{tpu_custom_call.1} parent=1 // pred_fallthru
      _
    // Predicated region
    $region50: #{tpu_custom_call.1} parent=1 // pred_check
      _
    $region51: #{tpu_custom_call.1} parent=1 // pred_check_branch
      %121 = sbr.rel (0) target = $region53
    $region52: #{tpu_custom_call.1} parent=1 // pred_region
      %123 = dma.done [#allocation9], 32768
    $region53: #{tpu_custom_call.1} parent=1 // pred_fallthru
      _
    // Predicated region
    $region54: #{tpu_custom_call.1} parent=1 // pred_check
      _
    $region55: #{tpu_custom_call.1} parent=1 // pred_check_branch
      %125 = sbr.rel (0) target = $region57
    $region56: #{tpu_custom_call.1} parent=1 // pred_region
      %127 = dma.done [#allocation9], 128
    $region57: #{tpu_custom_call.1} parent=1 // pred_fallthru
      _
    // Predicated region
    $region58: #{tpu_custom_call.1} parent=1 // pred_check
      _
    $region59: #{tpu_custom_call.1} parent=1 // pred_check_branch
      %129 = sbr.rel (0) target = $region61
    $region60: #{tpu_custom_call.1} parent=1 // pred_region
      %131 = dma.done [#allocation12], 128
    $region61: #{tpu_custom_call.1} parent=1 // pred_fallthru
      _
    // Predicated region
    $region62: #{tpu_custom_call.1} parent=1 // pred_check
      _
    $region63: #{tpu_custom_call.1} parent=1 // pred_check_branch
      %133 = sbr.rel (0) target = $region65
    $region64: #{tpu_custom_call.1} parent=1 // pred_region
      %135 = dma.done [#allocation12], 4096
    $region65: #{tpu_custom_call.1} parent=1 // pred_fallthru
      _
    %v137 = vld [vmem:[#allocation2] sm:$0xff]
    %v138 = vld [vmem:[#allocation2 + $0x8] sm:$0xff]
    %v139 = vpack.c.bf16 %v138, %v137
    %v140 = vld [vmem:[#allocation5] sm:$0xff]
    %v141 = vld [vmem:[#allocation5 + $0x8] sm:$0xff]
    %v142 = vld [vmem:[#allocation5 + $0x10] sm:$0xff]
    %v143 = vld [vmem:[#allocation5 + $0x18] sm:$0xff]
    %v144 = vld [vmem:[#allocation5 + $0x20] sm:$0xff]
    %v145 = vld [vmem:[#allocation5 + $0x28] sm:$0xff]
    %v146 = vld [vmem:[#allocation5 + $0x30] sm:$0xff]
    %v147 = vld [vmem:[#allocation5 + $0x38] sm:$0xff]
    %v148 = vld [vmem:[#allocation5 + $0x40] sm:$0xff]
    %v149 = vld [vmem:[#allocation5 + $0x48] sm:$0xff]
    %v150 = vld [vmem:[#allocation5 + $0x50] sm:$0xff]
    %v151 = vld [vmem:[#allocation5 + $0x58] sm:$0xff]
    %v152 = vld [vmem:[#allocation5 + $0x60] sm:$0xff]
    %v153 = vld [vmem:[#allocation5 + $0x68] sm:$0xff]
    %v154 = vld [vmem:[#allocation5 + $0x70] sm:$0xff]
    %v155 = vld [vmem:[#allocation5 + $0x78] sm:$0xff]
    %v156 = vld [vmem:[#allocation7] sm:$0xff]
    %v158 = vperm.slane %v156, 0
    %v159 = vperm.slane %v156, 1
    %v160 = vperm.slane %v156, 2
    %v161 = vperm.slane %v156, 3
    %v162 = vperm.slane %v156, 4
    %v163 = vperm.slane %v156, 5
    %v164 = vperm.slane %v156, 6
    %v165 = vperm.slane %v156, 7
    %v190 = vunpack.c.l.b16 %v140
    %v191 = vunpack.c.h.b16 %v140
    %v192 = vunpack.c.l.b16 %v141
    %v193 = vunpack.c.h.b16 %v141
    %v194 = vunpack.c.l.b16 %v142
    %v195 = vunpack.c.h.b16 %v142
    %v196 = vunpack.c.l.b16 %v143
    %v197 = vunpack.c.h.b16 %v143
    %v198 = vunpack.c.l.b16 %v144
    %v199 = vunpack.c.h.b16 %v144
    %v200 = vunpack.c.l.b16 %v145
    %v201 = vunpack.c.h.b16 %v145
    %v202 = vunpack.c.l.b16 %v146
    %v203 = vunpack.c.h.b16 %v146
    %v204 = vunpack.c.l.b16 %v147
    %v205 = vunpack.c.h.b16 %v147
    %v206 = vunpack.c.l.b16 %v148
    %v207 = vunpack.c.h.b16 %v148
    %v208 = vunpack.c.l.b16 %v149
    %v209 = vunpack.c.h.b16 %v149
    %v210 = vunpack.c.l.b16 %v150
    %v211 = vunpack.c.h.b16 %v150
    %v212 = vunpack.c.l.b16 %v151
    %v213 = vunpack.c.h.b16 %v151
    %v214 = vunpack.c.l.b16 %v152
    %v215 = vunpack.c.h.b16 %v152
    %v216 = vunpack.c.l.b16 %v153
    %v217 = vunpack.c.h.b16 %v153
    %v218 = vunpack.c.l.b16 %v154
    %v219 = vunpack.c.h.b16 %v154
    %v220 = vunpack.c.l.b16 %v155
    %v221 = vunpack.c.h.b16 %v155
    %v222 = vpack.c.b16 %v198, %v190
    %v223 = vpack.c.b16 %v199, %v191
    %v224 = vpack.c.b16 %v200, %v192
    %v225 = vpack.c.b16 %v201, %v193
    %v226 = vpack.c.b16 %v202, %v194
    %v227 = vpack.c.b16 %v203, %v195
    %v228 = vpack.c.b16 %v204, %v196
    %v229 = vpack.c.b16 %v205, %v197
    %v230 = vpack.c.b16 %v214, %v206
    %v231 = vpack.c.b16 %v215, %v207
    %v232 = vpack.c.b16 %v216, %v208
    %v233 = vpack.c.b16 %v217, %v209
    %v234 = vpack.c.b16 %v218, %v210
    %v235 = vpack.c.b16 %v219, %v211
    %v236 = vpack.c.b16 %v220, %v212
    %v237 = vpack.c.b16 %v221, %v213
    %vm254 = vcmask 261120
    %v256 = vsel %vm254, %v139, 0
    %258 = vmatpush.bf16.msra.mxu0 0
    %259 = vmatpush.bf16.msra.mxu0 0
    %260 = vmatpush.bf16.msra.mxu0 0
    %261 = vmatpush.bf16.msra.mxu0 0
    %262 = vmatpush.bf16.msra.mxu0 0
    %263 = vmatpush.bf16.msra.mxu0 0
    %264 = vmatpush.bf16.msra.mxu0 %v230
    %265 = vmatpush.bf16.msra.mxu0 %v222
    %266 = vmatmul.bf16.gmra.mxu0 %v256
    %v267 = vpop.f32.mrf.mxu0
    %v268 = vadd.f32 %v158, %v267
    %v269 = vpop.f32.mrf.mxu0
    %v270 = vadd.f32 %v158, %v269
    %271 = vdwg.mxu0
    %272 = vmatpush.bf16.msra.mxu0 0
    %273 = vmatpush.bf16.msra.mxu0 0
    %274 = vmatpush.bf16.msra.mxu0 0
    %275 = vmatpush.bf16.msra.mxu0 0
    %276 = vmatpush.bf16.msra.mxu0 0
    %277 = vmatpush.bf16.msra.mxu0 0
    %278 = vmatpush.bf16.msra.mxu0 %v231
    %279 = vmatpush.bf16.msra.mxu0 %v223
    %280 = vmatmul.bf16.gmra.mxu0 %v256
    %v281 = vpop.f32.mrf.mxu0
    %v282 = vadd.f32 %v159, %v281
    %v283 = vpop.f32.mrf.mxu0
    %v284 = vadd.f32 %v159, %v283
    %285 = vdwg.mxu0
    %286 = vmatpush.bf16.msra.mxu0 0
    %287 = vmatpush.bf16.msra.mxu0 0
    %288 = vmatpush.bf16.msra.mxu0 0
    %289 = vmatpush.bf16.msra.mxu0 0
    %290 = vmatpush.bf16.msra.mxu0 0
    %291 = vmatpush.bf16.msra.mxu0 0
    %292 = vmatpush.bf16.msra.mxu0 %v232
    %293 = vmatpush.bf16.msra.mxu0 %v224
    %294 = vmatmul.bf16.gmra.mxu0 %v256
    %v295 = vpop.f32.mrf.mxu0
    %v296 = vadd.f32 %v160, %v295
    %v297 = vpop.f32.mrf.mxu0
    %v298 = vadd.f32 %v160, %v297
    %299 = vdwg.mxu0
    %300 = vmatpush.bf16.msra.mxu0 0
    %301 = vmatpush.bf16.msra.mxu0 0
    %302 = vmatpush.bf16.msra.mxu0 0
    %303 = vmatpush.bf16.msra.mxu0 0
    %304 = vmatpush.bf16.msra.mxu0 0
    %305 = vmatpush.bf16.msra.mxu0 0
    %306 = vmatpush.bf16.msra.mxu0 %v233
    %307 = vmatpush.bf16.msra.mxu0 %v225
    %308 = vmatmul.bf16.gmra.mxu0 %v256
    %v309 = vpop.f32.mrf.mxu0
    %v310 = vadd.f32 %v161, %v309
    %v311 = vpop.f32.mrf.mxu0
    %v312 = vadd.f32 %v161, %v311
    %313 = vdwg.mxu0
    %314 = vmatpush.bf16.msra.mxu0 0
    %315 = vmatpush.bf16.msra.mxu0 0
    %316 = vmatpush.bf16.msra.mxu0 0
    %317 = vmatpush.bf16.msra.mxu0 0
    %318 = vmatpush.bf16.msra.mxu0 0
    %319 = vmatpush.bf16.msra.mxu0 0
    %320 = vmatpush.bf16.msra.mxu0 %v234
    %321 = vmatpush.bf16.msra.mxu0 %v226
    %322 = vmatmul.bf16.gmra.mxu0 %v256
    %v323 = vpop.f32.mrf.mxu0
    %v324 = vadd.f32 %v162, %v323
    %v325 = vpop.f32.mrf.mxu0
    %v326 = vadd.f32 %v162, %v325
    %327 = vdwg.mxu0
    %328 = vmatpush.bf16.msra.mxu0 0
    %329 = vmatpush.bf16.msra.mxu0 0
    %330 = vmatpush.bf16.msra.mxu0 0
    %331 = vmatpush.bf16.msra.mxu0 0
    %332 = vmatpush.bf16.msra.mxu0 0
    %333 = vmatpush.bf16.msra.mxu0 0
    %334 = vmatpush.bf16.msra.mxu0 %v235
    %335 = vmatpush.bf16.msra.mxu0 %v227
    %336 = vmatmul.bf16.gmra.mxu0 %v256
    %v337 = vpop.f32.mrf.mxu0
    %v338 = vadd.f32 %v163, %v337
    %v339 = vpop.f32.mrf.mxu0
    %v340 = vadd.f32 %v163, %v339
    %341 = vdwg.mxu0
    %342 = vmatpush.bf16.msra.mxu0 0
    %343 = vmatpush.bf16.msra.mxu0 0
    %344 = vmatpush.bf16.msra.mxu0 0
    %345 = vmatpush.bf16.msra.mxu0 0
    %346 = vmatpush.bf16.msra.mxu0 0
    %347 = vmatpush.bf16.msra.mxu0 0
    %348 = vmatpush.bf16.msra.mxu0 %v236
    %349 = vmatpush.bf16.msra.mxu0 %v228
    %350 = vmatmul.bf16.gmra.mxu0 %v256
    %v351 = vpop.f32.mrf.mxu0
    %v352 = vadd.f32 %v164, %v351
    %v353 = vpop.f32.mrf.mxu0
    %v354 = vadd.f32 %v164, %v353
    %355 = vdwg.mxu0
    %356 = vmatpush.bf16.msra.mxu0 0
    %357 = vmatpush.bf16.msra.mxu0 0
    %358 = vmatpush.bf16.msra.mxu0 0
    %359 = vmatpush.bf16.msra.mxu0 0
    %360 = vmatpush.bf16.msra.mxu0 0
    %361 = vmatpush.bf16.msra.mxu0 0
    %362 = vmatpush.bf16.msra.mxu0 %v237
    %363 = vmatpush.bf16.msra.mxu0 %v229
    %364 = vmatmul.bf16.gmra.mxu0 %v256
    %v365 = vpop.f32.mrf.mxu0
    %v366 = vadd.f32 %v165, %v365
    %v367 = vpop.f32.mrf.mxu0
    %v368 = vadd.f32 %v165, %v367
    %369 = vdwg.mxu0
    %v370 = vmax.f32 %v268, 0.0
    %v371 = vmax.f32 %v282, 0.0
    %v372 = vmax.f32 %v296, 0.0
    %v373 = vmax.f32 %v310, 0.0
    %v374 = vmax.f32 %v324, 0.0
    %v375 = vmax.f32 %v338, 0.0
    %v376 = vmax.f32 %v352, 0.0
    %v377 = vmax.f32 %v366, 0.0
    %v378 = vmax.f32 %v270, 0.0
    %v379 = vmax.f32 %v284, 0.0
    %v380 = vmax.f32 %v298, 0.0
    %v381 = vmax.f32 %v312, 0.0
    %v382 = vmax.f32 %v326, 0.0
    %v383 = vmax.f32 %v340, 0.0
    %v384 = vmax.f32 %v354, 0.0
    %v385 = vmax.f32 %v368, 0.0
    %v386 = vld [vmem:[#allocation8] sm:$0xff]
    %v387 = vld [vmem:[#allocation8 + $0x8] sm:$0xff]
    %v388 = vld [vmem:[#allocation8 + $0x10] sm:$0xff]
    %v389 = vld [vmem:[#allocation8 + $0x18] sm:$0xff]
    %v390 = vld [vmem:[#allocation8 + $0x20] sm:$0xff]
    %v391 = vld [vmem:[#allocation8 + $0x28] sm:$0xff]
    %v392 = vld [vmem:[#allocation8 + $0x30] sm:$0xff]
    %v393 = vld [vmem:[#allocation8 + $0x38] sm:$0xff]
    %v394 = vld [vmem:[#allocation8 + $0x40] sm:$0xff]
    %v395 = vld [vmem:[#allocation8 + $0x48] sm:$0xff]
    %v396 = vld [vmem:[#allocation8 + $0x50] sm:$0xff]
    %v397 = vld [vmem:[#allocation8 + $0x58] sm:$0xff]
    %v398 = vld [vmem:[#allocation8 + $0x60] sm:$0xff]
    %v399 = vld [vmem:[#allocation8 + $0x68] sm:$0xff]
    %v400 = vld [vmem:[#allocation8 + $0x70] sm:$0xff]
    %v401 = vld [vmem:[#allocation8 + $0x78] sm:$0xff]
    %v402 = vld [vmem:[#allocation8 + $0x80] sm:$0xff]
    %v403 = vld [vmem:[#allocation8 + $0x88] sm:$0xff]
    %v404 = vld [vmem:[#allocation8 + $0x90] sm:$0xff]
    %v405 = vld [vmem:[#allocation8 + $0x98] sm:$0xff]
    %v406 = vld [vmem:[#allocation8 + $0xa0] sm:$0xff]
    %v407 = vld [vmem:[#allocation8 + $0xa8] sm:$0xff]
    %v408 = vld [vmem:[#allocation8 + $0xb0] sm:$0xff]
    %v409 = vld [vmem:[#allocation8 + $0xb8] sm:$0xff]
    %v410 = vld [vmem:[#allocation8 + $0xc0] sm:$0xff]
    %v411 = vld [vmem:[#allocation8 + $0xc8] sm:$0xff]
    %v412 = vld [vmem:[#allocation8 + $0xd0] sm:$0xff]
    %v413 = vld [vmem:[#allocation8 + $0xd8] sm:$0xff]
    %v414 = vld [vmem:[#allocation8 + $0xe0] sm:$0xff]
    %v415 = vld [vmem:[#allocation8 + $0xe8] sm:$0xff]
    %v416 = vld [vmem:[#allocation8 + $0xf0] sm:$0xff]
    %v417 = vld [vmem:[#allocation8 + $0xf8] sm:$0xff]
    %v418 = vld [vmem:[#allocation8 + $0x100] sm:$0xff]
    %v419 = vld [vmem:[#allocation8 + $0x108] sm:$0xff]
    %v420 = vld [vmem:[#allocation8 + $0x110] sm:$0xff]
    %v421 = vld [vmem:[#allocation8 + $0x118] sm:$0xff]
    %v422 = vld [vmem:[#allocation8 + $0x120] sm:$0xff]
    %v423 = vld [vmem:[#allocation8 + $0x128] sm:$0xff]
    %v424 = vld [vmem:[#allocation8 + $0x130] sm:$0xff]
    %v425 = vld [vmem:[#allocation8 + $0x138] sm:$0xff]
    %v426 = vld [vmem:[#allocation8 + $0x140] sm:$0xff]
    %v427 = vld [vmem:[#allocation8 + $0x148] sm:$0xff]
    %v428 = vld [vmem:[#allocation8 + $0x150] sm:$0xff]
    %v429 = vld [vmem:[#allocation8 + $0x158] sm:$0xff]
    %v430 = vld [vmem:[#allocation8 + $0x160] sm:$0xff]
    %v431 = vld [vmem:[#allocation8 + $0x168] sm:$0xff]
    %v432 = vld [vmem:[#allocation8 + $0x170] sm:$0xff]
    %v433 = vld [vmem:[#allocation8 + $0x178] sm:$0xff]
    %v434 = vld [vmem:[#allocation8 + $0x180] sm:$0xff]
    %v435 = vld [vmem:[#allocation8 + $0x188] sm:$0xff]
    %v436 = vld [vmem:[#allocation8 + $0x190] sm:$0xff]
    %v437 = vld [vmem:[#allocation8 + $0x198] sm:$0xff]
    %v438 = vld [vmem:[#allocation8 + $0x1a0] sm:$0xff]
    %v439 = vld [vmem:[#allocation8 + $0x1a8] sm:$0xff]
    %v440 = vld [vmem:[#allocation8 + $0x1b0] sm:$0xff]
    %v441 = vld [vmem:[#allocation8 + $0x1b8] sm:$0xff]
    %v442 = vld [vmem:[#allocation8 + $0x1c0] sm:$0xff]
    %v443 = vld [vmem:[#allocation8 + $0x1c8] sm:$0xff]
    %v444 = vld [vmem:[#allocation8 + $0x1d0] sm:$0xff]
    %v445 = vld [vmem:[#allocation8 + $0x1d8] sm:$0xff]
    %v446 = vld [vmem:[#allocation8 + $0x1e0] sm:$0xff]
    %v447 = vld [vmem:[#allocation8 + $0x1e8] sm:$0xff]
    %v448 = vld [vmem:[#allocation8 + $0x1f0] sm:$0xff]
    %v449 = vld [vmem:[#allocation8 + $0x1f8] sm:$0xff]
    %v450 = vld [vmem:[#allocation8 + $0x200] sm:$0xff]
    %v451 = vld [vmem:[#allocation8 + $0x208] sm:$0xff]
    %v452 = vld [vmem:[#allocation8 + $0x210] sm:$0xff]
    %v453 = vld [vmem:[#allocation8 + $0x218] sm:$0xff]
    %v454 = vld [vmem:[#allocation8 + $0x220] sm:$0xff]
    %v455 = vld [vmem:[#allocation8 + $0x228] sm:$0xff]
    %v456 = vld [vmem:[#allocation8 + $0x230] sm:$0xff]
    %v457 = vld [vmem:[#allocation8 + $0x238] sm:$0xff]
    %v458 = vld [vmem:[#allocation8 + $0x240] sm:$0xff]
    %v459 = vld [vmem:[#allocation8 + $0x248] sm:$0xff]
    %v460 = vld [vmem:[#allocation8 + $0x250] sm:$0xff]
    %v461 = vld [vmem:[#allocation8 + $0x258] sm:$0xff]
    %v462 = vld [vmem:[#allocation8 + $0x260] sm:$0xff]
    %v463 = vld [vmem:[#allocation8 + $0x268] sm:$0xff]
    %v464 = vld [vmem:[#allocation8 + $0x270] sm:$0xff]
    %v465 = vld [vmem:[#allocation8 + $0x278] sm:$0xff]
    %v466 = vld [vmem:[#allocation8 + $0x280] sm:$0xff]
    %v467 = vld [vmem:[#allocation8 + $0x288] sm:$0xff]
    %v468 = vld [vmem:[#allocation8 + $0x290] sm:$0xff]
    %v469 = vld [vmem:[#allocation8 + $0x298] sm:$0xff]
    %v470 = vld [vmem:[#allocation8 + $0x2a0] sm:$0xff]
    %v471 = vld [vmem:[#allocation8 + $0x2a8] sm:$0xff]
    %v472 = vld [vmem:[#allocation8 + $0x2b0] sm:$0xff]
    %v473 = vld [vmem:[#allocation8 + $0x2b8] sm:$0xff]
    %v474 = vld [vmem:[#allocation8 + $0x2c0] sm:$0xff]
    %v475 = vld [vmem:[#allocation8 + $0x2c8] sm:$0xff]
    %v476 = vld [vmem:[#allocation8 + $0x2d0] sm:$0xff]
    %v477 = vld [vmem:[#allocation8 + $0x2d8] sm:$0xff]
    %v478 = vld [vmem:[#allocation8 + $0x2e0] sm:$0xff]
    %v479 = vld [vmem:[#allocation8 + $0x2e8] sm:$0xff]
    %v480 = vld [vmem:[#allocation8 + $0x2f0] sm:$0xff]
    %v481 = vld [vmem:[#allocation8 + $0x2f8] sm:$0xff]
    %v482 = vld [vmem:[#allocation8 + $0x300] sm:$0xff]
    %v483 = vld [vmem:[#allocation8 + $0x308] sm:$0xff]
    %v484 = vld [vmem:[#allocation8 + $0x310] sm:$0xff]
    %v485 = vld [vmem:[#allocation8 + $0x318] sm:$0xff]
    %v486 = vld [vmem:[#allocation8 + $0x320] sm:$0xff]
    %v487 = vld [vmem:[#allocation8 + $0x328] sm:$0xff]
    %v488 = vld [vmem:[#allocation8 + $0x330] sm:$0xff]
    %v489 = vld [vmem:[#allocation8 + $0x338] sm:$0xff]
    %v490 = vld [vmem:[#allocation8 + $0x340] sm:$0xff]
    %v491 = vld [vmem:[#allocation8 + $0x348] sm:$0xff]
    %v492 = vld [vmem:[#allocation8 + $0x350] sm:$0xff]
    %v493 = vld [vmem:[#allocation8 + $0x358] sm:$0xff]
    %v494 = vld [vmem:[#allocation8 + $0x360] sm:$0xff]
    %v495 = vld [vmem:[#allocation8 + $0x368] sm:$0xff]
    %v496 = vld [vmem:[#allocation8 + $0x370] sm:$0xff]
    %v497 = vld [vmem:[#allocation8 + $0x378] sm:$0xff]
    %v498 = vld [vmem:[#allocation8 + $0x380] sm:$0xff]
    %v499 = vld [vmem:[#allocation8 + $0x388] sm:$0xff]
    %v500 = vld [vmem:[#allocation8 + $0x390] sm:$0xff]
    %v501 = vld [vmem:[#allocation8 + $0x398] sm:$0xff]
    %v502 = vld [vmem:[#allocation8 + $0x3a0] sm:$0xff]
    %v503 = vld [vmem:[#allocation8 + $0x3a8] sm:$0xff]
    %v504 = vld [vmem:[#allocation8 + $0x3b0] sm:$0xff]
    %v505 = vld [vmem:[#allocation8 + $0x3b8] sm:$0xff]
    %v506 = vld [vmem:[#allocation8 + $0x3c0] sm:$0xff]
    %v507 = vld [vmem:[#allocation8 + $0x3c8] sm:$0xff]
    %v508 = vld [vmem:[#allocation8 + $0x3d0] sm:$0xff]
    %v509 = vld [vmem:[#allocation8 + $0x3d8] sm:$0xff]
    %v510 = vld [vmem:[#allocation8 + $0x3e0] sm:$0xff]
    %v511 = vld [vmem:[#allocation8 + $0x3e8] sm:$0xff]
    %v512 = vld [vmem:[#allocation8 + $0x3f0] sm:$0xff]
    %v513 = vld [vmem:[#allocation8 + $0x3f8] sm:$0xff]
    %v514 = vld [vmem:[#allocation8 + $0x400] sm:$0xff]
    %v515 = vld [vmem:[#allocation8 + $0x408] sm:$0xff]
    %v516 = vld [vmem:[#allocation8 + $0x410] sm:$0xff]
    %v517 = vld [vmem:[#allocation8 + $0x418] sm:$0xff]
    %v518 = vld [vmem:[#allocation8 + $0x420] sm:$0xff]
    %v519 = vld [vmem:[#allocation8 + $0x428] sm:$0xff]
    %v520 = vld [vmem:[#allocation8 + $0x430] sm:$0xff]
    %v521 = vld [vmem:[#allocation8 + $0x438] sm:$0xff]
    %v522 = vld [vmem:[#allocation8 + $0x440] sm:$0xff]
    %v523 = vld [vmem:[#allocation8 + $0x448] sm:$0xff]
    %v524 = vld [vmem:[#allocation8 + $0x450] sm:$0xff]
    %v525 = vld [vmem:[#allocation8 + $0x458] sm:$0xff]
    %v526 = vld [vmem:[#allocation8 + $0x460] sm:$0xff]
    %v527 = vld [vmem:[#allocation8 + $0x468] sm:$0xff]
    %v528 = vld [vmem:[#allocation8 + $0x470] sm:$0xff]
    %v529 = vld [vmem:[#allocation8 + $0x478] sm:$0xff]
    %v530 = vld [vmem:[#allocation8 + $0x480] sm:$0xff]
    %v531 = vld [vmem:[#allocation8 + $0x488] sm:$0xff]
    %v532 = vld [vmem:[#allocation8 + $0x490] sm:$0xff]
    %v533 = vld [vmem:[#allocation8 + $0x498] sm:$0xff]
    %v534 = vld [vmem:[#allocation8 + $0x4a0] sm:$0xff]
    %v535 = vld [vmem:[#allocation8 + $0x4a8] sm:$0xff]
    %v536 = vld [vmem:[#allocation8 + $0x4b0] sm:$0xff]
    %v537 = vld [vmem:[#allocation8 + $0x4b8] sm:$0xff]
    %v538 = vld [vmem:[#allocation8 + $0x4c0] sm:$0xff]
    %v539 = vld [vmem:[#allocation8 + $0x4c8] sm:$0xff]
    %v540 = vld [vmem:[#allocation8 + $0x4d0] sm:$0xff]
    %v541 = vld [vmem:[#allocation8 + $0x4d8] sm:$0xff]
    %v542 = vld [vmem:[#allocation8 + $0x4e0] sm:$0xff]
    %v543 = vld [vmem:[#allocation8 + $0x4e8] sm:$0xff]
    %v544 = vld [vmem:[#allocation8 + $0x4f0] sm:$0xff]
    %v545 = vld [vmem:[#allocation8 + $0x4f8] sm:$0xff]
    %v546 = vld [vmem:[#allocation8 + $0x500] sm:$0xff]
    %v547 = vld [vmem:[#allocation8 + $0x508] sm:$0xff]
    %v548 = vld [vmem:[#allocation8 + $0x510] sm:$0xff]
    %v549 = vld [vmem:[#allocation8 + $0x518] sm:$0xff]
    %v550 = vld [vmem:[#allocation8 + $0x520] sm:$0xff]
    %v551 = vld [vmem:[#allocation8 + $0x528] sm:$0xff]
    %v552 = vld [vmem:[#allocation8 + $0x530] sm:$0xff]
    %v553 = vld [vmem:[#allocation8 + $0x538] sm:$0xff]
    %v554 = vld [vmem:[#allocation8 + $0x540] sm:$0xff]
    %v555 = vld [vmem:[#allocation8 + $0x548] sm:$0xff]
    %v556 = vld [vmem:[#allocation8 + $0x550] sm:$0xff]
    %v557 = vld [vmem:[#allocation8 + $0x558] sm:$0xff]
    %v558 = vld [vmem:[#allocation8 + $0x560] sm:$0xff]
    %v559 = vld [vmem:[#allocation8 + $0x568] sm:$0xff]
    %v560 = vld [vmem:[#allocation8 + $0x570] sm:$0xff]
    %v561 = vld [vmem:[#allocation8 + $0x578] sm:$0xff]
    %v562 = vld [vmem:[#allocation8 + $0x580] sm:$0xff]
    %v563 = vld [vmem:[#allocation8 + $0x588] sm:$0xff]
    %v564 = vld [vmem:[#allocation8 + $0x590] sm:$0xff]
    %v565 = vld [vmem:[#allocation8 + $0x598] sm:$0xff]
    %v566 = vld [vmem:[#allocation8 + $0x5a0] sm:$0xff]
    %v567 = vld [vmem:[#allocation8 + $0x5a8] sm:$0xff]
    %v568 = vld [vmem:[#allocation8 + $0x5b0] sm:$0xff]
    %v569 = vld [vmem:[#allocation8 + $0x5b8] sm:$0xff]
    %v570 = vld [vmem:[#allocation8 + $0x5c0] sm:$0xff]
    %v571 = vld [vmem:[#allocation8 + $0x5c8] sm:$0xff]
    %v572 = vld [vmem:[#allocation8 + $0x5d0] sm:$0xff]
    %v573 = vld [vmem:[#allocation8 + $0x5d8] sm:$0xff]
    %v574 = vld [vmem:[#allocation8 + $0x5e0] sm:$0xff]
    %v575 = vld [vmem:[#allocation8 + $0x5e8] sm:$0xff]
    %v576 = vld [vmem:[#allocation8 + $0x5f0] sm:$0xff]
    %v577 = vld [vmem:[#allocation8 + $0x5f8] sm:$0xff]
    %v578 = vld [vmem:[#allocation8 + $0x600] sm:$0xff]
    %v579 = vld [vmem:[#allocation8 + $0x608] sm:$0xff]
    %v580 = vld [vmem:[#allocation8 + $0x610] sm:$0xff]
    %v581 = vld [vmem:[#allocation8 + $0x618] sm:$0xff]
    %v582 = vld [vmem:[#allocation8 + $0x620] sm:$0xff]
    %v583 = vld [vmem:[#allocation8 + $0x628] sm:$0xff]
    %v584 = vld [vmem:[#allocation8 + $0x630] sm:$0xff]
    %v585 = vld [vmem:[#allocation8 + $0x638] sm:$0xff]
    %v586 = vld [vmem:[#allocation8 + $0x640] sm:$0xff]
    %v587 = vld [vmem:[#allocation8 + $0x648] sm:$0xff]
    %v588 = vld [vmem:[#allocation8 + $0x650] sm:$0xff]
    %v589 = vld [vmem:[#allocation8 + $0x658] sm:$0xff]
    %v590 = vld [vmem:[#allocation8 + $0x660] sm:$0xff]
    %v591 = vld [vmem:[#allocation8 + $0x668] sm:$0xff]
    %v592 = vld [vmem:[#allocation8 + $0x670] sm:$0xff]
    %v593 = vld [vmem:[#allocation8 + $0x678] sm:$0xff]
    %v594 = vld [vmem:[#allocation8 + $0x680] sm:$0xff]
    %v595 = vld [vmem:[#allocation8 + $0x688] sm:$0xff]
    %v596 = vld [vmem:[#allocation8 + $0x690] sm:$0xff]
    %v597 = vld [vmem:[#allocation8 + $0x698] sm:$0xff]
    %v598 = vld [vmem:[#allocation8 + $0x6a0] sm:$0xff]
    %v599 = vld [vmem:[#allocation8 + $0x6a8] sm:$0xff]
    %v600 = vld [vmem:[#allocation8 + $0x6b0] sm:$0xff]
    %v601 = vld [vmem:[#allocation8 + $0x6b8] sm:$0xff]
    %v602 = vld [vmem:[#allocation8 + $0x6c0] sm:$0xff]
    %v603 = vld [vmem:[#allocation8 + $0x6c8] sm:$0xff]
    %v604 = vld [vmem:[#allocation8 + $0x6d0] sm:$0xff]
    %v605 = vld [vmem:[#allocation8 + $0x6d8] sm:$0xff]
    %v606 = vld [vmem:[#allocation8 + $0x6e0] sm:$0xff]
    %v607 = vld [vmem:[#allocation8 + $0x6e8] sm:$0xff]
    %v608 = vld [vmem:[#allocation8 + $0x6f0] sm:$0xff]
    %v609 = vld [vmem:[#allocation8 + $0x6f8] sm:$0xff]
    %v610 = vld [vmem:[#allocation8 + $0x700] sm:$0xff]
    %v611 = vld [vmem:[#allocation8 + $0x708] sm:$0xff]
    %v612 = vld [vmem:[#allocation8 + $0x710] sm:$0xff]
    %v613 = vld [vmem:[#allocation8 + $0x718] sm:$0xff]
    %v614 = vld [vmem:[#allocation8 + $0x720] sm:$0xff]
    %v615 = vld [vmem:[#allocation8 + $0x728] sm:$0xff]
    %v616 = vld [vmem:[#allocation8 + $0x730] sm:$0xff]
    %v617 = vld [vmem:[#allocation8 + $0x738] sm:$0xff]
    %v618 = vld [vmem:[#allocation8 + $0x740] sm:$0xff]
    %v619 = vld [vmem:[#allocation8 + $0x748] sm:$0xff]
    %v620 = vld [vmem:[#allocation8 + $0x750] sm:$0xff]
    %v621 = vld [vmem:[#allocation8 + $0x758] sm:$0xff]
    %v622 = vld [vmem:[#allocation8 + $0x760] sm:$0xff]
    %v623 = vld [vmem:[#allocation8 + $0x768] sm:$0xff]
    %v624 = vld [vmem:[#allocation8 + $0x770] sm:$0xff]
    %v625 = vld [vmem:[#allocation8 + $0x778] sm:$0xff]
    %v626 = vld [vmem:[#allocation8 + $0x780] sm:$0xff]
    %v627 = vld [vmem:[#allocation8 + $0x788] sm:$0xff]
    %v628 = vld [vmem:[#allocation8 + $0x790] sm:$0xff]
    %v629 = vld [vmem:[#allocation8 + $0x798] sm:$0xff]
    %v630 = vld [vmem:[#allocation8 + $0x7a0] sm:$0xff]
    %v631 = vld [vmem:[#allocation8 + $0x7a8] sm:$0xff]
    %v632 = vld [vmem:[#allocation8 + $0x7b0] sm:$0xff]
    %v633 = vld [vmem:[#allocation8 + $0x7b8] sm:$0xff]
    %v634 = vld [vmem:[#allocation8 + $0x7c0] sm:$0xff]
    %v635 = vld [vmem:[#allocation8 + $0x7c8] sm:$0xff]
    %v636 = vld [vmem:[#allocation8 + $0x7d0] sm:$0xff]
    %v637 = vld [vmem:[#allocation8 + $0x7d8] sm:$0xff]
    %v638 = vld [vmem:[#allocation8 + $0x7e0] sm:$0xff]
    %v639 = vld [vmem:[#allocation8 + $0x7e8] sm:$0xff]
    %v640 = vld [vmem:[#allocation8 + $0x7f0] sm:$0xff]
    %v641 = vld [vmem:[#allocation8 + $0x7f8] sm:$0xff]
    %v642 = vunpack.c.0.s8 %v386
    %v643 = vunpack.c.0.s8 %v387
    %v644 = vunpack.c.0.s8 %v388
    %v645 = vunpack.c.0.s8 %v389
    %v646 = vunpack.c.0.s8 %v390
    %v647 = vunpack.c.0.s8 %v391
    %v648 = vunpack.c.0.s8 %v392
    %v649 = vunpack.c.0.s8 %v393
    %v650 = vunpack.c.1.s8 %v386
    %v651 = vunpack.c.1.s8 %v387
    %v652 = vunpack.c.1.s8 %v388
    %v653 = vunpack.c.1.s8 %v389
    %v654 = vunpack.c.1.s8 %v390
    %v655 = vunpack.c.1.s8 %v391
    %v656 = vunpack.c.1.s8 %v392
    %v657 = vunpack.c.1.s8 %v393
    %v658 = vunpack.c.2.s8 %v386
    %v659 = vunpack.c.2.s8 %v387
    %v660 = vunpack.c.2.s8 %v388
    %v661 = vunpack.c.2.s8 %v389
    %v662 = vunpack.c.2.s8 %v390
    %v663 = vunpack.c.2.s8 %v391
    %v664 = vunpack.c.2.s8 %v392
    %v665 = vunpack.c.2.s8 %v393
    %v666 = vunpack.c.3.s8 %v386
    %v667 = vunpack.c.3.s8 %v387
    %v668 = vunpack.c.3.s8 %v388
    %v669 = vunpack.c.3.s8 %v389
    %v670 = vunpack.c.3.s8 %v390
    %v671 = vunpack.c.3.s8 %v391
    %v672 = vunpack.c.3.s8 %v392
    %v673 = vunpack.c.3.s8 %v393
    %v674 = vunpack.c.0.s8 %v394
    %v675 = vunpack.c.0.s8 %v395
    %v676 = vunpack.c.0.s8 %v396
    %v677 = vunpack.c.0.s8 %v397
    %v678 = vunpack.c.0.s8 %v398
    %v679 = vunpack.c.0.s8 %v399
    %v680 = vunpack.c.0.s8 %v400
    %v681 = vunpack.c.0.s8 %v401
    %v682 = vunpack.c.1.s8 %v394
    %v683 = vunpack.c.1.s8 %v395
    %v684 = vunpack.c.1.s8 %v396
    %v685 = vunpack.c.1.s8 %v397
    %v686 = vunpack.c.1.s8 %v398
    %v687 = vunpack.c.1.s8 %v399
    %v688 = vunpack.c.1.s8 %v400
    %v689 = vunpack.c.1.s8 %v401
    %v690 = vunpack.c.2.s8 %v394
    %v691 = vunpack.c.2.s8 %v395
    %v692 = vunpack.c.2.s8 %v396
    %v693 = vunpack.c.2.s8 %v397
    %v694 = vunpack.c.2.s8 %v398
    %v695 = vunpack.c.2.s8 %v399
    %v696 = vunpack.c.2.s8 %v400
    %v697 = vunpack.c.2.s8 %v401
    %v698 = vunpack.c.3.s8 %v394
    %v699 = vunpack.c.3.s8 %v395
    %v700 = vunpack.c.3.s8 %v396
    %v701 = vunpack.c.3.s8 %v397
    %v702 = vunpack.c.3.s8 %v398
    %v703 = vunpack.c.3.s8 %v399
    %v704 = vunpack.c.3.s8 %v400
    %v705 = vunpack.c.3.s8 %v401
    %v706 = vunpack.c.0.s8 %v402
    %v707 = vunpack.c.0.s8 %v403
    %v708 = vunpack.c.0.s8 %v404
    %v709 = vunpack.c.0.s8 %v405
    %v710 = vunpack.c.0.s8 %v406
    %v711 = vunpack.c.0.s8 %v407
    %v712 = vunpack.c.0.s8 %v408
    %v713 = vunpack.c.0.s8 %v409
    %v714 = vunpack.c.1.s8 %v402
    %v715 = vunpack.c.1.s8 %v403
    %v716 = vunpack.c.1.s8 %v404
    %v717 = vunpack.c.1.s8 %v405
    %v718 = vunpack.c.1.s8 %v406
    %v719 = vunpack.c.1.s8 %v407
    %v720 = vunpack.c.1.s8 %v408
    %v721 = vunpack.c.1.s8 %v409
    %v722 = vunpack.c.2.s8 %v402
    %v723 = vunpack.c.2.s8 %v403
    %v724 = vunpack.c.2.s8 %v404
    %v725 = vunpack.c.2.s8 %v405
    %v726 = vunpack.c.2.s8 %v406
    %v727 = vunpack.c.2.s8 %v407
    %v728 = vunpack.c.2.s8 %v408
    %v729 = vunpack.c.2.s8 %v409
    %v730 = vunpack.c.3.s8 %v402
    %v731 = vunpack.c.3.s8 %v403
    %v732 = vunpack.c.3.s8 %v404
    %v733 = vunpack.c.3.s8 %v405
    %v734 = vunpack.c.3.s8 %v406
    %v735 = vunpack.c.3.s8 %v407
    %v736 = vunpack.c.3.s8 %v408
    %v737 = vunpack.c.3.s8 %v409
    %v738 = vunpack.c.0.s8 %v410
    %v739 = vunpack.c.0.s8 %v411
    %v740 = vunpack.c.0.s8 %v412
    %v741 = vunpack.c.0.s8 %v413
    %v742 = vunpack.c.0.s8 %v414
    %v743 = vunpack.c.0.s8 %v415
    %v744 = vunpack.c.0.s8 %v416
    %v745 = vunpack.c.0.s8 %v417
    %v746 = vunpack.c.1.s8 %v410
    %v747 = vunpack.c.1.s8 %v411
    %v748 = vunpack.c.1.s8 %v412
    %v749 = vunpack.c.1.s8 %v413
    %v750 = vunpack.c.1.s8 %v414
    %v751 = vunpack.c.1.s8 %v415
    %v752 = vunpack.c.1.s8 %v416
    %v753 = vunpack.c.1.s8 %v417
    %v754 = vunpack.c.2.s8 %v410
    %v755 = vunpack.c.2.s8 %v411
    %v756 = vunpack.c.2.s8 %v412
    %v757 = vunpack.c.2.s8 %v413
    %v758 = vunpack.c.2.s8 %v414
    %v759 = vunpack.c.2.s8 %v415
    %v760 = vunpack.c.2.s8 %v416
    %v761 = vunpack.c.2.s8 %v417
    %v762 = vunpack.c.3.s8 %v410
    %v763 = vunpack.c.3.s8 %v411
    %v764 = vunpack.c.3.s8 %v412
    %v765 = vunpack.c.3.s8 %v413
    %v766 = vunpack.c.3.s8 %v414
    %v767 = vunpack.c.3.s8 %v415
    %v768 = vunpack.c.3.s8 %v416
    %v769 = vunpack.c.3.s8 %v417
    %v770 = vunpack.c.0.s8 %v418
    %v771 = vunpack.c.0.s8 %v419
    %v772 = vunpack.c.0.s8 %v420
    %v773 = vunpack.c.0.s8 %v421
    %v774 = vunpack.c.0.s8 %v422
    %v775 = vunpack.c.0.s8 %v423
    %v776 = vunpack.c.0.s8 %v424
    %v777 = vunpack.c.0.s8 %v425
    %v778 = vunpack.c.1.s8 %v418
    %v779 = vunpack.c.1.s8 %v419
    %v780 = vunpack.c.1.s8 %v420
    %v781 = vunpack.c.1.s8 %v421
    %v782 = vunpack.c.1.s8 %v422
    %v783 = vunpack.c.1.s8 %v423
    %v784 = vunpack.c.1.s8 %v424
    %v785 = vunpack.c.1.s8 %v425
    %v786 = vunpack.c.2.s8 %v418
    %v787 = vunpack.c.2.s8 %v419
    %v788 = vunpack.c.2.s8 %v420
    %v789 = vunpack.c.2.s8 %v421
    %v790 = vunpack.c.2.s8 %v422
    %v791 = vunpack.c.2.s8 %v423
    %v792 = vunpack.c.2.s8 %v424
    %v793 = vunpack.c.2.s8 %v425
    %v794 = vunpack.c.3.s8 %v418
    %v795 = vunpack.c.3.s8 %v419
    %v796 = vunpack.c.3.s8 %v420
    %v797 = vunpack.c.3.s8 %v421
    %v798 = vunpack.c.3.s8 %v422
    %v799 = vunpack.c.3.s8 %v423
    %v800 = vunpack.c.3.s8 %v424
    %v801 = vunpack.c.3.s8 %v425
    %v802 = vunpack.c.0.s8 %v426
    %v803 = vunpack.c.0.s8 %v427
    %v804 = vunpack.c.0.s8 %v428
    %v805 = vunpack.c.0.s8 %v429
    %v806 = vunpack.c.0.s8 %v430
    %v807 = vunpack.c.0.s8 %v431
    %v808 = vunpack.c.0.s8 %v432
    %v809 = vunpack.c.0.s8 %v433
    %v810 = vunpack.c.1.s8 %v426
    %v811 = vunpack.c.1.s8 %v427
    %v812 = vunpack.c.1.s8 %v428
    %v813 = vunpack.c.1.s8 %v429
    %v814 = vunpack.c.1.s8 %v430
    %v815 = vunpack.c.1.s8 %v431
    %v816 = vunpack.c.1.s8 %v432
    %v817 = vunpack.c.1.s8 %v433
    %v818 = vunpack.c.2.s8 %v426
    %v819 = vunpack.c.2.s8 %v427
    %v820 = vunpack.c.2.s8 %v428
    %v821 = vunpack.c.2.s8 %v429
    %v822 = vunpack.c.2.s8 %v430
    %v823 = vunpack.c.2.s8 %v431
    %v824 = vunpack.c.2.s8 %v432
    %v825 = vunpack.c.2.s8 %v433
    %v826 = vunpack.c.3.s8 %v426
    %v827 = vunpack.c.3.s8 %v427
    %v828 = vunpack.c.3.s8 %v428
    %v829 = vunpack.c.3.s8 %v429
    %v830 = vunpack.c.3.s8 %v430
    %v831 = vunpack.c.3.s8 %v431
    %v832 = vunpack.c.3.s8 %v432
    %v833 = vunpack.c.3.s8 %v433
    %v834 = vunpack.c.0.s8 %v434
    %v835 = vunpack.c.0.s8 %v435
    %v836 = vunpack.c.0.s8 %v436
    %v837 = vunpack.c.0.s8 %v437
    %v838 = vunpack.c.0.s8 %v438
    %v839 = vunpack.c.0.s8 %v439
    %v840 = vunpack.c.0.s8 %v440
    %v841 = vunpack.c.0.s8 %v441
    %v842 = vunpack.c.1.s8 %v434
    %v843 = vunpack.c.1.s8 %v435
    %v844 = vunpack.c.1.s8 %v436
    %v845 = vunpack.c.1.s8 %v437
    %v846 = vunpack.c.1.s8 %v438
    %v847 = vunpack.c.1.s8 %v439
    %v848 = vunpack.c.1.s8 %v440
    %v849 = vunpack.c.1.s8 %v441
    %v850 = vunpack.c.2.s8 %v434
    %v851 = vunpack.c.2.s8 %v435
    %v852 = vunpack.c.2.s8 %v436
    %v853 = vunpack.c.2.s8 %v437
    %v854 = vunpack.c.2.s8 %v438
    %v855 = vunpack.c.2.s8 %v439
    %v856 = vunpack.c.2.s8 %v440
    %v857 = vunpack.c.2.s8 %v441
    %v858 = vunpack.c.3.s8 %v434
    %v859 = vunpack.c.3.s8 %v435
    %v860 = vunpack.c.3.s8 %v436
    %v861 = vunpack.c.3.s8 %v437
    %v862 = vunpack.c.3.s8 %v438
    %v863 = vunpack.c.3.s8 %v439
    %v864 = vunpack.c.3.s8 %v440
    %v865 = vunpack.c.3.s8 %v441
    %v866 = vunpack.c.0.s8 %v442
    %v867 = vunpack.c.0.s8 %v443
    %v868 = vunpack.c.0.s8 %v444
    %v869 = vunpack.c.0.s8 %v445
    %v870 = vunpack.c.0.s8 %v446
    %v871 = vunpack.c.0.s8 %v447
    %v872 = vunpack.c.0.s8 %v448
    %v873 = vunpack.c.0.s8 %v449
    %v874 = vunpack.c.1.s8 %v442
    %v875 = vunpack.c.1.s8 %v443
    %v876 = vunpack.c.1.s8 %v444
    %v877 = vunpack.c.1.s8 %v445
    %v878 = vunpack.c.1.s8 %v446
    %v879 = vunpack.c.1.s8 %v447
    %v880 = vunpack.c.1.s8 %v448
    %v881 = vunpack.c.1.s8 %v449
    %v882 = vunpack.c.2.s8 %v442
    %v883 = vunpack.c.2.s8 %v443
    %v884 = vunpack.c.2.s8 %v444
    %v885 = vunpack.c.2.s8 %v445
    %v886 = vunpack.c.2.s8 %v446
    %v887 = vunpack.c.2.s8 %v447
    %v888 = vunpack.c.2.s8 %v448
    %v889 = vunpack.c.2.s8 %v449
    %v890 = vunpack.c.3.s8 %v442
    %v891 = vunpack.c.3.s8 %v443
    %v892 = vunpack.c.3.s8 %v444
    %v893 = vunpack.c.3.s8 %v445
    %v894 = vunpack.c.3.s8 %v446
    %v895 = vunpack.c.3.s8 %v447
    %v896 = vunpack.c.3.s8 %v448
    %v897 = vunpack.c.3.s8 %v449
    %v898 = vunpack.c.0.s8 %v450
    %v899 = vunpack.c.0.s8 %v451
    %v900 = vunpack.c.0.s8 %v452
    %v901 = vunpack.c.0.s8 %v453
    %v902 = vunpack.c.0.s8 %v454
    %v903 = vunpack.c.0.s8 %v455
    %v904 = vunpack.c.0.s8 %v456
    %v905 = vunpack.c.0.s8 %v457
    %v906 = vunpack.c.1.s8 %v450
    %v907 = vunpack.c.1.s8 %v451
    %v908 = vunpack.c.1.s8 %v452
    %v909 = vunpack.c.1.s8 %v453
    %v910 = vunpack.c.1.s8 %v454
    %v911 = vunpack.c.1.s8 %v455
    %v912 = vunpack.c.1.s8 %v456
    %v913 = vunpack.c.1.s8 %v457
    %v914 = vunpack.c.2.s8 %v450
    %v915 = vunpack.c.2.s8 %v451
    %v916 = vunpack.c.2.s8 %v452
    %v917 = vunpack.c.2.s8 %v453
    %v918 = vunpack.c.2.s8 %v454
    %v919 = vunpack.c.2.s8 %v455
    %v920 = vunpack.c.2.s8 %v456
    %v921 = vunpack.c.2.s8 %v457
    %v922 = vunpack.c.3.s8 %v450
    %v923 = vunpack.c.3.s8 %v451
    %v924 = vunpack.c.3.s8 %v452
    %v925 = vunpack.c.3.s8 %v453
    %v926 = vunpack.c.3.s8 %v454
    %v927 = vunpack.c.3.s8 %v455
    %v928 = vunpack.c.3.s8 %v456
    %v929 = vunpack.c.3.s8 %v457
    %v930 = vunpack.c.0.s8 %v458
    %v931 = vunpack.c.0.s8 %v459
    %v932 = vunpack.c.0.s8 %v460
    %v933 = vunpack.c.0.s8 %v461
    %v934 = vunpack.c.0.s8 %v462
    %v935 = vunpack.c.0.s8 %v463
    %v936 = vunpack.c.0.s8 %v464
    %v937 = vunpack.c.0.s8 %v465
    %v938 = vunpack.c.1.s8 %v458
    %v939 = vunpack.c.1.s8 %v459
    %v940 = vunpack.c.1.s8 %v460
    %v941 = vunpack.c.1.s8 %v461
    %v942 = vunpack.c.1.s8 %v462
    %v943 = vunpack.c.1.s8 %v463
    %v944 = vunpack.c.1.s8 %v464
    %v945 = vunpack.c.1.s8 %v465
    %v946 = vunpack.c.2.s8 %v458
    %v947 = vunpack.c.2.s8 %v459
    %v948 = vunpack.c.2.s8 %v460
    %v949 = vunpack.c.2.s8 %v461
    %v950 = vunpack.c.2.s8 %v462
    %v951 = vunpack.c.2.s8 %v463
    %v952 = vunpack.c.2.s8 %v464
    %v953 = vunpack.c.2.s8 %v465
    %v954 = vunpack.c.3.s8 %v458
    %v955 = vunpack.c.3.s8 %v459
    %v956 = vunpack.c.3.s8 %v460
    %v957 = vunpack.c.3.s8 %v461
    %v958 = vunpack.c.3.s8 %v462
    %v959 = vunpack.c.3.s8 %v463
    %v960 = vunpack.c.3.s8 %v464
    %v961 = vunpack.c.3.s8 %v465
    %v962 = vunpack.c.0.s8 %v466
    %v963 = vunpack.c.0.s8 %v467
    %v964 = vunpack.c.0.s8 %v468
    %v965 = vunpack.c.0.s8 %v469
    %v966 = vunpack.c.0.s8 %v470
    %v967 = vunpack.c.0.s8 %v471
    %v968 = vunpack.c.0.s8 %v472
    %v969 = vunpack.c.0.s8 %v473
    %v970 = vunpack.c.1.s8 %v466
    %v971 = vunpack.c.1.s8 %v467
    %v972 = vunpack.c.1.s8 %v468
    %v973 = vunpack.c.1.s8 %v469
    %v974 = vunpack.c.1.s8 %v470
    %v975 = vunpack.c.1.s8 %v471
    %v976 = vunpack.c.1.s8 %v472
    %v977 = vunpack.c.1.s8 %v473
    %v978 = vunpack.c.2.s8 %v466
    %v979 = vunpack.c.2.s8 %v467
    %v980 = vunpack.c.2.s8 %v468
    %v981 = vunpack.c.2.s8 %v469
    %v982 = vunpack.c.2.s8 %v470
    %v983 = vunpack.c.2.s8 %v471
    %v984 = vunpack.c.2.s8 %v472
    %v985 = vunpack.c.2.s8 %v473
    %v986 = vunpack.c.3.s8 %v466
    %v987 = vunpack.c.3.s8 %v467
    %v988 = vunpack.c.3.s8 %v468
    %v989 = vunpack.c.3.s8 %v469
    %v990 = vunpack.c.3.s8 %v470
    %v991 = vunpack.c.3.s8 %v471
    %v992 = vunpack.c.3.s8 %v472
    %v993 = vunpack.c.3.s8 %v473
    %v994 = vunpack.c.0.s8 %v474
    %v995 = vunpack.c.0.s8 %v475
    %v996 = vunpack.c.0.s8 %v476
    %v997 = vunpack.c.0.s8 %v477
    %v998 = vunpack.c.0.s8 %v478
    %v999 = vunpack.c.0.s8 %v479
    %v1000 = vunpack.c.0.s8 %v480
    %v1001 = vunpack.c.0.s8 %v481
    %v1002 = vunpack.c.1.s8 %v474
    %v1003 = vunpack.c.1.s8 %v475
    %v1004 = vunpack.c.1.s8 %v476
    %v1005 = vunpack.c.1.s8 %v477
    %v1006 = vunpack.c.1.s8 %v478
    %v1007 = vunpack.c.1.s8 %v479
    %v1008 = vunpack.c.1.s8 %v480
    %v1009 = vunpack.c.1.s8 %v481
    %v1010 = vunpack.c.2.s8 %v474
    %v1011 = vunpack.c.2.s8 %v475
    %v1012 = vunpack.c.2.s8 %v476
    %v1013 = vunpack.c.2.s8 %v477
    %v1014 = vunpack.c.2.s8 %v478
    %v1015 = vunpack.c.2.s8 %v479
    %v1016 = vunpack.c.2.s8 %v480
    %v1017 = vunpack.c.2.s8 %v481
    %v1018 = vunpack.c.3.s8 %v474
    %v1019 = vunpack.c.3.s8 %v475
    %v1020 = vunpack.c.3.s8 %v476
    %v1021 = vunpack.c.3.s8 %v477
    %v1022 = vunpack.c.3.s8 %v478
    %v1023 = vunpack.c.3.s8 %v479
    %v1024 = vunpack.c.3.s8 %v480
    %v1025 = vunpack.c.3.s8 %v481
    %v1026 = vunpack.c.0.s8 %v482
    %v1027 = vunpack.c.0.s8 %v483
    %v1028 = vunpack.c.0.s8 %v484
    %v1029 = vunpack.c.0.s8 %v485
    %v1030 = vunpack.c.0.s8 %v486
    %v1031 = vunpack.c.0.s8 %v487
    %v1032 = vunpack.c.0.s8 %v488
    %v1033 = vunpack.c.0.s8 %v489
    %v1034 = vunpack.c.1.s8 %v482
    %v1035 = vunpack.c.1.s8 %v483
    %v1036 = vunpack.c.1.s8 %v484
    %v1037 = vunpack.c.1.s8 %v485
    %v1038 = vunpack.c.1.s8 %v486
    %v1039 = vunpack.c.1.s8 %v487
    %v1040 = vunpack.c.1.s8 %v488
    %v1041 = vunpack.c.1.s8 %v489
    %v1042 = vunpack.c.2.s8 %v482
    %v1043 = vunpack.c.2.s8 %v483
    %v1044 = vunpack.c.2.s8 %v484
    %v1045 = vunpack.c.2.s8 %v485
    %v1046 = vunpack.c.2.s8 %v486
    %v1047 = vunpack.c.2.s8 %v487
    %v1048 = vunpack.c.2.s8 %v488
    %v1049 = vunpack.c.2.s8 %v489
    %v1050 = vunpack.c.3.s8 %v482
    %v1051 = vunpack.c.3.s8 %v483
    %v1052 = vunpack.c.3.s8 %v484
    %v1053 = vunpack.c.3.s8 %v485
    %v1054 = vunpack.c.3.s8 %v486
    %v1055 = vunpack.c.3.s8 %v487
    %v1056 = vunpack.c.3.s8 %v488
    %v1057 = vunpack.c.3.s8 %v489
    %v1058 = vunpack.c.0.s8 %v490
    %v1059 = vunpack.c.0.s8 %v491
    %v1060 = vunpack.c.0.s8 %v492
    %v1061 = vunpack.c.0.s8 %v493
    %v1062 = vunpack.c.0.s8 %v494
    %v1063 = vunpack.c.0.s8 %v495
    %v1064 = vunpack.c.0.s8 %v496
    %v1065 = vunpack.c.0.s8 %v497
    %v1066 = vunpack.c.1.s8 %v490
    %v1067 = vunpack.c.1.s8 %v491
    %v1068 = vunpack.c.1.s8 %v492
    %v1069 = vunpack.c.1.s8 %v493
    %v1070 = vunpack.c.1.s8 %v494
    %v1071 = vunpack.c.1.s8 %v495
    %v1072 = vunpack.c.1.s8 %v496
    %v1073 = vunpack.c.1.s8 %v497
    %v1074 = vunpack.c.2.s8 %v490
    %v1075 = vunpack.c.2.s8 %v491
    %v1076 = vunpack.c.2.s8 %v492
    %v1077 = vunpack.c.2.s8 %v493
    %v1078 = vunpack.c.2.s8 %v494
    %v1079 = vunpack.c.2.s8 %v495
    %v1080 = vunpack.c.2.s8 %v496
    %v1081 = vunpack.c.2.s8 %v497
    %v1082 = vunpack.c.3.s8 %v490
    %v1083 = vunpack.c.3.s8 %v491
    %v1084 = vunpack.c.3.s8 %v492
    %v1085 = vunpack.c.3.s8 %v493
    %v1086 = vunpack.c.3.s8 %v494
    %v1087 = vunpack.c.3.s8 %v495
    %v1088 = vunpack.c.3.s8 %v496
    %v1089 = vunpack.c.3.s8 %v497
    %v1090 = vunpack.c.0.s8 %v498
    %v1091 = vunpack.c.0.s8 %v499
    %v1092 = vunpack.c.0.s8 %v500
    %v1093 = vunpack.c.0.s8 %v501
    %v1094 = vunpack.c.0.s8 %v502
    %v1095 = vunpack.c.0.s8 %v503
    %v1096 = vunpack.c.0.s8 %v504
    %v1097 = vunpack.c.0.s8 %v505
    %v1098 = vunpack.c.1.s8 %v498
    %v1099 = vunpack.c.1.s8 %v499
    %v1100 = vunpack.c.1.s8 %v500
    %v1101 = vunpack.c.1.s8 %v501
    %v1102 = vunpack.c.1.s8 %v502
    %v1103 = vunpack.c.1.s8 %v503
    %v1104 = vunpack.c.1.s8 %v504
    %v1105 = vunpack.c.1.s8 %v505
    %v1106 = vunpack.c.2.s8 %v498
    %v1107 = vunpack.c.2.s8 %v499
    %v1108 = vunpack.c.2.s8 %v500
    %v1109 = vunpack.c.2.s8 %v501
    %v1110 = vunpack.c.2.s8 %v502
    %v1111 = vunpack.c.2.s8 %v503
    %v1112 = vunpack.c.2.s8 %v504
    %v1113 = vunpack.c.2.s8 %v505
    %v1114 = vunpack.c.3.s8 %v498
    %v1115 = vunpack.c.3.s8 %v499
    %v1116 = vunpack.c.3.s8 %v500
    %v1117 = vunpack.c.3.s8 %v501
    %v1118 = vunpack.c.3.s8 %v502
    %v1119 = vunpack.c.3.s8 %v503
    %v1120 = vunpack.c.3.s8 %v504
    %v1121 = vunpack.c.3.s8 %v505
    %v1122 = vunpack.c.0.s8 %v506
    %v1123 = vunpack.c.0.s8 %v507
    %v1124 = vunpack.c.0.s8 %v508
    %v1125 = vunpack.c.0.s8 %v509
    %v1126 = vunpack.c.0.s8 %v510
    %v1127 = vunpack.c.0.s8 %v511
    %v1128 = vunpack.c.0.s8 %v512
    %v1129 = vunpack.c.0.s8 %v513
    %v1130 = vunpack.c.1.s8 %v506
    %v1131 = vunpack.c.1.s8 %v507
    %v1132 = vunpack.c.1.s8 %v508
    %v1133 = vunpack.c.1.s8 %v509
    %v1134 = vunpack.c.1.s8 %v510
    %v1135 = vunpack.c.1.s8 %v511
    %v1136 = vunpack.c.1.s8 %v512
    %v1137 = vunpack.c.1.s8 %v513
    %v1138 = vunpack.c.2.s8 %v506
    %v1139 = vunpack.c.2.s8 %v507
    %v1140 = vunpack.c.2.s8 %v508
    %v1141 = vunpack.c.2.s8 %v509
    %v1142 = vunpack.c.2.s8 %v510
    %v1143 = vunpack.c.2.s8 %v511
    %v1144 = vunpack.c.2.s8 %v512
    %v1145 = vunpack.c.2.s8 %v513
    %v1146 = vunpack.c.3.s8 %v506
    %v1147 = vunpack.c.3.s8 %v507
    %v1148 = vunpack.c.3.s8 %v508
    %v1149 = vunpack.c.3.s8 %v509
    %v1150 = vunpack.c.3.s8 %v510
    %v1151 = vunpack.c.3.s8 %v511
    %v1152 = vunpack.c.3.s8 %v512
    %v1153 = vunpack.c.3.s8 %v513
    %v1154 = vunpack.c.0.s8 %v514
    %v1155 = vunpack.c.0.s8 %v515
    %v1156 = vunpack.c.0.s8 %v516
    %v1157 = vunpack.c.0.s8 %v517
    %v1158 = vunpack.c.0.s8 %v518
    %v1159 = vunpack.c.0.s8 %v519
    %v1160 = vunpack.c.0.s8 %v520
    %v1161 = vunpack.c.0.s8 %v521
    %v1162 = vunpack.c.1.s8 %v514
    %v1163 = vunpack.c.1.s8 %v515
    %v1164 = vunpack.c.1.s8 %v516
    %v1165 = vunpack.c.1.s8 %v517
    %v1166 = vunpack.c.1.s8 %v518
    %v1167 = vunpack.c.1.s8 %v519
    %v1168 = vunpack.c.1.s8 %v520
    %v1169 = vunpack.c.1.s8 %v521
    %v1170 = vunpack.c.2.s8 %v514
    %v1171 = vunpack.c.2.s8 %v515
    %v1172 = vunpack.c.2.s8 %v516
    %v1173 = vunpack.c.2.s8 %v517
    %v1174 = vunpack.c.2.s8 %v518
    %v1175 = vunpack.c.2.s8 %v519
    %v1176 = vunpack.c.2.s8 %v520
    %v1177 = vunpack.c.2.s8 %v521
    %v1178 = vunpack.c.3.s8 %v514
    %v1179 = vunpack.c.3.s8 %v515
    %v1180 = vunpack.c.3.s8 %v516
    %v1181 = vunpack.c.3.s8 %v517
    %v1182 = vunpack.c.3.s8 %v518
    %v1183 = vunpack.c.3.s8 %v519
    %v1184 = vunpack.c.3.s8 %v520
    %v1185 = vunpack.c.3.s8 %v521
    %v1186 = vunpack.c.0.s8 %v522
    %v1187 = vunpack.c.0.s8 %v523
    %v1188 = vunpack.c.0.s8 %v524
    %v1189 = vunpack.c.0.s8 %v525
    %v1190 = vunpack.c.0.s8 %v526
    %v1191 = vunpack.c.0.s8 %v527
    %v1192 = vunpack.c.0.s8 %v528
    %v1193 = vunpack.c.0.s8 %v529
    %v1194 = vunpack.c.1.s8 %v522
    %v1195 = vunpack.c.1.s8 %v523
    %v1196 = vunpack.c.1.s8 %v524
    %v1197 = vunpack.c.1.s8 %v525
    %v1198 = vunpack.c.1.s8 %v526
    %v1199 = vunpack.c.1.s8 %v527
    %v1200 = vunpack.c.1.s8 %v528
    %v1201 = vunpack.c.1.s8 %v529
    %v1202 = vunpack.c.2.s8 %v522
    %v1203 = vunpack.c.2.s8 %v523
    %v1204 = vunpack.c.2.s8 %v524
    %v1205 = vunpack.c.2.s8 %v525
    %v1206 = vunpack.c.2.s8 %v526
    %v1207 = vunpack.c.2.s8 %v527
    %v1208 = vunpack.c.2.s8 %v528
    %v1209 = vunpack.c.2.s8 %v529
    %v1210 = vunpack.c.3.s8 %v522
    %v1211 = vunpack.c.3.s8 %v523
    %v1212 = vunpack.c.3.s8 %v524
    %v1213 = vunpack.c.3.s8 %v525
    %v1214 = vunpack.c.3.s8 %v526
    %v1215 = vunpack.c.3.s8 %v527
    %v1216 = vunpack.c.3.s8 %v528
    %v1217 = vunpack.c.3.s8 %v529
    %v1218 = vunpack.c.0.s8 %v530
    %v1219 = vunpack.c.0.s8 %v531
    %v1220 = vunpack.c.0.s8 %v532
    %v1221 = vunpack.c.0.s8 %v533
    %v1222 = vunpack.c.0.s8 %v534
    %v1223 = vunpack.c.0.s8 %v535
    %v1224 = vunpack.c.0.s8 %v536
    %v1225 = vunpack.c.0.s8 %v537
    %v1226 = vunpack.c.1.s8 %v530
    %v1227 = vunpack.c.1.s8 %v531
    %v1228 = vunpack.c.1.s8 %v532
    %v1229 = vunpack.c.1.s8 %v533
    %v1230 = vunpack.c.1.s8 %v534
    %v1231 = vunpack.c.1.s8 %v535
    %v1232 = vunpack.c.1.s8 %v536
    %v1233 = vunpack.c.1.s8 %v537
    %v1234 = vunpack.c.2.s8 %v530
    %v1235 = vunpack.c.2.s8 %v531
    %v1236 = vunpack.c.2.s8 %v532
    %v1237 = vunpack.c.2.s8 %v533
    %v1238 = vunpack.c.2.s8 %v534
    %v1239 = vunpack.c.2.s8 %v535
    %v1240 = vunpack.c.2.s8 %v536
    %v1241 = vunpack.c.2.s8 %v537
    %v1242 = vunpack.c.3.s8 %v530
    %v1243 = vunpack.c.3.s8 %v531
    %v1244 = vunpack.c.3.s8 %v532
    %v1245 = vunpack.c.3.s8 %v533
    %v1246 = vunpack.c.3.s8 %v534
    %v1247 = vunpack.c.3.s8 %v535
    %v1248 = vunpack.c.3.s8 %v536
    %v1249 = vunpack.c.3.s8 %v537
    %v1250 = vunpack.c.0.s8 %v538
    %v1251 = vunpack.c.0.s8 %v539
    %v1252 = vunpack.c.0.s8 %v540
    %v1253 = vunpack.c.0.s8 %v541
    %v1254 = vunpack.c.0.s8 %v542
    %v1255 = vunpack.c.0.s8 %v543
    %v1256 = vunpack.c.0.s8 %v544
    %v1257 = vunpack.c.0.s8 %v545
    %v1258 = vunpack.c.1.s8 %v538
    %v1259 = vunpack.c.1.s8 %v539
    %v1260 = vunpack.c.1.s8 %v540
    %v1261 = vunpack.c.1.s8 %v541
    %v1262 = vunpack.c.1.s8 %v542
    %v1263 = vunpack.c.1.s8 %v543
    %v1264 = vunpack.c.1.s8 %v544
    %v1265 = vunpack.c.1.s8 %v545
    %v1266 = vunpack.c.2.s8 %v538
    %v1267 = vunpack.c.2.s8 %v539
    %v1268 = vunpack.c.2.s8 %v540
    %v1269 = vunpack.c.2.s8 %v541
    %v1270 = vunpack.c.2.s8 %v542
    %v1271 = vunpack.c.2.s8 %v543
    %v1272 = vunpack.c.2.s8 %v544
    %v1273 = vunpack.c.2.s8 %v545
    %v1274 = vunpack.c.3.s8 %v538
    %v1275 = vunpack.c.3.s8 %v539
    %v1276 = vunpack.c.3.s8 %v540
    %v1277 = vunpack.c.3.s8 %v541
    %v1278 = vunpack.c.3.s8 %v542
    %v1279 = vunpack.c.3.s8 %v543
    %v1280 = vunpack.c.3.s8 %v544
    %v1281 = vunpack.c.3.s8 %v545
    %v1282 = vunpack.c.0.s8 %v546
    %v1283 = vunpack.c.0.s8 %v547
    %v1284 = vunpack.c.0.s8 %v548
    %v1285 = vunpack.c.0.s8 %v549
    %v1286 = vunpack.c.0.s8 %v550
    %v1287 = vunpack.c.0.s8 %v551
    %v1288 = vunpack.c.0.s8 %v552
    %v1289 = vunpack.c.0.s8 %v553
    %v1290 = vunpack.c.1.s8 %v546
    %v1291 = vunpack.c.1.s8 %v547
    %v1292 = vunpack.c.1.s8 %v548
    %v1293 = vunpack.c.1.s8 %v549
    %v1294 = vunpack.c.1.s8 %v550
    %v1295 = vunpack.c.1.s8 %v551
    %v1296 = vunpack.c.1.s8 %v552
    %v1297 = vunpack.c.1.s8 %v553
    %v1298 = vunpack.c.2.s8 %v546
    %v1299 = vunpack.c.2.s8 %v547
    %v1300 = vunpack.c.2.s8 %v548
    %v1301 = vunpack.c.2.s8 %v549
    %v1302 = vunpack.c.2.s8 %v550
    %v1303 = vunpack.c.2.s8 %v551
    %v1304 = vunpack.c.2.s8 %v552
    %v1305 = vunpack.c.2.s8 %v553
    %v1306 = vunpack.c.3.s8 %v546
    %v1307 = vunpack.c.3.s8 %v547
    %v1308 = vunpack.c.3.s8 %v548
    %v1309 = vunpack.c.3.s8 %v549
    %v1310 = vunpack.c.3.s8 %v550
    %v1311 = vunpack.c.3.s8 %v551
    %v1312 = vunpack.c.3.s8 %v552
    %v1313 = vunpack.c.3.s8 %v553
    %v1314 = vunpack.c.0.s8 %v554
    %v1315 = vunpack.c.0.s8 %v555
    %v1316 = vunpack.c.0.s8 %v556
    %v1317 = vunpack.c.0.s8 %v557
    %v1318 = vunpack.c.0.s8 %v558
    %v1319 = vunpack.c.0.s8 %v559
    %v1320 = vunpack.c.0.s8 %v560
    %v1321 = vunpack.c.0.s8 %v561
    %v1322 = vunpack.c.1.s8 %v554
    %v1323 = vunpack.c.1.s8 %v555
    %v1324 = vunpack.c.1.s8 %v556
    %v1325 = vunpack.c.1.s8 %v557
    %v1326 = vunpack.c.1.s8 %v558
    %v1327 = vunpack.c.1.s8 %v559
    %v1328 = vunpack.c.1.s8 %v560
    %v1329 = vunpack.c.1.s8 %v561
    %v1330 = vunpack.c.2.s8 %v554
    %v1331 = vunpack.c.2.s8 %v555
    %v1332 = vunpack.c.2.s8 %v556
    %v1333 = vunpack.c.2.s8 %v557
    %v1334 = vunpack.c.2.s8 %v558
    %v1335 = vunpack.c.2.s8 %v559
    %v1336 = vunpack.c.2.s8 %v560
    %v1337 = vunpack.c.2.s8 %v561
    %v1338 = vunpack.c.3.s8 %v554
    %v1339 = vunpack.c.3.s8 %v555
    %v1340 = vunpack.c.3.s8 %v556
    %v1341 = vunpack.c.3.s8 %v557
    %v1342 = vunpack.c.3.s8 %v558
    %v1343 = vunpack.c.3.s8 %v559
    %v1344 = vunpack.c.3.s8 %v560
    %v1345 = vunpack.c.3.s8 %v561
    %v1346 = vunpack.c.0.s8 %v562
    %v1347 = vunpack.c.0.s8 %v563
    %v1348 = vunpack.c.0.s8 %v564
    %v1349 = vunpack.c.0.s8 %v565
    %v1350 = vunpack.c.0.s8 %v566
    %v1351 = vunpack.c.0.s8 %v567
    %v1352 = vunpack.c.0.s8 %v568
    %v1353 = vunpack.c.0.s8 %v569
    %v1354 = vunpack.c.1.s8 %v562
    %v1355 = vunpack.c.1.s8 %v563
    %v1356 = vunpack.c.1.s8 %v564
    %v1357 = vunpack.c.1.s8 %v565
    %v1358 = vunpack.c.1.s8 %v566
    %v1359 = vunpack.c.1.s8 %v567
    %v1360 = vunpack.c.1.s8 %v568
    %v1361 = vunpack.c.1.s8 %v569
    %v1362 = vunpack.c.2.s8 %v562
    %v1363 = vunpack.c.2.s8 %v563
    %v1364 = vunpack.c.2.s8 %v564
    %v1365 = vunpack.c.2.s8 %v565
    %v1366 = vunpack.c.2.s8 %v566
    %v1367 = vunpack.c.2.s8 %v567
    %v1368 = vunpack.c.2.s8 %v568
    %v1369 = vunpack.c.2.s8 %v569
    %v1370 = vunpack.c.3.s8 %v562
    %v1371 = vunpack.c.3.s8 %v563
    %v1372 = vunpack.c.3.s8 %v564
    %v1373 = vunpack.c.3.s8 %v565
    %v1374 = vunpack.c.3.s8 %v566
    %v1375 = vunpack.c.3.s8 %v567
    %v1376 = vunpack.c.3.s8 %v568
    %v1377 = vunpack.c.3.s8 %v569
    %v1378 = vunpack.c.0.s8 %v570
    %v1379 = vunpack.c.0.s8 %v571
    %v1380 = vunpack.c.0.s8 %v572
    %v1381 = vunpack.c.0.s8 %v573
    %v1382 = vunpack.c.0.s8 %v574
    %v1383 = vunpack.c.0.s8 %v575
    %v1384 = vunpack.c.0.s8 %v576
    %v1385 = vunpack.c.0.s8 %v577
    %v1386 = vunpack.c.1.s8 %v570
    %v1387 = vunpack.c.1.s8 %v571
    %v1388 = vunpack.c.1.s8 %v572
    %v1389 = vunpack.c.1.s8 %v573
    %v1390 = vunpack.c.1.s8 %v574
    %v1391 = vunpack.c.1.s8 %v575
    %v1392 = vunpack.c.1.s8 %v576
    %v1393 = vunpack.c.1.s8 %v577
    %v1394 = vunpack.c.2.s8 %v570
    %v1395 = vunpack.c.2.s8 %v571
    %v1396 = vunpack.c.2.s8 %v572
    %v1397 = vunpack.c.2.s8 %v573
    %v1398 = vunpack.c.2.s8 %v574
    %v1399 = vunpack.c.2.s8 %v575
    %v1400 = vunpack.c.2.s8 %v576
    %v1401 = vunpack.c.2.s8 %v577
    %v1402 = vunpack.c.3.s8 %v570
    %v1403 = vunpack.c.3.s8 %v571
    %v1404 = vunpack.c.3.s8 %v572
    %v1405 = vunpack.c.3.s8 %v573
    %v1406 = vunpack.c.3.s8 %v574
    %v1407 = vunpack.c.3.s8 %v575
    %v1408 = vunpack.c.3.s8 %v576
    %v1409 = vunpack.c.3.s8 %v577
    %v1410 = vunpack.c.0.s8 %v578
    %v1411 = vunpack.c.0.s8 %v579
    %v1412 = vunpack.c.0.s8 %v580
    %v1413 = vunpack.c.0.s8 %v581
    %v1414 = vunpack.c.0.s8 %v582
    %v1415 = vunpack.c.0.s8 %v583
    %v1416 = vunpack.c.0.s8 %v584
    %v1417 = vunpack.c.0.s8 %v585
    %v1418 = vunpack.c.1.s8 %v578
    %v1419 = vunpack.c.1.s8 %v579
    %v1420 = vunpack.c.1.s8 %v580
    %v1421 = vunpack.c.1.s8 %v581
    %v1422 = vunpack.c.1.s8 %v582
    %v1423 = vunpack.c.1.s8 %v583
    %v1424 = vunpack.c.1.s8 %v584
    %v1425 = vunpack.c.1.s8 %v585
    %v1426 = vunpack.c.2.s8 %v578
    %v1427 = vunpack.c.2.s8 %v579
    %v1428 = vunpack.c.2.s8 %v580
    %v1429 = vunpack.c.2.s8 %v581
    %v1430 = vunpack.c.2.s8 %v582
    %v1431 = vunpack.c.2.s8 %v583
    %v1432 = vunpack.c.2.s8 %v584
    %v1433 = vunpack.c.2.s8 %v585
    %v1434 = vunpack.c.3.s8 %v578
    %v1435 = vunpack.c.3.s8 %v579
    %v1436 = vunpack.c.3.s8 %v580
    %v1437 = vunpack.c.3.s8 %v581
    %v1438 = vunpack.c.3.s8 %v582
    %v1439 = vunpack.c.3.s8 %v583
    %v1440 = vunpack.c.3.s8 %v584
    %v1441 = vunpack.c.3.s8 %v585
    %v1442 = vunpack.c.0.s8 %v586
    %v1443 = vunpack.c.0.s8 %v587
    %v1444 = vunpack.c.0.s8 %v588
    %v1445 = vunpack.c.0.s8 %v589
    %v1446 = vunpack.c.0.s8 %v590
    %v1447 = vunpack.c.0.s8 %v591
    %v1448 = vunpack.c.0.s8 %v592
    %v1449 = vunpack.c.0.s8 %v593
    %v1450 = vunpack.c.1.s8 %v586
    %v1451 = vunpack.c.1.s8 %v587
    %v1452 = vunpack.c.1.s8 %v588
    %v1453 = vunpack.c.1.s8 %v589
    %v1454 = vunpack.c.1.s8 %v590
    %v1455 = vunpack.c.1.s8 %v591
    %v1456 = vunpack.c.1.s8 %v592
    %v1457 = vunpack.c.1.s8 %v593
    %v1458 = vunpack.c.2.s8 %v586
    %v1459 = vunpack.c.2.s8 %v587
    %v1460 = vunpack.c.2.s8 %v588
    %v1461 = vunpack.c.2.s8 %v589
    %v1462 = vunpack.c.2.s8 %v590
    %v1463 = vunpack.c.2.s8 %v591
    %v1464 = vunpack.c.2.s8 %v592
    %v1465 = vunpack.c.2.s8 %v593
    %v1466 = vunpack.c.3.s8 %v586
    %v1467 = vunpack.c.3.s8 %v587
    %v1468 = vunpack.c.3.s8 %v588
    %v1469 = vunpack.c.3.s8 %v589
    %v1470 = vunpack.c.3.s8 %v590
    %v1471 = vunpack.c.3.s8 %v591
    %v1472 = vunpack.c.3.s8 %v592
    %v1473 = vunpack.c.3.s8 %v593
    %v1474 = vunpack.c.0.s8 %v594
    %v1475 = vunpack.c.0.s8 %v595
    %v1476 = vunpack.c.0.s8 %v596
    %v1477 = vunpack.c.0.s8 %v597
    %v1478 = vunpack.c.0.s8 %v598
    %v1479 = vunpack.c.0.s8 %v599
    %v1480 = vunpack.c.0.s8 %v600
    %v1481 = vunpack.c.0.s8 %v601
    %v1482 = vunpack.c.1.s8 %v594
    %v1483 = vunpack.c.1.s8 %v595
    %v1484 = vunpack.c.1.s8 %v596
    %v1485 = vunpack.c.1.s8 %v597
    %v1486 = vunpack.c.1.s8 %v598
    %v1487 = vunpack.c.1.s8 %v599
    %v1488 = vunpack.c.1.s8 %v600
    %v1489 = vunpack.c.1.s8 %v601
    %v1490 = vunpack.c.2.s8 %v594
    %v1491 = vunpack.c.2.s8 %v595
    %v1492 = vunpack.c.2.s8 %v596
    %v1493 = vunpack.c.2.s8 %v597
    %v1494 = vunpack.c.2.s8 %v598
    %v1495 = vunpack.c.2.s8 %v599
    %v1496 = vunpack.c.2.s8 %v600
    %v1497 = vunpack.c.2.s8 %v601
    %v1498 = vunpack.c.3.s8 %v594
    %v1499 = vunpack.c.3.s8 %v595
    %v1500 = vunpack.c.3.s8 %v596
    %v1501 = vunpack.c.3.s8 %v597
    %v1502 = vunpack.c.3.s8 %v598
    %v1503 = vunpack.c.3.s8 %v599
    %v1504 = vunpack.c.3.s8 %v600
    %v1505 = vunpack.c.3.s8 %v601
    %v1506 = vunpack.c.0.s8 %v602
    %v1507 = vunpack.c.0.s8 %v603
    %v1508 = vunpack.c.0.s8 %v604
    %v1509 = vunpack.c.0.s8 %v605
    %v1510 = vunpack.c.0.s8 %v606
    %v1511 = vunpack.c.0.s8 %v607
    %v1512 = vunpack.c.0.s8 %v608
    %v1513 = vunpack.c.0.s8 %v609
    %v1514 = vunpack.c.1.s8 %v602
    %v1515 = vunpack.c.1.s8 %v603
    %v1516 = vunpack.c.1.s8 %v604
    %v1517 = vunpack.c.1.s8 %v605
    %v1518 = vunpack.c.1.s8 %v606
    %v1519 = vunpack.c.1.s8 %v607
    %v1520 = vunpack.c.1.s8 %v608
    %v1521 = vunpack.c.1.s8 %v609
    %v1522 = vunpack.c.2.s8 %v602
    %v1523 = vunpack.c.2.s8 %v603
    %v1524 = vunpack.c.2.s8 %v604
    %v1525 = vunpack.c.2.s8 %v605
    %v1526 = vunpack.c.2.s8 %v606
    %v1527 = vunpack.c.2.s8 %v607
    %v1528 = vunpack.c.2.s8 %v608
    %v1529 = vunpack.c.2.s8 %v609
    %v1530 = vunpack.c.3.s8 %v602
    %v1531 = vunpack.c.3.s8 %v603
    %v1532 = vunpack.c.3.s8 %v604
    %v1533 = vunpack.c.3.s8 %v605
    %v1534 = vunpack.c.3.s8 %v606
    %v1535 = vunpack.c.3.s8 %v607
    %v1536 = vunpack.c.3.s8 %v608
    %v1537 = vunpack.c.3.s8 %v609
    %v1538 = vunpack.c.0.s8 %v610
    %v1539 = vunpack.c.0.s8 %v611
    %v1540 = vunpack.c.0.s8 %v612
    %v1541 = vunpack.c.0.s8 %v613
    %v1542 = vunpack.c.0.s8 %v614
    %v1543 = vunpack.c.0.s8 %v615
    %v1544 = vunpack.c.0.s8 %v616
    %v1545 = vunpack.c.0.s8 %v617
    %v1546 = vunpack.c.1.s8 %v610
    %v1547 = vunpack.c.1.s8 %v611
    %v1548 = vunpack.c.1.s8 %v612
    %v1549 = vunpack.c.1.s8 %v613
    %v1550 = vunpack.c.1.s8 %v614
    %v1551 = vunpack.c.1.s8 %v615
    %v1552 = vunpack.c.1.s8 %v616
    %v1553 = vunpack.c.1.s8 %v617
    %v1554 = vunpack.c.2.s8 %v610
    %v1555 = vunpack.c.2.s8 %v611
    %v1556 = vunpack.c.2.s8 %v612
    %v1557 = vunpack.c.2.s8 %v613
    %v1558 = vunpack.c.2.s8 %v614
    %v1559 = vunpack.c.2.s8 %v615
    %v1560 = vunpack.c.2.s8 %v616
    %v1561 = vunpack.c.2.s8 %v617
    %v1562 = vunpack.c.3.s8 %v610
    %v1563 = vunpack.c.3.s8 %v611
    %v1564 = vunpack.c.3.s8 %v612
    %v1565 = vunpack.c.3.s8 %v613
    %v1566 = vunpack.c.3.s8 %v614
    %v1567 = vunpack.c.3.s8 %v615
    %v1568 = vunpack.c.3.s8 %v616
    %v1569 = vunpack.c.3.s8 %v617
    %v1570 = vunpack.c.0.s8 %v618
    %v1571 = vunpack.c.0.s8 %v619
    %v1572 = vunpack.c.0.s8 %v620
    %v1573 = vunpack.c.0.s8 %v621
    %v1574 = vunpack.c.0.s8 %v622
    %v1575 = vunpack.c.0.s8 %v623
    %v1576 = vunpack.c.0.s8 %v624
    %v1577 = vunpack.c.0.s8 %v625
    %v1578 = vunpack.c.1.s8 %v618
    %v1579 = vunpack.c.1.s8 %v619
    %v1580 = vunpack.c.1.s8 %v620
    %v1581 = vunpack.c.1.s8 %v621
    %v1582 = vunpack.c.1.s8 %v622
    %v1583 = vunpack.c.1.s8 %v623
    %v1584 = vunpack.c.1.s8 %v624
    %v1585 = vunpack.c.1.s8 %v625
    %v1586 = vunpack.c.2.s8 %v618
    %v1587 = vunpack.c.2.s8 %v619
    %v1588 = vunpack.c.2.s8 %v620
    %v1589 = vunpack.c.2.s8 %v621
    %v1590 = vunpack.c.2.s8 %v622
    %v1591 = vunpack.c.2.s8 %v623
    %v1592 = vunpack.c.2.s8 %v624
    %v1593 = vunpack.c.2.s8 %v625
    %v1594 = vunpack.c.3.s8 %v618
    %v1595 = vunpack.c.3.s8 %v619
    %v1596 = vunpack.c.3.s8 %v620
    %v1597 = vunpack.c.3.s8 %v621
    %v1598 = vunpack.c.3.s8 %v622
    %v1599 = vunpack.c.3.s8 %v623
    %v1600 = vunpack.c.3.s8 %v624
    %v1601 = vunpack.c.3.s8 %v625
    %v1602 = vunpack.c.0.s8 %v626
    %v1603 = vunpack.c.0.s8 %v627
    %v1604 = vunpack.c.0.s8 %v628
    %v1605 = vunpack.c.0.s8 %v629
    %v1606 = vunpack.c.0.s8 %v630
    %v1607 = vunpack.c.0.s8 %v631
    %v1608 = vunpack.c.0.s8 %v632
    %v1609 = vunpack.c.0.s8 %v633
    %v1610 = vunpack.c.1.s8 %v626
    %v1611 = vunpack.c.1.s8 %v627
    %v1612 = vunpack.c.1.s8 %v628
    %v1613 = vunpack.c.1.s8 %v629
    %v1614 = vunpack.c.1.s8 %v630
    %v1615 = vunpack.c.1.s8 %v631
    %v1616 = vunpack.c.1.s8 %v632
    %v1617 = vunpack.c.1.s8 %v633
    %v1618 = vunpack.c.2.s8 %v626
    %v1619 = vunpack.c.2.s8 %v627
    %v1620 = vunpack.c.2.s8 %v628
    %v1621 = vunpack.c.2.s8 %v629
    %v1622 = vunpack.c.2.s8 %v630
    %v1623 = vunpack.c.2.s8 %v631
    %v1624 = vunpack.c.2.s8 %v632
    %v1625 = vunpack.c.2.s8 %v633
    %v1626 = vunpack.c.3.s8 %v626
    %v1627 = vunpack.c.3.s8 %v627
    %v1628 = vunpack.c.3.s8 %v628
    %v1629 = vunpack.c.3.s8 %v629
    %v1630 = vunpack.c.3.s8 %v630
    %v1631 = vunpack.c.3.s8 %v631
    %v1632 = vunpack.c.3.s8 %v632
    %v1633 = vunpack.c.3.s8 %v633
    %v1634 = vunpack.c.0.s8 %v634
    %v1635 = vunpack.c.0.s8 %v635
    %v1636 = vunpack.c.0.s8 %v636
    %v1637 = vunpack.c.0.s8 %v637
    %v1638 = vunpack.c.0.s8 %v638
    %v1639 = vunpack.c.0.s8 %v639
    %v1640 = vunpack.c.0.s8 %v640
    %v1641 = vunpack.c.0.s8 %v641
    %v1642 = vunpack.c.1.s8 %v634
    %v1643 = vunpack.c.1.s8 %v635
    %v1644 = vunpack.c.1.s8 %v636
    %v1645 = vunpack.c.1.s8 %v637
    %v1646 = vunpack.c.1.s8 %v638
    %v1647 = vunpack.c.1.s8 %v639
    %v1648 = vunpack.c.1.s8 %v640
    %v1649 = vunpack.c.1.s8 %v641
    %v1650 = vunpack.c.2.s8 %v634
    %v1651 = vunpack.c.2.s8 %v635
    %v1652 = vunpack.c.2.s8 %v636
    %v1653 = vunpack.c.2.s8 %v637
    %v1654 = vunpack.c.2.s8 %v638
    %v1655 = vunpack.c.2.s8 %v639
    %v1656 = vunpack.c.2.s8 %v640
    %v1657 = vunpack.c.2.s8 %v641
    %v1658 = vunpack.c.3.s8 %v634
    %v1659 = vunpack.c.3.s8 %v635
    %v1660 = vunpack.c.3.s8 %v636
    %v1661 = vunpack.c.3.s8 %v637
    %v1662 = vunpack.c.3.s8 %v638
    %v1663 = vunpack.c.3.s8 %v639
    %v1664 = vunpack.c.3.s8 %v640
    %v1665 = vunpack.c.3.s8 %v641
    %v1666 = vcvt.s32.f32 %v642
    %v1667 = vcvt.s32.f32 %v643
    %v1668 = vcvt.s32.f32 %v644
    %v1669 = vcvt.s32.f32 %v645
    %v1670 = vcvt.s32.f32 %v646
    %v1671 = vcvt.s32.f32 %v647
    %v1672 = vcvt.s32.f32 %v648
    %v1673 = vcvt.s32.f32 %v649
    %v1674 = vcvt.s32.f32 %v650
    %v1675 = vcvt.s32.f32 %v651
    %v1676 = vcvt.s32.f32 %v652
    %v1677 = vcvt.s32.f32 %v653
    %v1678 = vcvt.s32.f32 %v654
    %v1679 = vcvt.s32.f32 %v655
    %v1680 = vcvt.s32.f32 %v656
    %v1681 = vcvt.s32.f32 %v657
    %v1682 = vcvt.s32.f32 %v658
    %v1683 = vcvt.s32.f32 %v659
    %v1684 = vcvt.s32.f32 %v660
    %v1685 = vcvt.s32.f32 %v661
    %v1686 = vcvt.s32.f32 %v662
    %v1687 = vcvt.s32.f32 %v663
    %v1688 = vcvt.s32.f32 %v664
    %v1689 = vcvt.s32.f32 %v665
    %v1690 = vcvt.s32.f32 %v666
    %v1691 = vcvt.s32.f32 %v667
    %v1692 = vcvt.s32.f32 %v668
    %v1693 = vcvt.s32.f32 %v669
    %v1694 = vcvt.s32.f32 %v670
    %v1695 = vcvt.s32.f32 %v671
    %v1696 = vcvt.s32.f32 %v672
    %v1697 = vcvt.s32.f32 %v673
    %v1698 = vcvt.s32.f32 %v674
    %v1699 = vcvt.s32.f32 %v675
    %v1700 = vcvt.s32.f32 %v676
    %v1701 = vcvt.s32.f32 %v677
    %v1702 = vcvt.s32.f32 %v678
    %v1703 = vcvt.s32.f32 %v679
    %v1704 = vcvt.s32.f32 %v680
    %v1705 = vcvt.s32.f32 %v681
    %v1706 = vcvt.s32.f32 %v682
    %v1707 = vcvt.s32.f32 %v683
    %v1708 = vcvt.s32.f32 %v684
    %v1709 = vcvt.s32.f32 %v685
    %v1710 = vcvt.s32.f32 %v686
    %v1711 = vcvt.s32.f32 %v687
    %v1712 = vcvt.s32.f32 %v688
    %v1713 = vcvt.s32.f32 %v689
    %v1714 = vcvt.s32.f32 %v690
    %v1715 = vcvt.s32.f32 %v691
    %v1716 = vcvt.s32.f32 %v692
    %v1717 = vcvt.s32.f32 %v693
    %v1718 = vcvt.s32.f32 %v694
    %v1719 = vcvt.s32.f32 %v695
    %v1720 = vcvt.s32.f32 %v696
    %v1721 = vcvt.s32.f32 %v697
    %v1722 = vcvt.s32.f32 %v698
    %v1723 = vcvt.s32.f32 %v699
    %v1724 = vcvt.s32.f32 %v700
    %v1725 = vcvt.s32.f32 %v701
    %v1726 = vcvt.s32.f32 %v702
    %v1727 = vcvt.s32.f32 %v703
    %v1728 = vcvt.s32.f32 %v704
    %v1729 = vcvt.s32.f32 %v705
    %v1730 = vcvt.s32.f32 %v706
    %v1731 = vcvt.s32.f32 %v707
    %v1732 = vcvt.s32.f32 %v708
    %v1733 = vcvt.s32.f32 %v709
    %v1734 = vcvt.s32.f32 %v710
    %v1735 = vcvt.s32.f32 %v711
    %v1736 = vcvt.s32.f32 %v712
    %v1737 = vcvt.s32.f32 %v713
    %v1738 = vcvt.s32.f32 %v714
    %v1739 = vcvt.s32.f32 %v715
    %v1740 = vcvt.s32.f32 %v716
    %v1741 = vcvt.s32.f32 %v717
    %v1742 = vcvt.s32.f32 %v718
    %v1743 = vcvt.s32.f32 %v719
    %v1744 = vcvt.s32.f32 %v720
    %v1745 = vcvt.s32.f32 %v721
    %v1746 = vcvt.s32.f32 %v722
    %v1747 = vcvt.s32.f32 %v723
    %v1748 = vcvt.s32.f32 %v724
    %v1749 = vcvt.s32.f32 %v725
    %v1750 = vcvt.s32.f32 %v726
    %v1751 = vcvt.s32.f32 %v727
    %v1752 = vcvt.s32.f32 %v728
    %v1753 = vcvt.s32.f32 %v729
    %v1754 = vcvt.s32.f32 %v730
    %v1755 = vcvt.s32.f32 %v731
    %v1756 = vcvt.s32.f32 %v732
    %v1757 = vcvt.s32.f32 %v733
    %v1758 = vcvt.s32.f32 %v734
    %v1759 = vcvt.s32.f32 %v735
    %v1760 = vcvt.s32.f32 %v736
    %v1761 = vcvt.s32.f32 %v737
    %v1762 = vcvt.s32.f32 %v738
    %v1763 = vcvt.s32.f32 %v739
    %v1764 = vcvt.s32.f32 %v740
    %v1765 = vcvt.s32.f32 %v741
    %v1766 = vcvt.s32.f32 %v742
    %v1767 = vcvt.s32.f32 %v743
    %v1768 = vcvt.s32.f32 %v744
    %v1769 = vcvt.s32.f32 %v745
    %v1770 = vcvt.s32.f32 %v746
    %v1771 = vcvt.s32.f32 %v747
    %v1772 = vcvt.s32.f32 %v748
    %v1773 = vcvt.s32.f32 %v749
    %v1774 = vcvt.s32.f32 %v750
    %v1775 = vcvt.s32.f32 %v751
    %v1776 = vcvt.s32.f32 %v752
    %v1777 = vcvt.s32.f32 %v753
    %v1778 = vcvt.s32.f32 %v754
    %v1779 = vcvt.s32.f32 %v755
    %v1780 = vcvt.s32.f32 %v756
    %v1781 = vcvt.s32.f32 %v757
    %v1782 = vcvt.s32.f32 %v758
    %v1783 = vcvt.s32.f32 %v759
    %v1784 = vcvt.s32.f32 %v760
    %v1785 = vcvt.s32.f32 %v761
    %v1786 = vcvt.s32.f32 %v762
    %v1787 = vcvt.s32.f32 %v763
    %v1788 = vcvt.s32.f32 %v764
    %v1789 = vcvt.s32.f32 %v765
    %v1790 = vcvt.s32.f32 %v766
    %v1791 = vcvt.s32.f32 %v767
    %v1792 = vcvt.s32.f32 %v768
    %v1793 = vcvt.s32.f32 %v769
    %v1794 = vcvt.s32.f32 %v770
    %v1795 = vcvt.s32.f32 %v771
    %v1796 = vcvt.s32.f32 %v772
    %v1797 = vcvt.s32.f32 %v773
    %v1798 = vcvt.s32.f32 %v774
    %v1799 = vcvt.s32.f32 %v775
    %v1800 = vcvt.s32.f32 %v776
    %v1801 = vcvt.s32.f32 %v777
    %v1802 = vcvt.s32.f32 %v778
    %v1803 = vcvt.s32.f32 %v779
    %v1804 = vcvt.s32.f32 %v780
    %v1805 = vcvt.s32.f32 %v781
    %v1806 = vcvt.s32.f32 %v782
    %v1807 = vcvt.s32.f32 %v783
    %v1808 = vcvt.s32.f32 %v784
    %v1809 = vcvt.s32.f32 %v785
    %v1810 = vcvt.s32.f32 %v786
    %v1811 = vcvt.s32.f32 %v787
    %v1812 = vcvt.s32.f32 %v788
    %v1813 = vcvt.s32.f32 %v789
    %v1814 = vcvt.s32.f32 %v790
    %v1815 = vcvt.s32.f32 %v791
    %v1816 = vcvt.s32.f32 %v792
    %v1817 = vcvt.s32.f32 %v793
    %v1818 = vcvt.s32.f32 %v794
    %v1819 = vcvt.s32.f32 %v795
    %v1820 = vcvt.s32.f32 %v796
    %v1821 = vcvt.s32.f32 %v797
    %v1822 = vcvt.s32.f32 %v798
    %v1823 = vcvt.s32.f32 %v799
    %v1824 = vcvt.s32.f32 %v800
    %v1825 = vcvt.s32.f32 %v801
    %v1826 = vcvt.s32.f32 %v802
    %v1827 = vcvt.s32.f32 %v803
    %v1828 = vcvt.s32.f32 %v804
    %v1829 = vcvt.s32.f32 %v805
    %v1830 = vcvt.s32.f32 %v806
    %v1831 = vcvt.s32.f32 %v807
    %v1832 = vcvt.s32.f32 %v808
    %v1833 = vcvt.s32.f32 %v809
    %v1834 = vcvt.s32.f32 %v810
    %v1835 = vcvt.s32.f32 %v811
    %v1836 = vcvt.s32.f32 %v812
    %v1837 = vcvt.s32.f32 %v813
    %v1838 = vcvt.s32.f32 %v814
    %v1839 = vcvt.s32.f32 %v815
    %v1840 = vcvt.s32.f32 %v816
    %v1841 = vcvt.s32.f32 %v817
    %v1842 = vcvt.s32.f32 %v818
    %v1843 = vcvt.s32.f32 %v819
    %v1844 = vcvt.s32.f32 %v820
    %v1845 = vcvt.s32.f32 %v821
    %v1846 = vcvt.s32.f32 %v822
    %v1847 = vcvt.s32.f32 %v823
    %v1848 = vcvt.s32.f32 %v824
    %v1849 = vcvt.s32.f32 %v825
    %v1850 = vcvt.s32.f32 %v826
    %v1851 = vcvt.s32.f32 %v827
    %v1852 = vcvt.s32.f32 %v828
    %v1853 = vcvt.s32.f32 %v829
    %v1854 = vcvt.s32.f32 %v830
    %v1855 = vcvt.s32.f32 %v831
    %v1856 = vcvt.s32.f32 %v832
    %v1857 = vcvt.s32.f32 %v833
    %v1858 = vcvt.s32.f32 %v834
    %v1859 = vcvt.s32.f32 %v835
    %v1860 = vcvt.s32.f32 %v836
    %v1861 = vcvt.s32.f32 %v837
    %v1862 = vcvt.s32.f32 %v838
    %v1863 = vcvt.s32.f32 %v839
    %v1864 = vcvt.s32.f32 %v840
    %v1865 = vcvt.s32.f32 %v841
    %v1866 = vcvt.s32.f32 %v842
    %v1867 = vcvt.s32.f32 %v843
    %v1868 = vcvt.s32.f32 %v844
    %v1869 = vcvt.s32.f32 %v845
    %v1870 = vcvt.s32.f32 %v846
    %v1871 = vcvt.s32.f32 %v847
    %v1872 = vcvt.s32.f32 %v848
    %v1873 = vcvt.s32.f32 %v849
    %v1874 = vcvt.s32.f32 %v850
    %v1875 = vcvt.s32.f32 %v851
    %v1876 = vcvt.s32.f32 %v852
    %v1877 = vcvt.s32.f32 %v853
    %v1878 = vcvt.s32.f32 %v854
    %v1879 = vcvt.s32.f32 %v855
    %v1880 = vcvt.s32.f32 %v856
    %v1881 = vcvt.s32.f32 %v857
    %v1882 = vcvt.s32.f32 %v858
    %v1883 = vcvt.s32.f32 %v859
    %v1884 = vcvt.s32.f32 %v860
    %v1885 = vcvt.s32.f32 %v861
    %v1886 = vcvt.s32.f32 %v862
    %v1887 = vcvt.s32.f32 %v863
    %v1888 = vcvt.s32.f32 %v864
    %v1889 = vcvt.s32.f32 %v865
    %v1890 = vcvt.s32.f32 %v866
    %v1891 = vcvt.s32.f32 %v867
    %v1892 = vcvt.s32.f32 %v868
    %v1893 = vcvt.s32.f32 %v869
    %v1894 = vcvt.s32.f32 %v870
    %v1895 = vcvt.s32.f32 %v871
    %v1896 = vcvt.s32.f32 %v872
    %v1897 = vcvt.s32.f32 %v873
    %v1898 = vcvt.s32.f32 %v874
    %v1899 = vcvt.s32.f32 %v875
    %v1900 = vcvt.s32.f32 %v876
    %v1901 = vcvt.s32.f32 %v877
    %v1902 = vcvt.s32.f32 %v878
    %v1903 = vcvt.s32.f32 %v879
    %v1904 = vcvt.s32.f32 %v880
    %v1905 = vcvt.s32.f32 %v881
    %v1906 = vcvt.s32.f32 %v882
    %v1907 = vcvt.s32.f32 %v883
    %v1908 = vcvt.s32.f32 %v884
    %v1909 = vcvt.s32.f32 %v885
    %v1910 = vcvt.s32.f32 %v886
    %v1911 = vcvt.s32.f32 %v887
    %v1912 = vcvt.s32.f32 %v888
    %v1913 = vcvt.s32.f32 %v889
    %v1914 = vcvt.s32.f32 %v890
    %v1915 = vcvt.s32.f32 %v891
    %v1916 = vcvt.s32.f32 %v892
    %v1917 = vcvt.s32.f32 %v893
    %v1918 = vcvt.s32.f32 %v894
    %v1919 = vcvt.s32.f32 %v895
    %v1920 = vcvt.s32.f32 %v896
    %v1921 = vcvt.s32.f32 %v897
    %v1922 = vcvt.s32.f32 %v898
    %v1923 = vcvt.s32.f32 %v899
    %v1924 = vcvt.s32.f32 %v900
    %v1925 = vcvt.s32.f32 %v901
    %v1926 = vcvt.s32.f32 %v902
    %v1927 = vcvt.s32.f32 %v903
    %v1928 = vcvt.s32.f32 %v904
    %v1929 = vcvt.s32.f32 %v905
    %v1930 = vcvt.s32.f32 %v906
    %v1931 = vcvt.s32.f32 %v907
    %v1932 = vcvt.s32.f32 %v908
    %v1933 = vcvt.s32.f32 %v909
    %v1934 = vcvt.s32.f32 %v910
    %v1935 = vcvt.s32.f32 %v911
    %v1936 = vcvt.s32.f32 %v912
    %v1937 = vcvt.s32.f32 %v913
    %v1938 = vcvt.s32.f32 %v914
    %v1939 = vcvt.s32.f32 %v915
    %v1940 = vcvt.s32.f32 %v916
    %v1941 = vcvt.s32.f32 %v917
    %v1942 = vcvt.s32.f32 %v918
    %v1943 = vcvt.s32.f32 %v919
    %v1944 = vcvt.s32.f32 %v920
    %v1945 = vcvt.s32.f32 %v921
    %v1946 = vcvt.s32.f32 %v922
    %v1947 = vcvt.s32.f32 %v923
    %v1948 = vcvt.s32.f32 %v924
    %v1949 = vcvt.s32.f32 %v925
    %v1950 = vcvt.s32.f32 %v926
    %v1951 = vcvt.s32.f32 %v927
    %v1952 = vcvt.s32.f32 %v928
    %v1953 = vcvt.s32.f32 %v929
    %v1954 = vcvt.s32.f32 %v930
    %v1955 = vcvt.s32.f32 %v931
    %v1956 = vcvt.s32.f32 %v932
    %v1957 = vcvt.s32.f32 %v933
    %v1958 = vcvt.s32.f32 %v934
    %v1959 = vcvt.s32.f32 %v935
    %v1960 = vcvt.s32.f32 %v936
    %v1961 = vcvt.s32.f32 %v937
    %v1962 = vcvt.s32.f32 %v938
    %v1963 = vcvt.s32.f32 %v939
    %v1964 = vcvt.s32.f32 %v940
    %v1965 = vcvt.s32.f32 %v941
    %v1966 = vcvt.s32.f32 %v942
    %v1967 = vcvt.s32.f32 %v943
    %v1968 = vcvt.s32.f32 %v944
    %v1969 = vcvt.s32.f32 %v945
    %v1970 = vcvt.s32.f32 %v946
    %v1971 = vcvt.s32.f32 %v947
    %v1972 = vcvt.s32.f32 %v948
    %v1973 = vcvt.s32.f32 %v949
    %v1974 = vcvt.s32.f32 %v950
    %v1975 = vcvt.s32.f32 %v951
    %v1976 = vcvt.s32.f32 %v952
    %v1977 = vcvt.s32.f32 %v953
    %v1978 = vcvt.s32.f32 %v954
    %v1979 = vcvt.s32.f32 %v955
    %v1980 = vcvt.s32.f32 %v956
    %v1981 = vcvt.s32.f32 %v957
    %v1982 = vcvt.s32.f32 %v958
    %v1983 = vcvt.s32.f32 %v959
    %v1984 = vcvt.s32.f32 %v960
    %v1985 = vcvt.s32.f32 %v961
    %v1986 = vcvt.s32.f32 %v962
    %v1987 = vcvt.s32.f32 %v963
    %v1988 = vcvt.s32.f32 %v964
    %v1989 = vcvt.s32.f32 %v965
    %v1990 = vcvt.s32.f32 %v966
    %v1991 = vcvt.s32.f32 %v967
    %v1992 = vcvt.s32.f32 %v968
    %v1993 = vcvt.s32.f32 %v969
    %v1994 = vcvt.s32.f32 %v970
    %v1995 = vcvt.s32.f32 %v971
    %v1996 = vcvt.s32.f32 %v972
    %v1997 = vcvt.s32.f32 %v973
    %v1998 = vcvt.s32.f32 %v974
    %v1999 = vcvt.s32.f32 %v975
    %v2000 = vcvt.s32.f32 %v976
    %v2001 = vcvt.s32.f32 %v977
    %v2002 = vcvt.s32.f32 %v978
    %v2003 = vcvt.s32.f32 %v979
    %v2004 = vcvt.s32.f32 %v980
    %v2005 = vcvt.s32.f32 %v981
    %v2006 = vcvt.s32.f32 %v982
    %v2007 = vcvt.s32.f32 %v983
    %v2008 = vcvt.s32.f32 %v984
    %v2009 = vcvt.s32.f32 %v985
    %v2010 = vcvt.s32.f32 %v986
    %v2011 = vcvt.s32.f32 %v987
    %v2012 = vcvt.s32.f32 %v988
    %v2013 = vcvt.s32.f32 %v989
    %v2014 = vcvt.s32.f32 %v990
    %v2015 = vcvt.s32.f32 %v991
    %v2016 = vcvt.s32.f32 %v992
    %v2017 = vcvt.s32.f32 %v993
    %v2018 = vcvt.s32.f32 %v994
    %v2019 = vcvt.s32.f32 %v995
    %v2020 = vcvt.s32.f32 %v996
    %v2021 = vcvt.s32.f32 %v997
    %v2022 = vcvt.s32.f32 %v998
    %v2023 = vcvt.s32.f32 %v999
    %v2024 = vcvt.s32.f32 %v1000
    %v2025 = vcvt.s32.f32 %v1001
    %v2026 = vcvt.s32.f32 %v1002
    %v2027 = vcvt.s32.f32 %v1003
    %v2028 = vcvt.s32.f32 %v1004
    %v2029 = vcvt.s32.f32 %v1005
    %v2030 = vcvt.s32.f32 %v1006
    %v2031 = vcvt.s32.f32 %v1007
    %v2032 = vcvt.s32.f32 %v1008
    %v2033 = vcvt.s32.f32 %v1009
    %v2034 = vcvt.s32.f32 %v1010
    %v2035 = vcvt.s32.f32 %v1011
    %v2036 = vcvt.s32.f32 %v1012
    %v2037 = vcvt.s32.f32 %v1013
    %v2038 = vcvt.s32.f32 %v1014
    %v2039 = vcvt.s32.f32 %v1015
    %v2040 = vcvt.s32.f32 %v1016
    %v2041 = vcvt.s32.f32 %v1017
    %v2042 = vcvt.s32.f32 %v1018
    %v2043 = vcvt.s32.f32 %v1019
    %v2044 = vcvt.s32.f32 %v1020
    %v2045 = vcvt.s32.f32 %v1021
    %v2046 = vcvt.s32.f32 %v1022
    %v2047 = vcvt.s32.f32 %v1023
    %v2048 = vcvt.s32.f32 %v1024
    %v2049 = vcvt.s32.f32 %v1025
    %v2050 = vcvt.s32.f32 %v1026
    %v2051 = vcvt.s32.f32 %v1027
    %v2052 = vcvt.s32.f32 %v1028
    %v2053 = vcvt.s32.f32 %v1029
    %v2054 = vcvt.s32.f32 %v1030
    %v2055 = vcvt.s32.f32 %v1031
    %v2056 = vcvt.s32.f32 %v1032
    %v2057 = vcvt.s32.f32 %v1033
    %v2058 = vcvt.s32.f32 %v1034
    %v2059 = vcvt.s32.f32 %v1035
    %v2060 = vcvt.s32.f32 %v1036
    %v2061 = vcvt.s32.f32 %v1037
    %v2062 = vcvt.s32.f32 %v1038
    %v2063 = vcvt.s32.f32 %v1039
    %v2064 = vcvt.s32.f32 %v1040
    %v2065 = vcvt.s32.f32 %v1041
    %v2066 = vcvt.s32.f32 %v1042
    %v2067 = vcvt.s32.f32 %v1043
    %v2068 = vcvt.s32.f32 %v1044
    %v2069 = vcvt.s32.f32 %v1045
    %v2070 = vcvt.s32.f32 %v1046
    %v2071 = vcvt.s32.f32 %v1047
    %v2072 = vcvt.s32.f32 %v1048
    %v2073 = vcvt.s32.f32 %v1049
    %v2074 = vcvt.s32.f32 %v1050
    %v2075 = vcvt.s32.f32 %v1051
    %v2076 = vcvt.s32.f32 %v1052
    %v2077 = vcvt.s32.f32 %v1053
    %v2078 = vcvt.s32.f32 %v1054
    %v2079 = vcvt.s32.f32 %v1055
    %v2080 = vcvt.s32.f32 %v1056
    %v2081 = vcvt.s32.f32 %v1057
    %v2082 = vcvt.s32.f32 %v1058
    %v2083 = vcvt.s32.f32 %v1059
    %v2084 = vcvt.s32.f32 %v1060
    %v2085 = vcvt.s32.f32 %v1061
    %v2086 = vcvt.s32.f32 %v1062
    %v2087 = vcvt.s32.f32 %v1063
    %v2088 = vcvt.s32.f32 %v1064
    %v2089 = vcvt.s32.f32 %v1065
    %v2090 = vcvt.s32.f32 %v1066
    %v2091 = vcvt.s32.f32 %v1067
    %v2092 = vcvt.s32.f32 %v1068
    %v2093 = vcvt.s32.f32 %v1069
    %v2094 = vcvt.s32.f32 %v1070
    %v2095 = vcvt.s32.f32 %v1071
    %v2096 = vcvt.s32.f32 %v1072
    %v2097 = vcvt.s32.f32 %v1073
    %v2098 = vcvt.s32.f32 %v1074
    %v2099 = vcvt.s32.f32 %v1075
    %v2100 = vcvt.s32.f32 %v1076
    %v2101 = vcvt.s32.f32 %v1077
    %v2102 = vcvt.s32.f32 %v1078
    %v2103 = vcvt.s32.f32 %v1079
    %v2104 = vcvt.s32.f32 %v1080
    %v2105 = vcvt.s32.f32 %v1081
    %v2106 = vcvt.s32.f32 %v1082
    %v2107 = vcvt.s32.f32 %v1083
    %v2108 = vcvt.s32.f32 %v1084
    %v2109 = vcvt.s32.f32 %v1085
    %v2110 = vcvt.s32.f32 %v1086
    %v2111 = vcvt.s32.f32 %v1087
    %v2112 = vcvt.s32.f32 %v1088
    %v2113 = vcvt.s32.f32 %v1089
    %v2114 = vcvt.s32.f32 %v1090
    %v2115 = vcvt.s32.f32 %v1091
    %v2116 = vcvt.s32.f32 %v1092
    %v2117 = vcvt.s32.f32 %v1093
    %v2118 = vcvt.s32.f32 %v1094
    %v2119 = vcvt.s32.f32 %v1095
    %v2120 = vcvt.s32.f32 %v1096
    %v2121 = vcvt.s32.f32 %v1097
    %v2122 = vcvt.s32.f32 %v1098
    %v2123 = vcvt.s32.f32 %v1099
    %v2124 = vcvt.s32.f32 %v1100
    %v2125 = vcvt.s32.f32 %v1101
    %v2126 = vcvt.s32.f32 %v1102
    %v2127 = vcvt.s32.f32 %v1103
    %v2128 = vcvt.s32.f32 %v1104
    %v2129 = vcvt.s32.f32 %v1105
    %v2130 = vcvt.s32.f32 %v1106
    %v2131 = vcvt.s32.f32 %v1107
    %v2132 = vcvt.s32.f32 %v1108
    %v2133 = vcvt.s32.f32 %v1109
    %v2134 = vcvt.s32.f32 %v1110
    %v2135 = vcvt.s32.f32 %v1111
    %v2136 = vcvt.s32.f32 %v1112
    %v2137 = vcvt.s32.f32 %v1113
    %v2138 = vcvt.s32.f32 %v1114
    %v2139 = vcvt.s32.f32 %v1115
    %v2140 = vcvt.s32.f32 %v1116
    %v2141 = vcvt.s32.f32 %v1117
    %v2142 = vcvt.s32.f32 %v1118
    %v2143 = vcvt.s32.f32 %v1119
    %v2144 = vcvt.s32.f32 %v1120
    %v2145 = vcvt.s32.f32 %v1121
    %v2146 = vcvt.s32.f32 %v1122
    %v2147 = vcvt.s32.f32 %v1123
    %v2148 = vcvt.s32.f32 %v1124
    %v2149 = vcvt.s32.f32 %v1125
    %v2150 = vcvt.s32.f32 %v1126
    %v2151 = vcvt.s32.f32 %v1127
    %v2152 = vcvt.s32.f32 %v1128
    %v2153 = vcvt.s32.f32 %v1129
    %v2154 = vcvt.s32.f32 %v1130
    %v2155 = vcvt.s32.f32 %v1131
    %v2156 = vcvt.s32.f32 %v1132
    %v2157 = vcvt.s32.f32 %v1133
    %v2158 = vcvt.s32.f32 %v1134
    %v2159 = vcvt.s32.f32 %v1135
    %v2160 = vcvt.s32.f32 %v1136
    %v2161 = vcvt.s32.f32 %v1137
    %v2162 = vcvt.s32.f32 %v1138
    %v2163 = vcvt.s32.f32 %v1139
    %v2164 = vcvt.s32.f32 %v1140
    %v2165 = vcvt.s32.f32 %v1141
    %v2166 = vcvt.s32.f32 %v1142
    %v2167 = vcvt.s32.f32 %v1143
    %v2168 = vcvt.s32.f32 %v1144
    %v2169 = vcvt.s32.f32 %v1145
    %v2170 = vcvt.s32.f32 %v1146
    %v2171 = vcvt.s32.f32 %v1147
    %v2172 = vcvt.s32.f32 %v1148
    %v2173 = vcvt.s32.f32 %v1149
    %v2174 = vcvt.s32.f32 %v1150
    %v2175 = vcvt.s32.f32 %v1151
    %v2176 = vcvt.s32.f32 %v1152
    %v2177 = vcvt.s32.f32 %v1153
    %v2178 = vcvt.s32.f32 %v1154
    %v2179 = vcvt.s32.f32 %v1155
    %v2180 = vcvt.s32.f32 %v1156
    %v2181 = vcvt.s32.f32 %v1157
    %v2182 = vcvt.s32.f32 %v1158
    %v2183 = vcvt.s32.f32 %v1159
    %v2184 = vcvt.s32.f32 %v1160
    %v2185 = vcvt.s32.f32 %v1161
    %v2186 = vcvt.s32.f32 %v1162
    %v2187 = vcvt.s32.f32 %v1163
    %v2188 = vcvt.s32.f32 %v1164
    %v2189 = vcvt.s32.f32 %v1165
    %v2190 = vcvt.s32.f32 %v1166
    %v2191 = vcvt.s32.f32 %v1167
    %v2192 = vcvt.s32.f32 %v1168
    %v2193 = vcvt.s32.f32 %v1169
    %v2194 = vcvt.s32.f32 %v1170
    %v2195 = vcvt.s32.f32 %v1171
    %v2196 = vcvt.s32.f32 %v1172
    %v2197 = vcvt.s32.f32 %v1173
    %v2198 = vcvt.s32.f32 %v1174
    %v2199 = vcvt.s32.f32 %v1175
    %v2200 = vcvt.s32.f32 %v1176
    %v2201 = vcvt.s32.f32 %v1177
    %v2202 = vcvt.s32.f32 %v1178
    %v2203 = vcvt.s32.f32 %v1179
    %v2204 = vcvt.s32.f32 %v1180
    %v2205 = vcvt.s32.f32 %v1181
    %v2206 = vcvt.s32.f32 %v1182
    %v2207 = vcvt.s32.f32 %v1183
    %v2208 = vcvt.s32.f32 %v1184
    %v2209 = vcvt.s32.f32 %v1185
    %v2210 = vcvt.s32.f32 %v1186
    %v2211 = vcvt.s32.f32 %v1187
    %v2212 = vcvt.s32.f32 %v1188
    %v2213 = vcvt.s32.f32 %v1189
    %v2214 = vcvt.s32.f32 %v1190
    %v2215 = vcvt.s32.f32 %v1191
    %v2216 = vcvt.s32.f32 %v1192
    %v2217 = vcvt.s32.f32 %v1193
    %v2218 = vcvt.s32.f32 %v1194
    %v2219 = vcvt.s32.f32 %v1195
    %v2220 = vcvt.s32.f32 %v1196
    %v2221 = vcvt.s32.f32 %v1197
    %v2222 = vcvt.s32.f32 %v1198
    %v2223 = vcvt.s32.f32 %v1199
    %v2224 = vcvt.s32.f32 %v1200
    %v2225 = vcvt.s32.f32 %v1201
    %v2226 = vcvt.s32.f32 %v1202
    %v2227 = vcvt.s32.f32 %v1203
    %v2228 = vcvt.s32.f32 %v1204
    %v2229 = vcvt.s32.f32 %v1205
    %v2230 = vcvt.s32.f32 %v1206
    %v2231 = vcvt.s32.f32 %v1207
    %v2232 = vcvt.s32.f32 %v1208
    %v2233 = vcvt.s32.f32 %v1209
    %v2234 = vcvt.s32.f32 %v1210
    %v2235 = vcvt.s32.f32 %v1211
    %v2236 = vcvt.s32.f32 %v1212
    %v2237 = vcvt.s32.f32 %v1213
    %v2238 = vcvt.s32.f32 %v1214
    %v2239 = vcvt.s32.f32 %v1215
    %v2240 = vcvt.s32.f32 %v1216
    %v2241 = vcvt.s32.f32 %v1217
    %v2242 = vcvt.s32.f32 %v1218
    %v2243 = vcvt.s32.f32 %v1219
    %v2244 = vcvt.s32.f32 %v1220
    %v2245 = vcvt.s32.f32 %v1221
    %v2246 = vcvt.s32.f32 %v1222
    %v2247 = vcvt.s32.f32 %v1223
    %v2248 = vcvt.s32.f32 %v1224
    %v2249 = vcvt.s32.f32 %v1225
    %v2250 = vcvt.s32.f32 %v1226
    %v2251 = vcvt.s32.f32 %v1227
    %v2252 = vcvt.s32.f32 %v1228
    %v2253 = vcvt.s32.f32 %v1229
    %v2254 = vcvt.s32.f32 %v1230
    %v2255 = vcvt.s32.f32 %v1231
    %v2256 = vcvt.s32.f32 %v1232
    %v2257 = vcvt.s32.f32 %v1233
    %v2258 = vcvt.s32.f32 %v1234
    %v2259 = vcvt.s32.f32 %v1235
    %v2260 = vcvt.s32.f32 %v1236
    %v2261 = vcvt.s32.f32 %v1237
    %v2262 = vcvt.s32.f32 %v1238
    %v2263 = vcvt.s32.f32 %v1239
    %v2264 = vcvt.s32.f32 %v1240
    %v2265 = vcvt.s32.f32 %v1241
    %v2266 = vcvt.s32.f32 %v1242
    %v2267 = vcvt.s32.f32 %v1243
    %v2268 = vcvt.s32.f32 %v1244
    %v2269 = vcvt.s32.f32 %v1245
    %v2270 = vcvt.s32.f32 %v1246
    %v2271 = vcvt.s32.f32 %v1247
    %v2272 = vcvt.s32.f32 %v1248
    %v2273 = vcvt.s32.f32 %v1249
    %v2274 = vcvt.s32.f32 %v1250
    %v2275 = vcvt.s32.f32 %v1251
    %v2276 = vcvt.s32.f32 %v1252
    %v2277 = vcvt.s32.f32 %v1253
    %v2278 = vcvt.s32.f32 %v1254
    %v2279 = vcvt.s32.f32 %v1255
    %v2280 = vcvt.s32.f32 %v1256
    %v2281 = vcvt.s32.f32 %v1257
    %v2282 = vcvt.s32.f32 %v1258
    %v2283 = vcvt.s32.f32 %v1259
    %v2284 = vcvt.s32.f32 %v1260
    %v2285 = vcvt.s32.f32 %v1261
    %v2286 = vcvt.s32.f32 %v1262
    %v2287 = vcvt.s32.f32 %v1263
    %v2288 = vcvt.s32.f32 %v1264
    %v2289 = vcvt.s32.f32 %v1265
    %v2290 = vcvt.s32.f32 %v1266
    %v2291 = vcvt.s32.f32 %v1267
    %v2292 = vcvt.s32.f32 %v1268
    %v2293 = vcvt.s32.f32 %v1269
    %v2294 = vcvt.s32.f32 %v1270
    %v2295 = vcvt.s32.f32 %v1271
    %v2296 = vcvt.s32.f32 %v1272
    %v2297 = vcvt.s32.f32 %v1273
    %v2298 = vcvt.s32.f32 %v1274
    %v2299 = vcvt.s32.f32 %v1275
    %v2300 = vcvt.s32.f32 %v1276
    %v2301 = vcvt.s32.f32 %v1277
    %v2302 = vcvt.s32.f32 %v1278
    %v2303 = vcvt.s32.f32 %v1279
    %v2304 = vcvt.s32.f32 %v1280
    %v2305 = vcvt.s32.f32 %v1281
    %v2306 = vcvt.s32.f32 %v1282
    %v2307 = vcvt.s32.f32 %v1283
    %v2308 = vcvt.s32.f32 %v1284
    %v2309 = vcvt.s32.f32 %v1285
    %v2310 = vcvt.s32.f32 %v1286
    %v2311 = vcvt.s32.f32 %v1287
    %v2312 = vcvt.s32.f32 %v1288
    %v2313 = vcvt.s32.f32 %v1289
    %v2314 = vcvt.s32.f32 %v1290
    %v2315 = vcvt.s32.f32 %v1291
    %v2316 = vcvt.s32.f32 %v1292
    %v2317 = vcvt.s32.f32 %v1293
    %v2318 = vcvt.s32.f32 %v1294
    %v2319 = vcvt.s32.f32 %v1295
    %v2320 = vcvt.s32.f32 %v1296
    %v2321 = vcvt.s32.f32 %v1297
    %v2322 = vcvt.s32.f32 %v1298
    %v2323 = vcvt.s32.f32 %v1299
    %v2324 = vcvt.s32.f32 %v1300
    %v2325 = vcvt.s32.f32 %v1301
    %v2326 = vcvt.s32.f32 %v1302
    %v2327 = vcvt.s32.f32 %v1303
    %v2328 = vcvt.s32.f32 %v1304
    %v2329 = vcvt.s32.f32 %v1305
    %v2330 = vcvt.s32.f32 %v1306
    %v2331 = vcvt.s32.f32 %v1307
    %v2332 = vcvt.s32.f32 %v1308
    %v2333 = vcvt.s32.f32 %v1309
    %v2334 = vcvt.s32.f32 %v1310
    %v2335 = vcvt.s32.f32 %v1311
    %v2336 = vcvt.s32.f32 %v1312
    %v2337 = vcvt.s32.f32 %v1313
    %v2338 = vcvt.s32.f32 %v1314
    %v2339 = vcvt.s32.f32 %v1315
    %v2340 = vcvt.s32.f32 %v1316
    %v2341 = vcvt.s32.f32 %v1317
    %v2342 = vcvt.s32.f32 %v1318
    %v2343 = vcvt.s32.f32 %v1319
    %v2344 = vcvt.s32.f32 %v1320
    %v2345 = vcvt.s32.f32 %v1321
    %v2346 = vcvt.s32.f32 %v1322
    %v2347 = vcvt.s32.f32 %v1323
    %v2348 = vcvt.s32.f32 %v1324
    %v2349 = vcvt.s32.f32 %v1325
    %v2350 = vcvt.s32.f32 %v1326
    %v2351 = vcvt.s32.f32 %v1327
    %v2352 = vcvt.s32.f32 %v1328
    %v2353 = vcvt.s32.f32 %v1329
    %v2354 = vcvt.s32.f32 %v1330
    %v2355 = vcvt.s32.f32 %v1331
    %v2356 = vcvt.s32.f32 %v1332
    %v2357 = vcvt.s32.f32 %v1333
    %v2358 = vcvt.s32.f32 %v1334
    %v2359 = vcvt.s32.f32 %v1335
    %v2360 = vcvt.s32.f32 %v1336
    %v2361 = vcvt.s32.f32 %v1337
    %v2362 = vcvt.s32.f32 %v1338
    %v2363 = vcvt.s32.f32 %v1339
    %v2364 = vcvt.s32.f32 %v1340
    %v2365 = vcvt.s32.f32 %v1341
    %v2366 = vcvt.s32.f32 %v1342
    %v2367 = vcvt.s32.f32 %v1343
    %v2368 = vcvt.s32.f32 %v1344
    %v2369 = vcvt.s32.f32 %v1345
    %v2370 = vcvt.s32.f32 %v1346
    %v2371 = vcvt.s32.f32 %v1347
    %v2372 = vcvt.s32.f32 %v1348
    %v2373 = vcvt.s32.f32 %v1349
    %v2374 = vcvt.s32.f32 %v1350
    %v2375 = vcvt.s32.f32 %v1351
    %v2376 = vcvt.s32.f32 %v1352
    %v2377 = vcvt.s32.f32 %v1353
    %v2378 = vcvt.s32.f32 %v1354
    %v2379 = vcvt.s32.f32 %v1355
    %v2380 = vcvt.s32.f32 %v1356
    %v2381 = vcvt.s32.f32 %v1357
    %v2382 = vcvt.s32.f32 %v1358
    %v2383 = vcvt.s32.f32 %v1359
    %v2384 = vcvt.s32.f32 %v1360
    %v2385 = vcvt.s32.f32 %v1361
    %v2386 = vcvt.s32.f32 %v1362
    %v2387 = vcvt.s32.f32 %v1363
    %v2388 = vcvt.s32.f32 %v1364
    %v2389 = vcvt.s32.f32 %v1365
    %v2390 = vcvt.s32.f32 %v1366
    %v2391 = vcvt.s32.f32 %v1367
    %v2392 = vcvt.s32.f32 %v1368
    %v2393 = vcvt.s32.f32 %v1369
    %v2394 = vcvt.s32.f32 %v1370
    %v2395 = vcvt.s32.f32 %v1371
    %v2396 = vcvt.s32.f32 %v1372
    %v2397 = vcvt.s32.f32 %v1373
    %v2398 = vcvt.s32.f32 %v1374
    %v2399 = vcvt.s32.f32 %v1375
    %v2400 = vcvt.s32.f32 %v1376
    %v2401 = vcvt.s32.f32 %v1377
    %v2402 = vcvt.s32.f32 %v1378
    %v2403 = vcvt.s32.f32 %v1379
    %v2404 = vcvt.s32.f32 %v1380
    %v2405 = vcvt.s32.f32 %v1381
    %v2406 = vcvt.s32.f32 %v1382
    %v2407 = vcvt.s32.f32 %v1383
    %v2408 = vcvt.s32.f32 %v1384
    %v2409 = vcvt.s32.f32 %v1385
    %v2410 = vcvt.s32.f32 %v1386
    %v2411 = vcvt.s32.f32 %v1387
    %v2412 = vcvt.s32.f32 %v1388
    %v2413 = vcvt.s32.f32 %v1389
    %v2414 = vcvt.s32.f32 %v1390
    %v2415 = vcvt.s32.f32 %v1391
    %v2416 = vcvt.s32.f32 %v1392
    %v2417 = vcvt.s32.f32 %v1393
    %v2418 = vcvt.s32.f32 %v1394
    %v2419 = vcvt.s32.f32 %v1395
    %v2420 = vcvt.s32.f32 %v1396
    %v2421 = vcvt.s32.f32 %v1397
    %v2422 = vcvt.s32.f32 %v1398
    %v2423 = vcvt.s32.f32 %v1399
    %v2424 = vcvt.s32.f32 %v1400
    %v2425 = vcvt.s32.f32 %v1401
    %v2426 = vcvt.s32.f32 %v1402
    %v2427 = vcvt.s32.f32 %v1403
    %v2428 = vcvt.s32.f32 %v1404
    %v2429 = vcvt.s32.f32 %v1405
    %v2430 = vcvt.s32.f32 %v1406
    %v2431 = vcvt.s32.f32 %v1407
    %v2432 = vcvt.s32.f32 %v1408
    %v2433 = vcvt.s32.f32 %v1409
    %v2434 = vcvt.s32.f32 %v1410
    %v2435 = vcvt.s32.f32 %v1411
    %v2436 = vcvt.s32.f32 %v1412
    %v2437 = vcvt.s32.f32 %v1413
    %v2438 = vcvt.s32.f32 %v1414
    %v2439 = vcvt.s32.f32 %v1415
    %v2440 = vcvt.s32.f32 %v1416
    %v2441 = vcvt.s32.f32 %v1417
    %v2442 = vcvt.s32.f32 %v1418
    %v2443 = vcvt.s32.f32 %v1419
    %v2444 = vcvt.s32.f32 %v1420
    %v2445 = vcvt.s32.f32 %v1421
    %v2446 = vcvt.s32.f32 %v1422
    %v2447 = vcvt.s32.f32 %v1423
    %v2448 = vcvt.s32.f32 %v1424
    %v2449 = vcvt.s32.f32 %v1425
    %v2450 = vcvt.s32.f32 %v1426
    %v2451 = vcvt.s32.f32 %v1427
    %v2452 = vcvt.s32.f32 %v1428
    %v2453 = vcvt.s32.f32 %v1429
    %v2454 = vcvt.s32.f32 %v1430
    %v2455 = vcvt.s32.f32 %v1431
    %v2456 = vcvt.s32.f32 %v1432
    %v2457 = vcvt.s32.f32 %v1433
    %v2458 = vcvt.s32.f32 %v1434
    %v2459 = vcvt.s32.f32 %v1435
    %v2460 = vcvt.s32.f32 %v1436
    %v2461 = vcvt.s32.f32 %v1437
    %v2462 = vcvt.s32.f32 %v1438
    %v2463 = vcvt.s32.f32 %v1439
    %v2464 = vcvt.s32.f32 %v1440
    %v2465 = vcvt.s32.f32 %v1441
    %v2466 = vcvt.s32.f32 %v1442
    %v2467 = vcvt.s32.f32 %v1443
    %v2468 = vcvt.s32.f32 %v1444
    %v2469 = vcvt.s32.f32 %v1445
    %v2470 = vcvt.s32.f32 %v1446
    %v2471 = vcvt.s32.f32 %v1447
    %v2472 = vcvt.s32.f32 %v1448
    %v2473 = vcvt.s32.f32 %v1449
    %v2474 = vcvt.s32.f32 %v1450
    %v2475 = vcvt.s32.f32 %v1451
    %v2476 = vcvt.s32.f32 %v1452
    %v2477 = vcvt.s32.f32 %v1453
    %v2478 = vcvt.s32.f32 %v1454
    %v2479 = vcvt.s32.f32 %v1455
    %v2480 = vcvt.s32.f32 %v1456
    %v2481 = vcvt.s32.f32 %v1457
    %v2482 = vcvt.s32.f32 %v1458
    %v2483 = vcvt.s32.f32 %v1459
    %v2484 = vcvt.s32.f32 %v1460
    %v2485 = vcvt.s32.f32 %v1461
    %v2486 = vcvt.s32.f32 %v1462
    %v2487 = vcvt.s32.f32 %v1463
    %v2488 = vcvt.s32.f32 %v1464
    %v2489 = vcvt.s32.f32 %v1465
    %v2490 = vcvt.s32.f32 %v1466
    %v2491 = vcvt.s32.f32 %v1467
    %v2492 = vcvt.s32.f32 %v1468
    %v2493 = vcvt.s32.f32 %v1469
    %v2494 = vcvt.s32.f32 %v1470
    %v2495 = vcvt.s32.f32 %v1471
    %v2496 = vcvt.s32.f32 %v1472
    %v2497 = vcvt.s32.f32 %v1473
    %v2498 = vcvt.s32.f32 %v1474
    %v2499 = vcvt.s32.f32 %v1475
    %v2500 = vcvt.s32.f32 %v1476
    %v2501 = vcvt.s32.f32 %v1477
    %v2502 = vcvt.s32.f32 %v1478
    %v2503 = vcvt.s32.f32 %v1479
    %v2504 = vcvt.s32.f32 %v1480
    %v2505 = vcvt.s32.f32 %v1481
    %v2506 = vcvt.s32.f32 %v1482
    %v2507 = vcvt.s32.f32 %v1483
    %v2508 = vcvt.s32.f32 %v1484
    %v2509 = vcvt.s32.f32 %v1485
    %v2510 = vcvt.s32.f32 %v1486
    %v2511 = vcvt.s32.f32 %v1487
    %v2512 = vcvt.s32.f32 %v1488
    %v2513 = vcvt.s32.f32 %v1489
    %v2514 = vcvt.s32.f32 %v1490
    %v2515 = vcvt.s32.f32 %v1491
    %v2516 = vcvt.s32.f32 %v1492
    %v2517 = vcvt.s32.f32 %v1493
    %v2518 = vcvt.s32.f32 %v1494
    %v2519 = vcvt.s32.f32 %v1495
    %v2520 = vcvt.s32.f32 %v1496
    %v2521 = vcvt.s32.f32 %v1497
    %v2522 = vcvt.s32.f32 %v1498
    %v2523 = vcvt.s32.f32 %v1499
    %v2524 = vcvt.s32.f32 %v1500
    %v2525 = vcvt.s32.f32 %v1501
    %v2526 = vcvt.s32.f32 %v1502
    %v2527 = vcvt.s32.f32 %v1503
    %v2528 = vcvt.s32.f32 %v1504
    %v2529 = vcvt.s32.f32 %v1505
    %v2530 = vcvt.s32.f32 %v1506
    %v2531 = vcvt.s32.f32 %v1507
    %v2532 = vcvt.s32.f32 %v1508
    %v2533 = vcvt.s32.f32 %v1509
    %v2534 = vcvt.s32.f32 %v1510
    %v2535 = vcvt.s32.f32 %v1511
    %v2536 = vcvt.s32.f32 %v1512
    %v2537 = vcvt.s32.f32 %v1513
    %v2538 = vcvt.s32.f32 %v1514
    %v2539 = vcvt.s32.f32 %v1515
    %v2540 = vcvt.s32.f32 %v1516
    %v2541 = vcvt.s32.f32 %v1517
    %v2542 = vcvt.s32.f32 %v1518
    %v2543 = vcvt.s32.f32 %v1519
    %v2544 = vcvt.s32.f32 %v1520
    %v2545 = vcvt.s32.f32 %v1521
    %v2546 = vcvt.s32.f32 %v1522
    %v2547 = vcvt.s32.f32 %v1523
    %v2548 = vcvt.s32.f32 %v1524
    %v2549 = vcvt.s32.f32 %v1525
    %v2550 = vcvt.s32.f32 %v1526
    %v2551 = vcvt.s32.f32 %v1527
    %v2552 = vcvt.s32.f32 %v1528
    %v2553 = vcvt.s32.f32 %v1529
    %v2554 = vcvt.s32.f32 %v1530
    %v2555 = vcvt.s32.f32 %v1531
    %v2556 = vcvt.s32.f32 %v1532
    %v2557 = vcvt.s32.f32 %v1533
    %v2558 = vcvt.s32.f32 %v1534
    %v2559 = vcvt.s32.f32 %v1535
    %v2560 = vcvt.s32.f32 %v1536
    %v2561 = vcvt.s32.f32 %v1537
    %v2562 = vcvt.s32.f32 %v1538
    %v2563 = vcvt.s32.f32 %v1539
    %v2564 = vcvt.s32.f32 %v1540
    %v2565 = vcvt.s32.f32 %v1541
    %v2566 = vcvt.s32.f32 %v1542
    %v2567 = vcvt.s32.f32 %v1543
    %v2568 = vcvt.s32.f32 %v1544
    %v2569 = vcvt.s32.f32 %v1545
    %v2570 = vcvt.s32.f32 %v1546
    %v2571 = vcvt.s32.f32 %v1547
    %v2572 = vcvt.s32.f32 %v1548
    %v2573 = vcvt.s32.f32 %v1549
    %v2574 = vcvt.s32.f32 %v1550
    %v2575 = vcvt.s32.f32 %v1551
    %v2576 = vcvt.s32.f32 %v1552
    %v2577 = vcvt.s32.f32 %v1553
    %v2578 = vcvt.s32.f32 %v1554
    %v2579 = vcvt.s32.f32 %v1555
    %v2580 = vcvt.s32.f32 %v1556
    %v2581 = vcvt.s32.f32 %v1557
    %v2582 = vcvt.s32.f32 %v1558
    %v2583 = vcvt.s32.f32 %v1559
    %v2584 = vcvt.s32.f32 %v1560
    %v2585 = vcvt.s32.f32 %v1561
    %v2586 = vcvt.s32.f32 %v1562
    %v2587 = vcvt.s32.f32 %v1563
    %v2588 = vcvt.s32.f32 %v1564
    %v2589 = vcvt.s32.f32 %v1565
    %v2590 = vcvt.s32.f32 %v1566
    %v2591 = vcvt.s32.f32 %v1567
    %v2592 = vcvt.s32.f32 %v1568
    %v2593 = vcvt.s32.f32 %v1569
    %v2594 = vcvt.s32.f32 %v1570
    %v2595 = vcvt.s32.f32 %v1571
    %v2596 = vcvt.s32.f32 %v1572
    %v2597 = vcvt.s32.f32 %v1573
    %v2598 = vcvt.s32.f32 %v1574
    %v2599 = vcvt.s32.f32 %v1575
    %v2600 = vcvt.s32.f32 %v1576
    %v2601 = vcvt.s32.f32 %v1577
    %v2602 = vcvt.s32.f32 %v1578
    %v2603 = vcvt.s32.f32 %v1579
    %v2604 = vcvt.s32.f32 %v1580
    %v2605 = vcvt.s32.f32 %v1581
    %v2606 = vcvt.s32.f32 %v1582
    %v2607 = vcvt.s32.f32 %v1583
    %v2608 = vcvt.s32.f32 %v1584
    %v2609 = vcvt.s32.f32 %v1585
    %v2610 = vcvt.s32.f32 %v1586
    %v2611 = vcvt.s32.f32 %v1587
    %v2612 = vcvt.s32.f32 %v1588
    %v2613 = vcvt.s32.f32 %v1589
    %v2614 = vcvt.s32.f32 %v1590
    %v2615 = vcvt.s32.f32 %v1591
    %v2616 = vcvt.s32.f32 %v1592
    %v2617 = vcvt.s32.f32 %v1593
    %v2618 = vcvt.s32.f32 %v1594
    %v2619 = vcvt.s32.f32 %v1595
    %v2620 = vcvt.s32.f32 %v1596
    %v2621 = vcvt.s32.f32 %v1597
    %v2622 = vcvt.s32.f32 %v1598
    %v2623 = vcvt.s32.f32 %v1599
    %v2624 = vcvt.s32.f32 %v1600
    %v2625 = vcvt.s32.f32 %v1601
    %v2626 = vcvt.s32.f32 %v1602
    %v2627 = vcvt.s32.f32 %v1603
    %v2628 = vcvt.s32.f32 %v1604
    %v2629 = vcvt.s32.f32 %v1605
    %v2630 = vcvt.s32.f32 %v1606
    %v2631 = vcvt.s32.f32 %v1607
    %v2632 = vcvt.s32.f32 %v1608
    %v2633 = vcvt.s32.f32 %v1609
    %v2634 = vcvt.s32.f32 %v1610
    %v2635 = vcvt.s32.f32 %v1611
    %v2636 = vcvt.s32.f32 %v1612
    %v2637 = vcvt.s32.f32 %v1613
    %v2638 = vcvt.s32.f32 %v1614
    %v2639 = vcvt.s32.f32 %v1615
    %v2640 = vcvt.s32.f32 %v1616
    %v2641 = vcvt.s32.f32 %v1617
    %v2642 = vcvt.s32.f32 %v1618
    %v2643 = vcvt.s32.f32 %v1619
    %v2644 = vcvt.s32.f32 %v1620
    %v2645 = vcvt.s32.f32 %v1621
    %v2646 = vcvt.s32.f32 %v1622
    %v2647 = vcvt.s32.f32 %v1623
    %v2648 = vcvt.s32.f32 %v1624
    %v2649 = vcvt.s32.f32 %v1625
    %v2650 = vcvt.s32.f32 %v1626
    %v2651 = vcvt.s32.f32 %v1627
    %v2652 = vcvt.s32.f32 %v1628
    %v2653 = vcvt.s32.f32 %v1629
    %v2654 = vcvt.s32.f32 %v1630
    %v2655 = vcvt.s32.f32 %v1631
    %v2656 = vcvt.s32.f32 %v1632
    %v2657 = vcvt.s32.f32 %v1633
    %v2658 = vcvt.s32.f32 %v1634
    %v2659 = vcvt.s32.f32 %v1635
    %v2660 = vcvt.s32.f32 %v1636
    %v2661 = vcvt.s32.f32 %v1637
    %v2662 = vcvt.s32.f32 %v1638
    %v2663 = vcvt.s32.f32 %v1639
    %v2664 = vcvt.s32.f32 %v1640
    %v2665 = vcvt.s32.f32 %v1641
    %v2666 = vcvt.s32.f32 %v1642
    %v2667 = vcvt.s32.f32 %v1643
    %v2668 = vcvt.s32.f32 %v1644
    %v2669 = vcvt.s32.f32 %v1645
    %v2670 = vcvt.s32.f32 %v1646
    %v2671 = vcvt.s32.f32 %v1647
    %v2672 = vcvt.s32.f32 %v1648
    %v2673 = vcvt.s32.f32 %v1649
    %v2674 = vcvt.s32.f32 %v1650
    %v2675 = vcvt.s32.f32 %v1651
    %v2676 = vcvt.s32.f32 %v1652
    %v2677 = vcvt.s32.f32 %v1653
    %v2678 = vcvt.s32.f32 %v1654
    %v2679 = vcvt.s32.f32 %v1655
    %v2680 = vcvt.s32.f32 %v1656
    %v2681 = vcvt.s32.f32 %v1657
    %v2682 = vcvt.s32.f32 %v1658
    %v2683 = vcvt.s32.f32 %v1659
    %v2684 = vcvt.s32.f32 %v1660
    %v2685 = vcvt.s32.f32 %v1661
    %v2686 = vcvt.s32.f32 %v1662
    %v2687 = vcvt.s32.f32 %v1663
    %v2688 = vcvt.s32.f32 %v1664
    %v2689 = vcvt.s32.f32 %v1665
    %v2690 = vpack.c.bf16 %v1674, %v1666
    %v2691 = vpack.c.bf16 %v1675, %v1667
    %v2692 = vpack.c.bf16 %v1676, %v1668
    %v2693 = vpack.c.bf16 %v1677, %v1669
    %v2694 = vpack.c.bf16 %v1678, %v1670
    %v2695 = vpack.c.bf16 %v1679, %v1671
    %v2696 = vpack.c.bf16 %v1680, %v1672
    %v2697 = vpack.c.bf16 %v1681, %v1673
    %v2698 = vpack.c.bf16 %v1690, %v1682
    %v2699 = vpack.c.bf16 %v1691, %v1683
    %v2700 = vpack.c.bf16 %v1692, %v1684
    %v2701 = vpack.c.bf16 %v1693, %v1685
    %v2702 = vpack.c.bf16 %v1694, %v1686
    %v2703 = vpack.c.bf16 %v1695, %v1687
    %v2704 = vpack.c.bf16 %v1696, %v1688
    %v2705 = vpack.c.bf16 %v1697, %v1689
    %v2706 = vpack.c.bf16 %v1706, %v1698
    %v2707 = vpack.c.bf16 %v1707, %v1699
    %v2708 = vpack.c.bf16 %v1708, %v1700
    %v2709 = vpack.c.bf16 %v1709, %v1701
    %v2710 = vpack.c.bf16 %v1710, %v1702
    %v2711 = vpack.c.bf16 %v1711, %v1703
    %v2712 = vpack.c.bf16 %v1712, %v1704
    %v2713 = vpack.c.bf16 %v1713, %v1705
    %v2714 = vpack.c.bf16 %v1722, %v1714
    %v2715 = vpack.c.bf16 %v1723, %v1715
    %v2716 = vpack.c.bf16 %v1724, %v1716
    %v2717 = vpack.c.bf16 %v1725, %v1717
    %v2718 = vpack.c.bf16 %v1726, %v1718
    %v2719 = vpack.c.bf16 %v1727, %v1719
    %v2720 = vpack.c.bf16 %v1728, %v1720
    %v2721 = vpack.c.bf16 %v1729, %v1721
    %v2722 = vpack.c.bf16 %v1738, %v1730
    %v2723 = vpack.c.bf16 %v1739, %v1731
    %v2724 = vpack.c.bf16 %v1740, %v1732
    %v2725 = vpack.c.bf16 %v1741, %v1733
    %v2726 = vpack.c.bf16 %v1742, %v1734
    %v2727 = vpack.c.bf16 %v1743, %v1735
    %v2728 = vpack.c.bf16 %v1744, %v1736
    %v2729 = vpack.c.bf16 %v1745, %v1737
    %v2730 = vpack.c.bf16 %v1754, %v1746
    %v2731 = vpack.c.bf16 %v1755, %v1747
    %v2732 = vpack.c.bf16 %v1756, %v1748
    %v2733 = vpack.c.bf16 %v1757, %v1749
    %v2734 = vpack.c.bf16 %v1758, %v1750
    %v2735 = vpack.c.bf16 %v1759, %v1751
    %v2736 = vpack.c.bf16 %v1760, %v1752
    %v2737 = vpack.c.bf16 %v1761, %v1753
    %v2738 = vpack.c.bf16 %v1770, %v1762
    %v2739 = vpack.c.bf16 %v1771, %v1763
    %v2740 = vpack.c.bf16 %v1772, %v1764
    %v2741 = vpack.c.bf16 %v1773, %v1765
    %v2742 = vpack.c.bf16 %v1774, %v1766
    %v2743 = vpack.c.bf16 %v1775, %v1767
    %v2744 = vpack.c.bf16 %v1776, %v1768
    %v2745 = vpack.c.bf16 %v1777, %v1769
    %v2746 = vpack.c.bf16 %v1786, %v1778
    %v2747 = vpack.c.bf16 %v1787, %v1779
    %v2748 = vpack.c.bf16 %v1788, %v1780
    %v2749 = vpack.c.bf16 %v1789, %v1781
    %v2750 = vpack.c.bf16 %v1790, %v1782
    %v2751 = vpack.c.bf16 %v1791, %v1783
    %v2752 = vpack.c.bf16 %v1792, %v1784
    %v2753 = vpack.c.bf16 %v1793, %v1785
    %v2754 = vpack.c.bf16 %v1802, %v1794
    %v2755 = vpack.c.bf16 %v1803, %v1795
    %v2756 = vpack.c.bf16 %v1804, %v1796
    %v2757 = vpack.c.bf16 %v1805, %v1797
    %v2758 = vpack.c.bf16 %v1806, %v1798
    %v2759 = vpack.c.bf16 %v1807, %v1799
    %v2760 = vpack.c.bf16 %v1808, %v1800
    %v2761 = vpack.c.bf16 %v1809, %v1801
    %v2762 = vpack.c.bf16 %v1818, %v1810
    %v2763 = vpack.c.bf16 %v1819, %v1811
    %v2764 = vpack.c.bf16 %v1820, %v1812
    %v2765 = vpack.c.bf16 %v1821, %v1813
    %v2766 = vpack.c.bf16 %v1822, %v1814
    %v2767 = vpack.c.bf16 %v1823, %v1815
    %v2768 = vpack.c.bf16 %v1824, %v1816
    %v2769 = vpack.c.bf16 %v1825, %v1817
    %v2770 = vpack.c.bf16 %v1834, %v1826
    %v2771 = vpack.c.bf16 %v1835, %v1827
    %v2772 = vpack.c.bf16 %v1836, %v1828
    %v2773 = vpack.c.bf16 %v1837, %v1829
    %v2774 = vpack.c.bf16 %v1838, %v1830
    %v2775 = vpack.c.bf16 %v1839, %v1831
    %v2776 = vpack.c.bf16 %v1840, %v1832
    %v2777 = vpack.c.bf16 %v1841, %v1833
    %v2778 = vpack.c.bf16 %v1850, %v1842
    %v2779 = vpack.c.bf16 %v1851, %v1843
    %v2780 = vpack.c.bf16 %v1852, %v1844
    %v2781 = vpack.c.bf16 %v1853, %v1845
    %v2782 = vpack.c.bf16 %v1854, %v1846
    %v2783 = vpack.c.bf16 %v1855, %v1847
    %v2784 = vpack.c.bf16 %v1856, %v1848
    %v2785 = vpack.c.bf16 %v1857, %v1849
    %v2786 = vpack.c.bf16 %v1866, %v1858
    %v2787 = vpack.c.bf16 %v1867, %v1859
    %v2788 = vpack.c.bf16 %v1868, %v1860
    %v2789 = vpack.c.bf16 %v1869, %v1861
    %v2790 = vpack.c.bf16 %v1870, %v1862
    %v2791 = vpack.c.bf16 %v1871, %v1863
    %v2792 = vpack.c.bf16 %v1872, %v1864
    %v2793 = vpack.c.bf16 %v1873, %v1865
    %v2794 = vpack.c.bf16 %v1882, %v1874
    %v2795 = vpack.c.bf16 %v1883, %v1875
    %v2796 = vpack.c.bf16 %v1884, %v1876
    %v2797 = vpack.c.bf16 %v1885, %v1877
    %v2798 = vpack.c.bf16 %v1886, %v1878
    %v2799 = vpack.c.bf16 %v1887, %v1879
    %v2800 = vpack.c.bf16 %v1888, %v1880
    %v2801 = vpack.c.bf16 %v1889, %v1881
    %v2802 = vpack.c.bf16 %v1898, %v1890
    %v2803 = vpack.c.bf16 %v1899, %v1891
    %v2804 = vpack.c.bf16 %v1900, %v1892
    %v2805 = vpack.c.bf16 %v1901, %v1893
    %v2806 = vpack.c.bf16 %v1902, %v1894
    %v2807 = vpack.c.bf16 %v1903, %v1895
    %v2808 = vpack.c.bf16 %v1904, %v1896
    %v2809 = vpack.c.bf16 %v1905, %v1897
    %v2810 = vpack.c.bf16 %v1914, %v1906
    %v2811 = vpack.c.bf16 %v1915, %v1907
    %v2812 = vpack.c.bf16 %v1916, %v1908
    %v2813 = vpack.c.bf16 %v1917, %v1909
    %v2814 = vpack.c.bf16 %v1918, %v1910
    %v2815 = vpack.c.bf16 %v1919, %v1911
    %v2816 = vpack.c.bf16 %v1920, %v1912
    %v2817 = vpack.c.bf16 %v1921, %v1913
    %v2818 = vpack.c.bf16 %v1930, %v1922
    %v2819 = vpack.c.bf16 %v1931, %v1923
    %v2820 = vpack.c.bf16 %v1932, %v1924
    %v2821 = vpack.c.bf16 %v1933, %v1925
    %v2822 = vpack.c.bf16 %v1934, %v1926
    %v2823 = vpack.c.bf16 %v1935, %v1927
    %v2824 = vpack.c.bf16 %v1936, %v1928
    %v2825 = vpack.c.bf16 %v1937, %v1929
    %v2826 = vpack.c.bf16 %v1946, %v1938
    %v2827 = vpack.c.bf16 %v1947, %v1939
    %v2828 = vpack.c.bf16 %v1948, %v1940
    %v2829 = vpack.c.bf16 %v1949, %v1941
    %v2830 = vpack.c.bf16 %v1950, %v1942
    %v2831 = vpack.c.bf16 %v1951, %v1943
    %v2832 = vpack.c.bf16 %v1952, %v1944
    %v2833 = vpack.c.bf16 %v1953, %v1945
    %v2834 = vpack.c.bf16 %v1962, %v1954
    %v2835 = vpack.c.bf16 %v1963, %v1955
    %v2836 = vpack.c.bf16 %v1964, %v1956
    %v2837 = vpack.c.bf16 %v1965, %v1957
    %v2838 = vpack.c.bf16 %v1966, %v1958
    %v2839 = vpack.c.bf16 %v1967, %v1959
    %v2840 = vpack.c.bf16 %v1968, %v1960
    %v2841 = vpack.c.bf16 %v1969, %v1961
    %v2842 = vpack.c.bf16 %v1978, %v1970
    %v2843 = vpack.c.bf16 %v1979, %v1971
    %v2844 = vpack.c.bf16 %v1980, %v1972
    %v2845 = vpack.c.bf16 %v1981, %v1973
    %v2846 = vpack.c.bf16 %v1982, %v1974
    %v2847 = vpack.c.bf16 %v1983, %v1975
    %v2848 = vpack.c.bf16 %v1984, %v1976
    %v2849 = vpack.c.bf16 %v1985, %v1977
    %v2850 = vpack.c.bf16 %v1994, %v1986
    %v2851 = vpack.c.bf16 %v1995, %v1987
    %v2852 = vpack.c.bf16 %v1996, %v1988
    %v2853 = vpack.c.bf16 %v1997, %v1989
    %v2854 = vpack.c.bf16 %v1998, %v1990
    %v2855 = vpack.c.bf16 %v1999, %v1991
    %v2856 = vpack.c.bf16 %v2000, %v1992
    %v2857 = vpack.c.bf16 %v2001, %v1993
    %v2858 = vpack.c.bf16 %v2010, %v2002
    %v2859 = vpack.c.bf16 %v2011, %v2003
    %v2860 = vpack.c.bf16 %v2012, %v2004
    %v2861 = vpack.c.bf16 %v2013, %v2005
    %v2862 = vpack.c.bf16 %v2014, %v2006
    %v2863 = vpack.c.bf16 %v2015, %v2007
    %v2864 = vpack.c.bf16 %v2016, %v2008
    %v2865 = vpack.c.bf16 %v2017, %v2009
    %v2866 = vpack.c.bf16 %v2026, %v2018
    %v2867 = vpack.c.bf16 %v2027, %v2019
    %v2868 = vpack.c.bf16 %v2028, %v2020
    %v2869 = vpack.c.bf16 %v2029, %v2021
    %v2870 = vpack.c.bf16 %v2030, %v2022
    %v2871 = vpack.c.bf16 %v2031, %v2023
    %v2872 = vpack.c.bf16 %v2032, %v2024
    %v2873 = vpack.c.bf16 %v2033, %v2025
    %v2874 = vpack.c.bf16 %v2042, %v2034
    %v2875 = vpack.c.bf16 %v2043, %v2035
    %v2876 = vpack.c.bf16 %v2044, %v2036
    %v2877 = vpack.c.bf16 %v2045, %v2037
    %v2878 = vpack.c.bf16 %v2046, %v2038
    %v2879 = vpack.c.bf16 %v2047, %v2039
    %v2880 = vpack.c.bf16 %v2048, %v2040
    %v2881 = vpack.c.bf16 %v2049, %v2041
    %v2882 = vpack.c.bf16 %v2058, %v2050
    %v2883 = vpack.c.bf16 %v2059, %v2051
    %v2884 = vpack.c.bf16 %v2060, %v2052
    %v2885 = vpack.c.bf16 %v2061, %v2053
    %v2886 = vpack.c.bf16 %v2062, %v2054
    %v2887 = vpack.c.bf16 %v2063, %v2055
    %v2888 = vpack.c.bf16 %v2064, %v2056
    %v2889 = vpack.c.bf16 %v2065, %v2057
    %v2890 = vpack.c.bf16 %v2074, %v2066
    %v2891 = vpack.c.bf16 %v2075, %v2067
    %v2892 = vpack.c.bf16 %v2076, %v2068
    %v2893 = vpack.c.bf16 %v2077, %v2069
    %v2894 = vpack.c.bf16 %v2078, %v2070
    %v2895 = vpack.c.bf16 %v2079, %v2071
    %v2896 = vpack.c.bf16 %v2080, %v2072
    %v2897 = vpack.c.bf16 %v2081, %v2073
    %v2898 = vpack.c.bf16 %v2090, %v2082
    %v2899 = vpack.c.bf16 %v2091, %v2083
    %v2900 = vpack.c.bf16 %v2092, %v2084
    %v2901 = vpack.c.bf16 %v2093, %v2085
    %v2902 = vpack.c.bf16 %v2094, %v2086
    %v2903 = vpack.c.bf16 %v2095, %v2087
    %v2904 = vpack.c.bf16 %v2096, %v2088
    %v2905 = vpack.c.bf16 %v2097, %v2089
    %v2906 = vpack.c.bf16 %v2106, %v2098
    %v2907 = vpack.c.bf16 %v2107, %v2099
    %v2908 = vpack.c.bf16 %v2108, %v2100
    %v2909 = vpack.c.bf16 %v2109, %v2101
    %v2910 = vpack.c.bf16 %v2110, %v2102
    %v2911 = vpack.c.bf16 %v2111, %v2103
    %v2912 = vpack.c.bf16 %v2112, %v2104
    %v2913 = vpack.c.bf16 %v2113, %v2105
    %v2914 = vpack.c.bf16 %v2122, %v2114
    %v2915 = vpack.c.bf16 %v2123, %v2115
    %v2916 = vpack.c.bf16 %v2124, %v2116
    %v2917 = vpack.c.bf16 %v2125, %v2117
    %v2918 = vpack.c.bf16 %v2126, %v2118
    %v2919 = vpack.c.bf16 %v2127, %v2119
    %v2920 = vpack.c.bf16 %v2128, %v2120
    %v2921 = vpack.c.bf16 %v2129, %v2121
    %v2922 = vpack.c.bf16 %v2138, %v2130
    %v2923 = vpack.c.bf16 %v2139, %v2131
    %v2924 = vpack.c.bf16 %v2140, %v2132
    %v2925 = vpack.c.bf16 %v2141, %v2133
    %v2926 = vpack.c.bf16 %v2142, %v2134
    %v2927 = vpack.c.bf16 %v2143, %v2135
    %v2928 = vpack.c.bf16 %v2144, %v2136
    %v2929 = vpack.c.bf16 %v2145, %v2137
    %v2930 = vpack.c.bf16 %v2154, %v2146
    %v2931 = vpack.c.bf16 %v2155, %v2147
    %v2932 = vpack.c.bf16 %v2156, %v2148
    %v2933 = vpack.c.bf16 %v2157, %v2149
    %v2934 = vpack.c.bf16 %v2158, %v2150
    %v2935 = vpack.c.bf16 %v2159, %v2151
    %v2936 = vpack.c.bf16 %v2160, %v2152
    %v2937 = vpack.c.bf16 %v2161, %v2153
    %v2938 = vpack.c.bf16 %v2170, %v2162
    %v2939 = vpack.c.bf16 %v2171, %v2163
    %v2940 = vpack.c.bf16 %v2172, %v2164
    %v2941 = vpack.c.bf16 %v2173, %v2165
    %v2942 = vpack.c.bf16 %v2174, %v2166
    %v2943 = vpack.c.bf16 %v2175, %v2167
    %v2944 = vpack.c.bf16 %v2176, %v2168
    %v2945 = vpack.c.bf16 %v2177, %v2169
    %v2946 = vpack.c.bf16 %v2186, %v2178
    %v2947 = vpack.c.bf16 %v2187, %v2179
    %v2948 = vpack.c.bf16 %v2188, %v2180
    %v2949 = vpack.c.bf16 %v2189, %v2181
    %v2950 = vpack.c.bf16 %v2190, %v2182
    %v2951 = vpack.c.bf16 %v2191, %v2183
    %v2952 = vpack.c.bf16 %v2192, %v2184
    %v2953 = vpack.c.bf16 %v2193, %v2185
    %v2954 = vpack.c.bf16 %v2202, %v2194
    %v2955 = vpack.c.bf16 %v2203, %v2195
    %v2956 = vpack.c.bf16 %v2204, %v2196
    %v2957 = vpack.c.bf16 %v2205, %v2197
    %v2958 = vpack.c.bf16 %v2206, %v2198
    %v2959 = vpack.c.bf16 %v2207, %v2199
    %v2960 = vpack.c.bf16 %v2208, %v2200
    %v2961 = vpack.c.bf16 %v2209, %v2201
    %v2962 = vpack.c.bf16 %v2218, %v2210
    %v2963 = vpack.c.bf16 %v2219, %v2211
    %v2964 = vpack.c.bf16 %v2220, %v2212
    %v2965 = vpack.c.bf16 %v2221, %v2213
    %v2966 = vpack.c.bf16 %v2222, %v2214
    %v2967 = vpack.c.bf16 %v2223, %v2215
    %v2968 = vpack.c.bf16 %v2224, %v2216
    %v2969 = vpack.c.bf16 %v2225, %v2217
    %v2970 = vpack.c.bf16 %v2234, %v2226
    %v2971 = vpack.c.bf16 %v2235, %v2227
    %v2972 = vpack.c.bf16 %v2236, %v2228
    %v2973 = vpack.c.bf16 %v2237, %v2229
    %v2974 = vpack.c.bf16 %v2238, %v2230
    %v2975 = vpack.c.bf16 %v2239, %v2231
    %v2976 = vpack.c.bf16 %v2240, %v2232
    %v2977 = vpack.c.bf16 %v2241, %v2233
    %v2978 = vpack.c.bf16 %v2250, %v2242
    %v2979 = vpack.c.bf16 %v2251, %v2243
    %v2980 = vpack.c.bf16 %v2252, %v2244
    %v2981 = vpack.c.bf16 %v2253, %v2245
    %v2982 = vpack.c.bf16 %v2254, %v2246
    %v2983 = vpack.c.bf16 %v2255, %v2247
    %v2984 = vpack.c.bf16 %v2256, %v2248
    %v2985 = vpack.c.bf16 %v2257, %v2249
    %v2986 = vpack.c.bf16 %v2266, %v2258
    %v2987 = vpack.c.bf16 %v2267, %v2259
    %v2988 = vpack.c.bf16 %v2268, %v2260
    %v2989 = vpack.c.bf16 %v2269, %v2261
    %v2990 = vpack.c.bf16 %v2270, %v2262
    %v2991 = vpack.c.bf16 %v2271, %v2263
    %v2992 = vpack.c.bf16 %v2272, %v2264
    %v2993 = vpack.c.bf16 %v2273, %v2265
    %v2994 = vpack.c.bf16 %v2282, %v2274
    %v2995 = vpack.c.bf16 %v2283, %v2275
    %v2996 = vpack.c.bf16 %v2284, %v2276
    %v2997 = vpack.c.bf16 %v2285, %v2277
    %v2998 = vpack.c.bf16 %v2286, %v2278
    %v2999 = vpack.c.bf16 %v2287, %v2279
    %v3000 = vpack.c.bf16 %v2288, %v2280
    %v3001 = vpack.c.bf16 %v2289, %v2281
    %v3002 = vpack.c.bf16 %v2298, %v2290
    %v3003 = vpack.c.bf16 %v2299, %v2291
    %v3004 = vpack.c.bf16 %v2300, %v2292
    %v3005 = vpack.c.bf16 %v2301, %v2293
    %v3006 = vpack.c.bf16 %v2302, %v2294
    %v3007 = vpack.c.bf16 %v2303, %v2295
    %v3008 = vpack.c.bf16 %v2304, %v2296
    %v3009 = vpack.c.bf16 %v2305, %v2297
    %v3010 = vpack.c.bf16 %v2314, %v2306
    %v3011 = vpack.c.bf16 %v2315, %v2307
    %v3012 = vpack.c.bf16 %v2316, %v2308
    %v3013 = vpack.c.bf16 %v2317, %v2309
    %v3014 = vpack.c.bf16 %v2318, %v2310
    %v3015 = vpack.c.bf16 %v2319, %v2311
    %v3016 = vpack.c.bf16 %v2320, %v2312
    %v3017 = vpack.c.bf16 %v2321, %v2313
    %v3018 = vpack.c.bf16 %v2330, %v2322
    %v3019 = vpack.c.bf16 %v2331, %v2323
    %v3020 = vpack.c.bf16 %v2332, %v2324
    %v3021 = vpack.c.bf16 %v2333, %v2325
    %v3022 = vpack.c.bf16 %v2334, %v2326
    %v3023 = vpack.c.bf16 %v2335, %v2327
    %v3024 = vpack.c.bf16 %v2336, %v2328
    %v3025 = vpack.c.bf16 %v2337, %v2329
    %v3026 = vpack.c.bf16 %v2346, %v2338
    %v3027 = vpack.c.bf16 %v2347, %v2339
    %v3028 = vpack.c.bf16 %v2348, %v2340
    %v3029 = vpack.c.bf16 %v2349, %v2341
    %v3030 = vpack.c.bf16 %v2350, %v2342
    %v3031 = vpack.c.bf16 %v2351, %v2343
    %v3032 = vpack.c.bf16 %v2352, %v2344
    %v3033 = vpack.c.bf16 %v2353, %v2345
    %v3034 = vpack.c.bf16 %v2362, %v2354
    %v3035 = vpack.c.bf16 %v2363, %v2355
    %v3036 = vpack.c.bf16 %v2364, %v2356
    %v3037 = vpack.c.bf16 %v2365, %v2357
    %v3038 = vpack.c.bf16 %v2366, %v2358
    %v3039 = vpack.c.bf16 %v2367, %v2359
    %v3040 = vpack.c.bf16 %v2368, %v2360
    %v3041 = vpack.c.bf16 %v2369, %v2361
    %v3042 = vpack.c.bf16 %v2378, %v2370
    %v3043 = vpack.c.bf16 %v2379, %v2371
    %v3044 = vpack.c.bf16 %v2380, %v2372
    %v3045 = vpack.c.bf16 %v2381, %v2373
    %v3046 = vpack.c.bf16 %v2382, %v2374
    %v3047 = vpack.c.bf16 %v2383, %v2375
    %v3048 = vpack.c.bf16 %v2384, %v2376
    %v3049 = vpack.c.bf16 %v2385, %v2377
    %v3050 = vpack.c.bf16 %v2394, %v2386
    %v3051 = vpack.c.bf16 %v2395, %v2387
    %v3052 = vpack.c.bf16 %v2396, %v2388
    %v3053 = vpack.c.bf16 %v2397, %v2389
    %v3054 = vpack.c.bf16 %v2398, %v2390
    %v3055 = vpack.c.bf16 %v2399, %v2391
    %v3056 = vpack.c.bf16 %v2400, %v2392
    %v3057 = vpack.c.bf16 %v2401, %v2393
    %v3058 = vpack.c.bf16 %v2410, %v2402
    %v3059 = vpack.c.bf16 %v2411, %v2403
    %v3060 = vpack.c.bf16 %v2412, %v2404
    %v3061 = vpack.c.bf16 %v2413, %v2405
    %v3062 = vpack.c.bf16 %v2414, %v2406
    %v3063 = vpack.c.bf16 %v2415, %v2407
    %v3064 = vpack.c.bf16 %v2416, %v2408
    %v3065 = vpack.c.bf16 %v2417, %v2409
    %v3066 = vpack.c.bf16 %v2426, %v2418
    %v3067 = vpack.c.bf16 %v2427, %v2419
    %v3068 = vpack.c.bf16 %v2428, %v2420
    %v3069 = vpack.c.bf16 %v2429, %v2421
    %v3070 = vpack.c.bf16 %v2430, %v2422
    %v3071 = vpack.c.bf16 %v2431, %v2423
    %v3072 = vpack.c.bf16 %v2432, %v2424
    %v3073 = vpack.c.bf16 %v2433, %v2425
    %v3074 = vpack.c.bf16 %v2442, %v2434
    %v3075 = vpack.c.bf16 %v2443, %v2435
    %v3076 = vpack.c.bf16 %v2444, %v2436
    %v3077 = vpack.c.bf16 %v2445, %v2437
    %v3078 = vpack.c.bf16 %v2446, %v2438
    %v3079 = vpack.c.bf16 %v2447, %v2439
    %v3080 = vpack.c.bf16 %v2448, %v2440
    %v3081 = vpack.c.bf16 %v2449, %v2441
    %v3082 = vpack.c.bf16 %v2458, %v2450
    %v3083 = vpack.c.bf16 %v2459, %v2451
    %v3084 = vpack.c.bf16 %v2460, %v2452
    %v3085 = vpack.c.bf16 %v2461, %v2453
    %v3086 = vpack.c.bf16 %v2462, %v2454
    %v3087 = vpack.c.bf16 %v2463, %v2455
    %v3088 = vpack.c.bf16 %v2464, %v2456
    %v3089 = vpack.c.bf16 %v2465, %v2457
    %v3090 = vpack.c.bf16 %v2474, %v2466
    %v3091 = vpack.c.bf16 %v2475, %v2467
    %v3092 = vpack.c.bf16 %v2476, %v2468
    %v3093 = vpack.c.bf16 %v2477, %v2469
    %v3094 = vpack.c.bf16 %v2478, %v2470
    %v3095 = vpack.c.bf16 %v2479, %v2471
    %v3096 = vpack.c.bf16 %v2480, %v2472
    %v3097 = vpack.c.bf16 %v2481, %v2473
    %v3098 = vpack.c.bf16 %v2490, %v2482
    %v3099 = vpack.c.bf16 %v2491, %v2483
    %v3100 = vpack.c.bf16 %v2492, %v2484
    %v3101 = vpack.c.bf16 %v2493, %v2485
    %v3102 = vpack.c.bf16 %v2494, %v2486
    %v3103 = vpack.c.bf16 %v2495, %v2487
    %v3104 = vpack.c.bf16 %v2496, %v2488
    %v3105 = vpack.c.bf16 %v2497, %v2489
    %v3106 = vpack.c.bf16 %v2506, %v2498
    %v3107 = vpack.c.bf16 %v2507, %v2499
    %v3108 = vpack.c.bf16 %v2508, %v2500
    %v3109 = vpack.c.bf16 %v2509, %v2501
    %v3110 = vpack.c.bf16 %v2510, %v2502
    %v3111 = vpack.c.bf16 %v2511, %v2503
    %v3112 = vpack.c.bf16 %v2512, %v2504
    %v3113 = vpack.c.bf16 %v2513, %v2505
    %v3114 = vpack.c.bf16 %v2522, %v2514
    %v3115 = vpack.c.bf16 %v2523, %v2515
    %v3116 = vpack.c.bf16 %v2524, %v2516
    %v3117 = vpack.c.bf16 %v2525, %v2517
    %v3118 = vpack.c.bf16 %v2526, %v2518
    %v3119 = vpack.c.bf16 %v2527, %v2519
    %v3120 = vpack.c.bf16 %v2528, %v2520
    %v3121 = vpack.c.bf16 %v2529, %v2521
    %v3122 = vpack.c.bf16 %v2538, %v2530
    %v3123 = vpack.c.bf16 %v2539, %v2531
    %v3124 = vpack.c.bf16 %v2540, %v2532
    %v3125 = vpack.c.bf16 %v2541, %v2533
    %v3126 = vpack.c.bf16 %v2542, %v2534
    %v3127 = vpack.c.bf16 %v2543, %v2535
    %v3128 = vpack.c.bf16 %v2544, %v2536
    %v3129 = vpack.c.bf16 %v2545, %v2537
    %v3130 = vpack.c.bf16 %v2554, %v2546
    %v3131 = vpack.c.bf16 %v2555, %v2547
    %v3132 = vpack.c.bf16 %v2556, %v2548
    %v3133 = vpack.c.bf16 %v2557, %v2549
    %v3134 = vpack.c.bf16 %v2558, %v2550
    %v3135 = vpack.c.bf16 %v2559, %v2551
    %v3136 = vpack.c.bf16 %v2560, %v2552
    %v3137 = vpack.c.bf16 %v2561, %v2553
    %v3138 = vpack.c.bf16 %v2570, %v2562
    %v3139 = vpack.c.bf16 %v2571, %v2563
    %v3140 = vpack.c.bf16 %v2572, %v2564
    %v3141 = vpack.c.bf16 %v2573, %v2565
    %v3142 = vpack.c.bf16 %v2574, %v2566
    %v3143 = vpack.c.bf16 %v2575, %v2567
    %v3144 = vpack.c.bf16 %v2576, %v2568
    %v3145 = vpack.c.bf16 %v2577, %v2569
    %v3146 = vpack.c.bf16 %v2586, %v2578
    %v3147 = vpack.c.bf16 %v2587, %v2579
    %v3148 = vpack.c.bf16 %v2588, %v2580
    %v3149 = vpack.c.bf16 %v2589, %v2581
    %v3150 = vpack.c.bf16 %v2590, %v2582
    %v3151 = vpack.c.bf16 %v2591, %v2583
    %v3152 = vpack.c.bf16 %v2592, %v2584
    %v3153 = vpack.c.bf16 %v2593, %v2585
    %v3154 = vpack.c.bf16 %v2602, %v2594
    %v3155 = vpack.c.bf16 %v2603, %v2595
    %v3156 = vpack.c.bf16 %v2604, %v2596
    %v3157 = vpack.c.bf16 %v2605, %v2597
    %v3158 = vpack.c.bf16 %v2606, %v2598
    %v3159 = vpack.c.bf16 %v2607, %v2599
    %v3160 = vpack.c.bf16 %v2608, %v2600
    %v3161 = vpack.c.bf16 %v2609, %v2601
    %v3162 = vpack.c.bf16 %v2618, %v2610
    %v3163 = vpack.c.bf16 %v2619, %v2611
    %v3164 = vpack.c.bf16 %v2620, %v2612
    %v3165 = vpack.c.bf16 %v2621, %v2613
    %v3166 = vpack.c.bf16 %v2622, %v2614
    %v3167 = vpack.c.bf16 %v2623, %v2615
    %v3168 = vpack.c.bf16 %v2624, %v2616
    %v3169 = vpack.c.bf16 %v2625, %v2617
    %v3170 = vpack.c.bf16 %v2634, %v2626
    %v3171 = vpack.c.bf16 %v2635, %v2627
    %v3172 = vpack.c.bf16 %v2636, %v2628
    %v3173 = vpack.c.bf16 %v2637, %v2629
    %v3174 = vpack.c.bf16 %v2638, %v2630
    %v3175 = vpack.c.bf16 %v2639, %v2631
    %v3176 = vpack.c.bf16 %v2640, %v2632
    %v3177 = vpack.c.bf16 %v2641, %v2633
    %v3178 = vpack.c.bf16 %v2650, %v2642
    %v3179 = vpack.c.bf16 %v2651, %v2643
    %v3180 = vpack.c.bf16 %v2652, %v2644
    %v3181 = vpack.c.bf16 %v2653, %v2645
    %v3182 = vpack.c.bf16 %v2654, %v2646
    %v3183 = vpack.c.bf16 %v2655, %v2647
    %v3184 = vpack.c.bf16 %v2656, %v2648
    %v3185 = vpack.c.bf16 %v2657, %v2649
    %v3186 = vpack.c.bf16 %v2666, %v2658
    %v3187 = vpack.c.bf16 %v2667, %v2659
    %v3188 = vpack.c.bf16 %v2668, %v2660
    %v3189 = vpack.c.bf16 %v2669, %v2661
    %v3190 = vpack.c.bf16 %v2670, %v2662
    %v3191 = vpack.c.bf16 %v2671, %v2663
    %v3192 = vpack.c.bf16 %v2672, %v2664
    %v3193 = vpack.c.bf16 %v2673, %v2665
    %v3194 = vpack.c.bf16 %v2682, %v2674
    %v3195 = vpack.c.bf16 %v2683, %v2675
    %v3196 = vpack.c.bf16 %v2684, %v2676
    %v3197 = vpack.c.bf16 %v2685, %v2677
    %v3198 = vpack.c.bf16 %v2686, %v2678
    %v3199 = vpack.c.bf16 %v2687, %v2679
    %v3200 = vpack.c.bf16 %v2688, %v2680
    %v3201 = vpack.c.bf16 %v2689, %v2681
    %v3202 = vpack.c.bf16 %v378, %v370
    %v3203 = vpack.c.bf16 %v379, %v371
    %v3204 = vpack.c.bf16 %v380, %v372
    %v3205 = vpack.c.bf16 %v381, %v373
    %v3206 = vpack.c.bf16 %v382, %v374
    %v3207 = vpack.c.bf16 %v383, %v375
    %v3208 = vpack.c.bf16 %v384, %v376
    %v3209 = vpack.c.bf16 %v385, %v377
    %3210 = vmatpush.bf16.msra.mxu0 %v2746
    %3211 = vmatpush.bf16.msra.mxu0 %v2738
    %3212 = vmatpush.bf16.msra.mxu0 %v2730
    %3213 = vmatpush.bf16.msra.mxu0 %v2722
    %3214 = vmatpush.bf16.msra.mxu0 %v2714
    %3215 = vmatpush.bf16.msra.mxu0 %v2706
    %3216 = vmatpush.bf16.msra.mxu0 %v2698
    %3217 = vmatpush.bf16.msra.mxu0 %v2690
    %3218 = vmatmul.bf16.gmra.mxu0 %v3202
    %v3219 = vpop.f32.mrf.mxu0
    %v3220 = vadd.f32 0.0, %v3219
    %v3221 = vpop.f32.mrf.mxu0
    %v3222 = vadd.f32 0.0, %v3221
    %3223 = vdwg.mxu0
    %3224 = vmatpush.bf16.msra.mxu0 %v2810
    %3225 = vmatpush.bf16.msra.mxu0 %v2802
    %3226 = vmatpush.bf16.msra.mxu0 %v2794
    %3227 = vmatpush.bf16.msra.mxu0 %v2786
    %3228 = vmatpush.bf16.msra.mxu0 %v2778
    %3229 = vmatpush.bf16.msra.mxu0 %v2770
    %3230 = vmatpush.bf16.msra.mxu0 %v2762
    %3231 = vmatpush.bf16.msra.mxu0 %v2754
    %3232 = vmatmul.bf16.gmra.mxu0 %v3203
    %v3233 = vpop.f32.mrf.mxu0
    %v3234 = vadd.f32 %v3220, %v3233
    %v3235 = vpop.f32.mrf.mxu0
    %v3236 = vadd.f32 %v3222, %v3235
    %3237 = vdwg.mxu0
    %3238 = vmatpush.bf16.msra.mxu0 %v2874
    %3239 = vmatpush.bf16.msra.mxu0 %v2866
    %3240 = vmatpush.bf16.msra.mxu0 %v2858
    %3241 = vmatpush.bf16.msra.mxu0 %v2850
    %3242 = vmatpush.bf16.msra.mxu0 %v2842
    %3243 = vmatpush.bf16.msra.mxu0 %v2834
    %3244 = vmatpush.bf16.msra.mxu0 %v2826
    %3245 = vmatpush.bf16.msra.mxu0 %v2818
    %3246 = vmatmul.bf16.gmra.mxu0 %v3204
    %v3247 = vpop.f32.mrf.mxu0
    %v3248 = vadd.f32 %v3234, %v3247
    %v3249 = vpop.f32.mrf.mxu0
    %v3250 = vadd.f32 %v3236, %v3249
    %3251 = vdwg.mxu0
    %3252 = vmatpush.bf16.msra.mxu0 %v2938
    %3253 = vmatpush.bf16.msra.mxu0 %v2930
    %3254 = vmatpush.bf16.msra.mxu0 %v2922
    %3255 = vmatpush.bf16.msra.mxu0 %v2914
    %3256 = vmatpush.bf16.msra.mxu0 %v2906
    %3257 = vmatpush.bf16.msra.mxu0 %v2898
    %3258 = vmatpush.bf16.msra.mxu0 %v2890
    %3259 = vmatpush.bf16.msra.mxu0 %v2882
    %3260 = vmatmul.bf16.gmra.mxu0 %v3205
    %v3261 = vpop.f32.mrf.mxu0
    %v3262 = vadd.f32 %v3248, %v3261
    %v3263 = vpop.f32.mrf.mxu0
    %v3264 = vadd.f32 %v3250, %v3263
    %3265 = vdwg.mxu0
    %3266 = vmatpush.bf16.msra.mxu0 %v3002
    %3267 = vmatpush.bf16.msra.mxu0 %v2994
    %3268 = vmatpush.bf16.msra.mxu0 %v2986
    %3269 = vmatpush.bf16.msra.mxu0 %v2978
    %3270 = vmatpush.bf16.msra.mxu0 %v2970
    %3271 = vmatpush.bf16.msra.mxu0 %v2962
    %3272 = vmatpush.bf16.msra.mxu0 %v2954
    %3273 = vmatpush.bf16.msra.mxu0 %v2946
    %3274 = vmatmul.bf16.gmra.mxu0 %v3206
    %v3275 = vpop.f32.mrf.mxu0
    %v3276 = vadd.f32 %v3262, %v3275
    %v3277 = vpop.f32.mrf.mxu0
    %v3278 = vadd.f32 %v3264, %v3277
    %3279 = vdwg.mxu0
    %3280 = vmatpush.bf16.msra.mxu0 %v3066
    %3281 = vmatpush.bf16.msra.mxu0 %v3058
    %3282 = vmatpush.bf16.msra.mxu0 %v3050
    %3283 = vmatpush.bf16.msra.mxu0 %v3042
    %3284 = vmatpush.bf16.msra.mxu0 %v3034
    %3285 = vmatpush.bf16.msra.mxu0 %v3026
    %3286 = vmatpush.bf16.msra.mxu0 %v3018
    %3287 = vmatpush.bf16.msra.mxu0 %v3010
    %3288 = vmatmul.bf16.gmra.mxu0 %v3207
    %v3289 = vpop.f32.mrf.mxu0
    %v3290 = vadd.f32 %v3276, %v3289
    %v3291 = vpop.f32.mrf.mxu0
    %v3292 = vadd.f32 %v3278, %v3291
    %3293 = vdwg.mxu0
    %3294 = vmatpush.bf16.msra.mxu0 %v3130
    %3295 = vmatpush.bf16.msra.mxu0 %v3122
    %3296 = vmatpush.bf16.msra.mxu0 %v3114
    %3297 = vmatpush.bf16.msra.mxu0 %v3106
    %3298 = vmatpush.bf16.msra.mxu0 %v3098
    %3299 = vmatpush.bf16.msra.mxu0 %v3090
    %3300 = vmatpush.bf16.msra.mxu0 %v3082
    %3301 = vmatpush.bf16.msra.mxu0 %v3074
    %3302 = vmatmul.bf16.gmra.mxu0 %v3208
    %v3303 = vpop.f32.mrf.mxu0
    %v3304 = vadd.f32 %v3290, %v3303
    %v3305 = vpop.f32.mrf.mxu0
    %v3306 = vadd.f32 %v3292, %v3305
    %3307 = vdwg.mxu0
    %3308 = vmatpush.bf16.msra.mxu0 %v3194
    %3309 = vmatpush.bf16.msra.mxu0 %v3186
    %3310 = vmatpush.bf16.msra.mxu0 %v3178
    %3311 = vmatpush.bf16.msra.mxu0 %v3170
    %3312 = vmatpush.bf16.msra.mxu0 %v3162
    %3313 = vmatpush.bf16.msra.mxu0 %v3154
    %3314 = vmatpush.bf16.msra.mxu0 %v3146
    %3315 = vmatpush.bf16.msra.mxu0 %v3138
    %3316 = vmatmul.bf16.gmra.mxu0 %v3209
    %v3317 = vpop.f32.mrf.mxu0
    %v3318 = vadd.f32 %v3304, %v3317
    %v3319 = vpop.f32.mrf.mxu0
    %v3320 = vadd.f32 %v3306, %v3319
    %3321 = vdwg.mxu0
    %3322 = vmatpush.bf16.msra.mxu0 %v2747
    %3323 = vmatpush.bf16.msra.mxu0 %v2739
    %3324 = vmatpush.bf16.msra.mxu0 %v2731
    %3325 = vmatpush.bf16.msra.mxu0 %v2723
    %3326 = vmatpush.bf16.msra.mxu0 %v2715
    %3327 = vmatpush.bf16.msra.mxu0 %v2707
    %3328 = vmatpush.bf16.msra.mxu0 %v2699
    %3329 = vmatpush.bf16.msra.mxu0 %v2691
    %3330 = vmatmul.bf16.gmra.mxu0 %v3202
    %v3331 = vpop.f32.mrf.mxu0
    %v3332 = vadd.f32 0.0, %v3331
    %v3333 = vpop.f32.mrf.mxu0
    %v3334 = vadd.f32 0.0, %v3333
    %3335 = vdwg.mxu0
    %3336 = vmatpush.bf16.msra.mxu0 %v2811
    %3337 = vmatpush.bf16.msra.mxu0 %v2803
    %3338 = vmatpush.bf16.msra.mxu0 %v2795
    %3339 = vmatpush.bf16.msra.mxu0 %v2787
    %3340 = vmatpush.bf16.msra.mxu0 %v2779
    %3341 = vmatpush.bf16.msra.mxu0 %v2771
    %3342 = vmatpush.bf16.msra.mxu0 %v2763
    %3343 = vmatpush.bf16.msra.mxu0 %v2755
    %3344 = vmatmul.bf16.gmra.mxu0 %v3203
    %v3345 = vpop.f32.mrf.mxu0
    %v3346 = vadd.f32 %v3332, %v3345
    %v3347 = vpop.f32.mrf.mxu0
    %v3348 = vadd.f32 %v3334, %v3347
    %3349 = vdwg.mxu0
    %3350 = vmatpush.bf16.msra.mxu0 %v2875
    %3351 = vmatpush.bf16.msra.mxu0 %v2867
    %3352 = vmatpush.bf16.msra.mxu0 %v2859
    %3353 = vmatpush.bf16.msra.mxu0 %v2851
    %3354 = vmatpush.bf16.msra.mxu0 %v2843
    %3355 = vmatpush.bf16.msra.mxu0 %v2835
    %3356 = vmatpush.bf16.msra.mxu0 %v2827
    %3357 = vmatpush.bf16.msra.mxu0 %v2819
    %3358 = vmatmul.bf16.gmra.mxu0 %v3204
    %v3359 = vpop.f32.mrf.mxu0
    %v3360 = vadd.f32 %v3346, %v3359
    %v3361 = vpop.f32.mrf.mxu0
    %v3362 = vadd.f32 %v3348, %v3361
    %3363 = vdwg.mxu0
    %3364 = vmatpush.bf16.msra.mxu0 %v2939
    %3365 = vmatpush.bf16.msra.mxu0 %v2931
    %3366 = vmatpush.bf16.msra.mxu0 %v2923
    %3367 = vmatpush.bf16.msra.mxu0 %v2915
    %3368 = vmatpush.bf16.msra.mxu0 %v2907
    %3369 = vmatpush.bf16.msra.mxu0 %v2899
    %3370 = vmatpush.bf16.msra.mxu0 %v2891
    %3371 = vmatpush.bf16.msra.mxu0 %v2883
    %3372 = vmatmul.bf16.gmra.mxu0 %v3205
    %v3373 = vpop.f32.mrf.mxu0
    %v3374 = vadd.f32 %v3360, %v3373
    %v3375 = vpop.f32.mrf.mxu0
    %v3376 = vadd.f32 %v3362, %v3375
    %3377 = vdwg.mxu0
    %3378 = vmatpush.bf16.msra.mxu0 %v3003
    %3379 = vmatpush.bf16.msra.mxu0 %v2995
    %3380 = vmatpush.bf16.msra.mxu0 %v2987
    %3381 = vmatpush.bf16.msra.mxu0 %v2979
    %3382 = vmatpush.bf16.msra.mxu0 %v2971
    %3383 = vmatpush.bf16.msra.mxu0 %v2963
    %3384 = vmatpush.bf16.msra.mxu0 %v2955
    %3385 = vmatpush.bf16.msra.mxu0 %v2947
    %3386 = vmatmul.bf16.gmra.mxu0 %v3206
    %v3387 = vpop.f32.mrf.mxu0
    %v3388 = vadd.f32 %v3374, %v3387
    %v3389 = vpop.f32.mrf.mxu0
    %v3390 = vadd.f32 %v3376, %v3389
    %3391 = vdwg.mxu0
    %3392 = vmatpush.bf16.msra.mxu0 %v3067
    %3393 = vmatpush.bf16.msra.mxu0 %v3059
    %3394 = vmatpush.bf16.msra.mxu0 %v3051
    %3395 = vmatpush.bf16.msra.mxu0 %v3043
    %3396 = vmatpush.bf16.msra.mxu0 %v3035
    %3397 = vmatpush.bf16.msra.mxu0 %v3027
    %3398 = vmatpush.bf16.msra.mxu0 %v3019
    %3399 = vmatpush.bf16.msra.mxu0 %v3011
    %3400 = vmatmul.bf16.gmra.mxu0 %v3207
    %v3401 = vpop.f32.mrf.mxu0
    %v3402 = vadd.f32 %v3388, %v3401
    %v3403 = vpop.f32.mrf.mxu0
    %v3404 = vadd.f32 %v3390, %v3403
    %3405 = vdwg.mxu0
    %3406 = vmatpush.bf16.msra.mxu0 %v3131
    %3407 = vmatpush.bf16.msra.mxu0 %v3123
    %3408 = vmatpush.bf16.msra.mxu0 %v3115
    %3409 = vmatpush.bf16.msra.mxu0 %v3107
    %3410 = vmatpush.bf16.msra.mxu0 %v3099
    %3411 = vmatpush.bf16.msra.mxu0 %v3091
    %3412 = vmatpush.bf16.msra.mxu0 %v3083
    %3413 = vmatpush.bf16.msra.mxu0 %v3075
    %3414 = vmatmul.bf16.gmra.mxu0 %v3208
    %v3415 = vpop.f32.mrf.mxu0
    %v3416 = vadd.f32 %v3402, %v3415
    %v3417 = vpop.f32.mrf.mxu0
    %v3418 = vadd.f32 %v3404, %v3417
    %3419 = vdwg.mxu0
    %3420 = vmatpush.bf16.msra.mxu0 %v3195
    %3421 = vmatpush.bf16.msra.mxu0 %v3187
    %3422 = vmatpush.bf16.msra.mxu0 %v3179
    %3423 = vmatpush.bf16.msra.mxu0 %v3171
    %3424 = vmatpush.bf16.msra.mxu0 %v3163
    %3425 = vmatpush.bf16.msra.mxu0 %v3155
    %3426 = vmatpush.bf16.msra.mxu0 %v3147
    %3427 = vmatpush.bf16.msra.mxu0 %v3139
    %3428 = vmatmul.bf16.gmra.mxu0 %v3209
    %v3429 = vpop.f32.mrf.mxu0
    %v3430 = vadd.f32 %v3416, %v3429
    %v3431 = vpop.f32.mrf.mxu0
    %v3432 = vadd.f32 %v3418, %v3431
    %3433 = vdwg.mxu0
    %3434 = vmatpush.bf16.msra.mxu0 %v2748
    %3435 = vmatpush.bf16.msra.mxu0 %v2740
    %3436 = vmatpush.bf16.msra.mxu0 %v2732
    %3437 = vmatpush.bf16.msra.mxu0 %v2724
    %3438 = vmatpush.bf16.msra.mxu0 %v2716
    %3439 = vmatpush.bf16.msra.mxu0 %v2708
    %3440 = vmatpush.bf16.msra.mxu0 %v2700
    %3441 = vmatpush.bf16.msra.mxu0 %v2692
    %3442 = vmatmul.bf16.gmra.mxu0 %v3202
    %v3443 = vpop.f32.mrf.mxu0
    %v3444 = vadd.f32 0.0, %v3443
    %v3445 = vpop.f32.mrf.mxu0
    %v3446 = vadd.f32 0.0, %v3445
    %3447 = vdwg.mxu0
    %3448 = vmatpush.bf16.msra.mxu0 %v2812
    %3449 = vmatpush.bf16.msra.mxu0 %v2804
    %3450 = vmatpush.bf16.msra.mxu0 %v2796
    %3451 = vmatpush.bf16.msra.mxu0 %v2788
    %3452 = vmatpush.bf16.msra.mxu0 %v2780
    %3453 = vmatpush.bf16.msra.mxu0 %v2772
    %3454 = vmatpush.bf16.msra.mxu0 %v2764
    %3455 = vmatpush.bf16.msra.mxu0 %v2756
    %3456 = vmatmul.bf16.gmra.mxu0 %v3203
    %v3457 = vpop.f32.mrf.mxu0
    %v3458 = vadd.f32 %v3444, %v3457
    %v3459 = vpop.f32.mrf.mxu0
    %v3460 = vadd.f32 %v3446, %v3459
    %3461 = vdwg.mxu0
    %3462 = vmatpush.bf16.msra.mxu0 %v2876
    %3463 = vmatpush.bf16.msra.mxu0 %v2868
    %3464 = vmatpush.bf16.msra.mxu0 %v2860
    %3465 = vmatpush.bf16.msra.mxu0 %v2852
    %3466 = vmatpush.bf16.msra.mxu0 %v2844
    %3467 = vmatpush.bf16.msra.mxu0 %v2836
    %3468 = vmatpush.bf16.msra.mxu0 %v2828
    %3469 = vmatpush.bf16.msra.mxu0 %v2820
    %3470 = vmatmul.bf16.gmra.mxu0 %v3204
    %v3471 = vpop.f32.mrf.mxu0
    %v3472 = vadd.f32 %v3458, %v3471
    %v3473 = vpop.f32.mrf.mxu0
    %v3474 = vadd.f32 %v3460, %v3473
    %3475 = vdwg.mxu0
    %3476 = vmatpush.bf16.msra.mxu0 %v2940
    %3477 = vmatpush.bf16.msra.mxu0 %v2932
    %3478 = vmatpush.bf16.msra.mxu0 %v2924
    %3479 = vmatpush.bf16.msra.mxu0 %v2916
    %3480 = vmatpush.bf16.msra.mxu0 %v2908
    %3481 = vmatpush.bf16.msra.mxu0 %v2900
    %3482 = vmatpush.bf16.msra.mxu0 %v2892
    %3483 = vmatpush.bf16.msra.mxu0 %v2884
    %3484 = vmatmul.bf16.gmra.mxu0 %v3205
    %v3485 = vpop.f32.mrf.mxu0
    %v3486 = vadd.f32 %v3472, %v3485
    %v3487 = vpop.f32.mrf.mxu0
    %v3488 = vadd.f32 %v3474, %v3487
    %3489 = vdwg.mxu0
    %3490 = vmatpush.bf16.msra.mxu0 %v3004
    %3491 = vmatpush.bf16.msra.mxu0 %v2996
    %3492 = vmatpush.bf16.msra.mxu0 %v2988
    %3493 = vmatpush.bf16.msra.mxu0 %v2980
    %3494 = vmatpush.bf16.msra.mxu0 %v2972
    %3495 = vmatpush.bf16.msra.mxu0 %v2964
    %3496 = vmatpush.bf16.msra.mxu0 %v2956
    %3497 = vmatpush.bf16.msra.mxu0 %v2948
    %3498 = vmatmul.bf16.gmra.mxu0 %v3206
    %v3499 = vpop.f32.mrf.mxu0
    %v3500 = vadd.f32 %v3486, %v3499
    %v3501 = vpop.f32.mrf.mxu0
    %v3502 = vadd.f32 %v3488, %v3501
    %3503 = vdwg.mxu0
    %3504 = vmatpush.bf16.msra.mxu0 %v3068
    %3505 = vmatpush.bf16.msra.mxu0 %v3060
    %3506 = vmatpush.bf16.msra.mxu0 %v3052
    %3507 = vmatpush.bf16.msra.mxu0 %v3044
    %3508 = vmatpush.bf16.msra.mxu0 %v3036
    %3509 = vmatpush.bf16.msra.mxu0 %v3028
    %3510 = vmatpush.bf16.msra.mxu0 %v3020
    %3511 = vmatpush.bf16.msra.mxu0 %v3012
    %3512 = vmatmul.bf16.gmra.mxu0 %v3207
    %v3513 = vpop.f32.mrf.mxu0
    %v3514 = vadd.f32 %v3500, %v3513
    %v3515 = vpop.f32.mrf.mxu0
    %v3516 = vadd.f32 %v3502, %v3515
    %3517 = vdwg.mxu0
    %3518 = vmatpush.bf16.msra.mxu0 %v3132
    %3519 = vmatpush.bf16.msra.mxu0 %v3124
    %3520 = vmatpush.bf16.msra.mxu0 %v3116
    %3521 = vmatpush.bf16.msra.mxu0 %v3108
    %3522 = vmatpush.bf16.msra.mxu0 %v3100
    %3523 = vmatpush.bf16.msra.mxu0 %v3092
    %3524 = vmatpush.bf16.msra.mxu0 %v3084
    %3525 = vmatpush.bf16.msra.mxu0 %v3076
    %3526 = vmatmul.bf16.gmra.mxu0 %v3208
    %v3527 = vpop.f32.mrf.mxu0
    %v3528 = vadd.f32 %v3514, %v3527
    %v3529 = vpop.f32.mrf.mxu0
    %v3530 = vadd.f32 %v3516, %v3529
    %3531 = vdwg.mxu0
    %3532 = vmatpush.bf16.msra.mxu0 %v3196
    %3533 = vmatpush.bf16.msra.mxu0 %v3188
    %3534 = vmatpush.bf16.msra.mxu0 %v3180
    %3535 = vmatpush.bf16.msra.mxu0 %v3172
    %3536 = vmatpush.bf16.msra.mxu0 %v3164
    %3537 = vmatpush.bf16.msra.mxu0 %v3156
    %3538 = vmatpush.bf16.msra.mxu0 %v3148
    %3539 = vmatpush.bf16.msra.mxu0 %v3140
    %3540 = vmatmul.bf16.gmra.mxu0 %v3209
    %v3541 = vpop.f32.mrf.mxu0
    %v3542 = vadd.f32 %v3528, %v3541
    %v3543 = vpop.f32.mrf.mxu0
    %v3544 = vadd.f32 %v3530, %v3543
    %3545 = vdwg.mxu0
    %3546 = vmatpush.bf16.msra.mxu0 %v2749
    %3547 = vmatpush.bf16.msra.mxu0 %v2741
    %3548 = vmatpush.bf16.msra.mxu0 %v2733
    %3549 = vmatpush.bf16.msra.mxu0 %v2725
    %3550 = vmatpush.bf16.msra.mxu0 %v2717
    %3551 = vmatpush.bf16.msra.mxu0 %v2709
    %3552 = vmatpush.bf16.msra.mxu0 %v2701
    %3553 = vmatpush.bf16.msra.mxu0 %v2693
    %3554 = vmatmul.bf16.gmra.mxu0 %v3202
    %v3555 = vpop.f32.mrf.mxu0
    %v3556 = vadd.f32 0.0, %v3555
    %v3557 = vpop.f32.mrf.mxu0
    %v3558 = vadd.f32 0.0, %v3557
    %3559 = vdwg.mxu0
    %3560 = vmatpush.bf16.msra.mxu0 %v2813
    %3561 = vmatpush.bf16.msra.mxu0 %v2805
    %3562 = vmatpush.bf16.msra.mxu0 %v2797
    %3563 = vmatpush.bf16.msra.mxu0 %v2789
    %3564 = vmatpush.bf16.msra.mxu0 %v2781
    %3565 = vmatpush.bf16.msra.mxu0 %v2773
    %3566 = vmatpush.bf16.msra.mxu0 %v2765
    %3567 = vmatpush.bf16.msra.mxu0 %v2757
    %3568 = vmatmul.bf16.gmra.mxu0 %v3203
    %v3569 = vpop.f32.mrf.mxu0
    %v3570 = vadd.f32 %v3556, %v3569
    %v3571 = vpop.f32.mrf.mxu0
    %v3572 = vadd.f32 %v3558, %v3571
    %3573 = vdwg.mxu0
    %3574 = vmatpush.bf16.msra.mxu0 %v2877
    %3575 = vmatpush.bf16.msra.mxu0 %v2869
    %3576 = vmatpush.bf16.msra.mxu0 %v2861
    %3577 = vmatpush.bf16.msra.mxu0 %v2853
    %3578 = vmatpush.bf16.msra.mxu0 %v2845
    %3579 = vmatpush.bf16.msra.mxu0 %v2837
    %3580 = vmatpush.bf16.msra.mxu0 %v2829
    %3581 = vmatpush.bf16.msra.mxu0 %v2821
    %3582 = vmatmul.bf16.gmra.mxu0 %v3204
    %v3583 = vpop.f32.mrf.mxu0
    %v3584 = vadd.f32 %v3570, %v3583
    %v3585 = vpop.f32.mrf.mxu0
    %v3586 = vadd.f32 %v3572, %v3585
    %3587 = vdwg.mxu0
    %3588 = vmatpush.bf16.msra.mxu0 %v2941
    %3589 = vmatpush.bf16.msra.mxu0 %v2933
    %3590 = vmatpush.bf16.msra.mxu0 %v2925
    %3591 = vmatpush.bf16.msra.mxu0 %v2917
    %3592 = vmatpush.bf16.msra.mxu0 %v2909
    %3593 = vmatpush.bf16.msra.mxu0 %v2901
    %3594 = vmatpush.bf16.msra.mxu0 %v2893
    %3595 = vmatpush.bf16.msra.mxu0 %v2885
    %3596 = vmatmul.bf16.gmra.mxu0 %v3205
    %v3597 = vpop.f32.mrf.mxu0
    %v3598 = vadd.f32 %v3584, %v3597
    %v3599 = vpop.f32.mrf.mxu0
    %v3600 = vadd.f32 %v3586, %v3599
    %3601 = vdwg.mxu0
    %3602 = vmatpush.bf16.msra.mxu0 %v3005
    %3603 = vmatpush.bf16.msra.mxu0 %v2997
    %3604 = vmatpush.bf16.msra.mxu0 %v2989
    %3605 = vmatpush.bf16.msra.mxu0 %v2981
    %3606 = vmatpush.bf16.msra.mxu0 %v2973
    %3607 = vmatpush.bf16.msra.mxu0 %v2965
    %3608 = vmatpush.bf16.msra.mxu0 %v2957
    %3609 = vmatpush.bf16.msra.mxu0 %v2949
    %3610 = vmatmul.bf16.gmra.mxu0 %v3206
    %v3611 = vpop.f32.mrf.mxu0
    %v3612 = vadd.f32 %v3598, %v3611
    %v3613 = vpop.f32.mrf.mxu0
    %v3614 = vadd.f32 %v3600, %v3613
    %3615 = vdwg.mxu0
    %3616 = vmatpush.bf16.msra.mxu0 %v3069
    %3617 = vmatpush.bf16.msra.mxu0 %v3061
    %3618 = vmatpush.bf16.msra.mxu0 %v3053
    %3619 = vmatpush.bf16.msra.mxu0 %v3045
    %3620 = vmatpush.bf16.msra.mxu0 %v3037
    %3621 = vmatpush.bf16.msra.mxu0 %v3029
    %3622 = vmatpush.bf16.msra.mxu0 %v3021
    %3623 = vmatpush.bf16.msra.mxu0 %v3013
    %3624 = vmatmul.bf16.gmra.mxu0 %v3207
    %v3625 = vpop.f32.mrf.mxu0
    %v3626 = vadd.f32 %v3612, %v3625
    %v3627 = vpop.f32.mrf.mxu0
    %v3628 = vadd.f32 %v3614, %v3627
    %3629 = vdwg.mxu0
    %3630 = vmatpush.bf16.msra.mxu0 %v3133
    %3631 = vmatpush.bf16.msra.mxu0 %v3125
    %3632 = vmatpush.bf16.msra.mxu0 %v3117
    %3633 = vmatpush.bf16.msra.mxu0 %v3109
    %3634 = vmatpush.bf16.msra.mxu0 %v3101
    %3635 = vmatpush.bf16.msra.mxu0 %v3093
    %3636 = vmatpush.bf16.msra.mxu0 %v3085
    %3637 = vmatpush.bf16.msra.mxu0 %v3077
    %3638 = vmatmul.bf16.gmra.mxu0 %v3208
    %v3639 = vpop.f32.mrf.mxu0
    %v3640 = vadd.f32 %v3626, %v3639
    %v3641 = vpop.f32.mrf.mxu0
    %v3642 = vadd.f32 %v3628, %v3641
    %3643 = vdwg.mxu0
    %3644 = vmatpush.bf16.msra.mxu0 %v3197
    %3645 = vmatpush.bf16.msra.mxu0 %v3189
    %3646 = vmatpush.bf16.msra.mxu0 %v3181
    %3647 = vmatpush.bf16.msra.mxu0 %v3173
    %3648 = vmatpush.bf16.msra.mxu0 %v3165
    %3649 = vmatpush.bf16.msra.mxu0 %v3157
    %3650 = vmatpush.bf16.msra.mxu0 %v3149
    %3651 = vmatpush.bf16.msra.mxu0 %v3141
    %3652 = vmatmul.bf16.gmra.mxu0 %v3209
    %v3653 = vpop.f32.mrf.mxu0
    %v3654 = vadd.f32 %v3640, %v3653
    %v3655 = vpop.f32.mrf.mxu0
    %v3656 = vadd.f32 %v3642, %v3655
    %3657 = vdwg.mxu0
    %3658 = vmatpush.bf16.msra.mxu0 %v2750
    %3659 = vmatpush.bf16.msra.mxu0 %v2742
    %3660 = vmatpush.bf16.msra.mxu0 %v2734
    %3661 = vmatpush.bf16.msra.mxu0 %v2726
    %3662 = vmatpush.bf16.msra.mxu0 %v2718
    %3663 = vmatpush.bf16.msra.mxu0 %v2710
    %3664 = vmatpush.bf16.msra.mxu0 %v2702
    %3665 = vmatpush.bf16.msra.mxu0 %v2694
    %3666 = vmatmul.bf16.gmra.mxu0 %v3202
    %v3667 = vpop.f32.mrf.mxu0
    %v3668 = vadd.f32 0.0, %v3667
    %v3669 = vpop.f32.mrf.mxu0
    %v3670 = vadd.f32 0.0, %v3669
    %3671 = vdwg.mxu0
    %3672 = vmatpush.bf16.msra.mxu0 %v2814
    %3673 = vmatpush.bf16.msra.mxu0 %v2806
    %3674 = vmatpush.bf16.msra.mxu0 %v2798
    %3675 = vmatpush.bf16.msra.mxu0 %v2790
    %3676 = vmatpush.bf16.msra.mxu0 %v2782
    %3677 = vmatpush.bf16.msra.mxu0 %v2774
    %3678 = vmatpush.bf16.msra.mxu0 %v2766
    %3679 = vmatpush.bf16.msra.mxu0 %v2758
    %3680 = vmatmul.bf16.gmra.mxu0 %v3203
    %v3681 = vpop.f32.mrf.mxu0
    %v3682 = vadd.f32 %v3668, %v3681
    %v3683 = vpop.f32.mrf.mxu0
    %v3684 = vadd.f32 %v3670, %v3683
    %3685 = vdwg.mxu0
    %3686 = vmatpush.bf16.msra.mxu0 %v2878
    %3687 = vmatpush.bf16.msra.mxu0 %v2870
    %3688 = vmatpush.bf16.msra.mxu0 %v2862
    %3689 = vmatpush.bf16.msra.mxu0 %v2854
    %3690 = vmatpush.bf16.msra.mxu0 %v2846
    %3691 = vmatpush.bf16.msra.mxu0 %v2838
    %3692 = vmatpush.bf16.msra.mxu0 %v2830
    %3693 = vmatpush.bf16.msra.mxu0 %v2822
    %3694 = vmatmul.bf16.gmra.mxu0 %v3204
    %v3695 = vpop.f32.mrf.mxu0
    %v3696 = vadd.f32 %v3682, %v3695
    %v3697 = vpop.f32.mrf.mxu0
    %v3698 = vadd.f32 %v3684, %v3697
    %3699 = vdwg.mxu0
    %3700 = vmatpush.bf16.msra.mxu0 %v2942
    %3701 = vmatpush.bf16.msra.mxu0 %v2934
    %3702 = vmatpush.bf16.msra.mxu0 %v2926
    %3703 = vmatpush.bf16.msra.mxu0 %v2918
    %3704 = vmatpush.bf16.msra.mxu0 %v2910
    %3705 = vmatpush.bf16.msra.mxu0 %v2902
    %3706 = vmatpush.bf16.msra.mxu0 %v2894
    %3707 = vmatpush.bf16.msra.mxu0 %v2886
    %3708 = vmatmul.bf16.gmra.mxu0 %v3205
    %v3709 = vpop.f32.mrf.mxu0
    %v3710 = vadd.f32 %v3696, %v3709
    %v3711 = vpop.f32.mrf.mxu0
    %v3712 = vadd.f32 %v3698, %v3711
    %3713 = vdwg.mxu0
    %3714 = vmatpush.bf16.msra.mxu0 %v3006
    %3715 = vmatpush.bf16.msra.mxu0 %v2998
    %3716 = vmatpush.bf16.msra.mxu0 %v2990
    %3717 = vmatpush.bf16.msra.mxu0 %v2982
    %3718 = vmatpush.bf16.msra.mxu0 %v2974
    %3719 = vmatpush.bf16.msra.mxu0 %v2966
    %3720 = vmatpush.bf16.msra.mxu0 %v2958
    %3721 = vmatpush.bf16.msra.mxu0 %v2950
    %3722 = vmatmul.bf16.gmra.mxu0 %v3206
    %v3723 = vpop.f32.mrf.mxu0
    %v3724 = vadd.f32 %v3710, %v3723
    %v3725 = vpop.f32.mrf.mxu0
    %v3726 = vadd.f32 %v3712, %v3725
    %3727 = vdwg.mxu0
    %3728 = vmatpush.bf16.msra.mxu0 %v3070
    %3729 = vmatpush.bf16.msra.mxu0 %v3062
    %3730 = vmatpush.bf16.msra.mxu0 %v3054
    %3731 = vmatpush.bf16.msra.mxu0 %v3046
    %3732 = vmatpush.bf16.msra.mxu0 %v3038
    %3733 = vmatpush.bf16.msra.mxu0 %v3030
    %3734 = vmatpush.bf16.msra.mxu0 %v3022
    %3735 = vmatpush.bf16.msra.mxu0 %v3014
    %3736 = vmatmul.bf16.gmra.mxu0 %v3207
    %v3737 = vpop.f32.mrf.mxu0
    %v3738 = vadd.f32 %v3724, %v3737
    %v3739 = vpop.f32.mrf.mxu0
    %v3740 = vadd.f32 %v3726, %v3739
    %3741 = vdwg.mxu0
    %3742 = vmatpush.bf16.msra.mxu0 %v3134
    %3743 = vmatpush.bf16.msra.mxu0 %v3126
    %3744 = vmatpush.bf16.msra.mxu0 %v3118
    %3745 = vmatpush.bf16.msra.mxu0 %v3110
    %3746 = vmatpush.bf16.msra.mxu0 %v3102
    %3747 = vmatpush.bf16.msra.mxu0 %v3094
    %3748 = vmatpush.bf16.msra.mxu0 %v3086
    %3749 = vmatpush.bf16.msra.mxu0 %v3078
    %3750 = vmatmul.bf16.gmra.mxu0 %v3208
    %v3751 = vpop.f32.mrf.mxu0
    %v3752 = vadd.f32 %v3738, %v3751
    %v3753 = vpop.f32.mrf.mxu0
    %v3754 = vadd.f32 %v3740, %v3753
    %3755 = vdwg.mxu0
    %3756 = vmatpush.bf16.msra.mxu0 %v3198
    %3757 = vmatpush.bf16.msra.mxu0 %v3190
    %3758 = vmatpush.bf16.msra.mxu0 %v3182
    %3759 = vmatpush.bf16.msra.mxu0 %v3174
    %3760 = vmatpush.bf16.msra.mxu0 %v3166
    %3761 = vmatpush.bf16.msra.mxu0 %v3158
    %3762 = vmatpush.bf16.msra.mxu0 %v3150
    %3763 = vmatpush.bf16.msra.mxu0 %v3142
    %3764 = vmatmul.bf16.gmra.mxu0 %v3209
    %v3765 = vpop.f32.mrf.mxu0
    %v3766 = vadd.f32 %v3752, %v3765
    %v3767 = vpop.f32.mrf.mxu0
    %v3768 = vadd.f32 %v3754, %v3767
    %3769 = vdwg.mxu0
    %3770 = vmatpush.bf16.msra.mxu0 %v2751
    %3771 = vmatpush.bf16.msra.mxu0 %v2743
    %3772 = vmatpush.bf16.msra.mxu0 %v2735
    %3773 = vmatpush.bf16.msra.mxu0 %v2727
    %3774 = vmatpush.bf16.msra.mxu0 %v2719
    %3775 = vmatpush.bf16.msra.mxu0 %v2711
    %3776 = vmatpush.bf16.msra.mxu0 %v2703
    %3777 = vmatpush.bf16.msra.mxu0 %v2695
    %3778 = vmatmul.bf16.gmra.mxu0 %v3202
    %v3779 = vpop.f32.mrf.mxu0
    %v3780 = vadd.f32 0.0, %v3779
    %v3781 = vpop.f32.mrf.mxu0
    %v3782 = vadd.f32 0.0, %v3781
    %3783 = vdwg.mxu0
    %3784 = vmatpush.bf16.msra.mxu0 %v2815
    %3785 = vmatpush.bf16.msra.mxu0 %v2807
    %3786 = vmatpush.bf16.msra.mxu0 %v2799
    %3787 = vmatpush.bf16.msra.mxu0 %v2791
    %3788 = vmatpush.bf16.msra.mxu0 %v2783
    %3789 = vmatpush.bf16.msra.mxu0 %v2775
    %3790 = vmatpush.bf16.msra.mxu0 %v2767
    %3791 = vmatpush.bf16.msra.mxu0 %v2759
    %3792 = vmatmul.bf16.gmra.mxu0 %v3203
    %v3793 = vpop.f32.mrf.mxu0
    %v3794 = vadd.f32 %v3780, %v3793
    %v3795 = vpop.f32.mrf.mxu0
    %v3796 = vadd.f32 %v3782, %v3795
    %3797 = vdwg.mxu0
    %3798 = vmatpush.bf16.msra.mxu0 %v2879
    %3799 = vmatpush.bf16.msra.mxu0 %v2871
    %3800 = vmatpush.bf16.msra.mxu0 %v2863
    %3801 = vmatpush.bf16.msra.mxu0 %v2855
    %3802 = vmatpush.bf16.msra.mxu0 %v2847
    %3803 = vmatpush.bf16.msra.mxu0 %v2839
    %3804 = vmatpush.bf16.msra.mxu0 %v2831
    %3805 = vmatpush.bf16.msra.mxu0 %v2823
    %3806 = vmatmul.bf16.gmra.mxu0 %v3204
    %v3807 = vpop.f32.mrf.mxu0
    %v3808 = vadd.f32 %v3794, %v3807
    %v3809 = vpop.f32.mrf.mxu0
    %v3810 = vadd.f32 %v3796, %v3809
    %3811 = vdwg.mxu0
    %3812 = vmatpush.bf16.msra.mxu0 %v2943
    %3813 = vmatpush.bf16.msra.mxu0 %v2935
    %3814 = vmatpush.bf16.msra.mxu0 %v2927
    %3815 = vmatpush.bf16.msra.mxu0 %v2919
    %3816 = vmatpush.bf16.msra.mxu0 %v2911
    %3817 = vmatpush.bf16.msra.mxu0 %v2903
    %3818 = vmatpush.bf16.msra.mxu0 %v2895
    %3819 = vmatpush.bf16.msra.mxu0 %v2887
    %3820 = vmatmul.bf16.gmra.mxu0 %v3205
    %v3821 = vpop.f32.mrf.mxu0
    %v3822 = vadd.f32 %v3808, %v3821
    %v3823 = vpop.f32.mrf.mxu0
    %v3824 = vadd.f32 %v3810, %v3823
    %3825 = vdwg.mxu0
    %3826 = vmatpush.bf16.msra.mxu0 %v3007
    %3827 = vmatpush.bf16.msra.mxu0 %v2999
    %3828 = vmatpush.bf16.msra.mxu0 %v2991
    %3829 = vmatpush.bf16.msra.mxu0 %v2983
    %3830 = vmatpush.bf16.msra.mxu0 %v2975
    %3831 = vmatpush.bf16.msra.mxu0 %v2967
    %3832 = vmatpush.bf16.msra.mxu0 %v2959
    %3833 = vmatpush.bf16.msra.mxu0 %v2951
    %3834 = vmatmul.bf16.gmra.mxu0 %v3206
    %v3835 = vpop.f32.mrf.mxu0
    %v3836 = vadd.f32 %v3822, %v3835
    %v3837 = vpop.f32.mrf.mxu0
    %v3838 = vadd.f32 %v3824, %v3837
    %3839 = vdwg.mxu0
    %3840 = vmatpush.bf16.msra.mxu0 %v3071
    %3841 = vmatpush.bf16.msra.mxu0 %v3063
    %3842 = vmatpush.bf16.msra.mxu0 %v3055
    %3843 = vmatpush.bf16.msra.mxu0 %v3047
    %3844 = vmatpush.bf16.msra.mxu0 %v3039
    %3845 = vmatpush.bf16.msra.mxu0 %v3031
    %3846 = vmatpush.bf16.msra.mxu0 %v3023
    %3847 = vmatpush.bf16.msra.mxu0 %v3015
    %3848 = vmatmul.bf16.gmra.mxu0 %v3207
    %v3849 = vpop.f32.mrf.mxu0
    %v3850 = vadd.f32 %v3836, %v3849
    %v3851 = vpop.f32.mrf.mxu0
    %v3852 = vadd.f32 %v3838, %v3851
    %3853 = vdwg.mxu0
    %3854 = vmatpush.bf16.msra.mxu0 %v3135
    %3855 = vmatpush.bf16.msra.mxu0 %v3127
    %3856 = vmatpush.bf16.msra.mxu0 %v3119
    %3857 = vmatpush.bf16.msra.mxu0 %v3111
    %3858 = vmatpush.bf16.msra.mxu0 %v3103
    %3859 = vmatpush.bf16.msra.mxu0 %v3095
    %3860 = vmatpush.bf16.msra.mxu0 %v3087
    %3861 = vmatpush.bf16.msra.mxu0 %v3079
    %3862 = vmatmul.bf16.gmra.mxu0 %v3208
    %v3863 = vpop.f32.mrf.mxu0
    %v3864 = vadd.f32 %v3850, %v3863
    %v3865 = vpop.f32.mrf.mxu0
    %v3866 = vadd.f32 %v3852, %v3865
    %3867 = vdwg.mxu0
    %3868 = vmatpush.bf16.msra.mxu0 %v3199
    %3869 = vmatpush.bf16.msra.mxu0 %v3191
    %3870 = vmatpush.bf16.msra.mxu0 %v3183
    %3871 = vmatpush.bf16.msra.mxu0 %v3175
    %3872 = vmatpush.bf16.msra.mxu0 %v3167
    %3873 = vmatpush.bf16.msra.mxu0 %v3159
    %3874 = vmatpush.bf16.msra.mxu0 %v3151
    %3875 = vmatpush.bf16.msra.mxu0 %v3143
    %3876 = vmatmul.bf16.gmra.mxu0 %v3209
    %v3877 = vpop.f32.mrf.mxu0
    %v3878 = vadd.f32 %v3864, %v3877
    %v3879 = vpop.f32.mrf.mxu0
    %v3880 = vadd.f32 %v3866, %v3879
    %3881 = vdwg.mxu0
    %3882 = vmatpush.bf16.msra.mxu0 %v2752
    %3883 = vmatpush.bf16.msra.mxu0 %v2744
    %3884 = vmatpush.bf16.msra.mxu0 %v2736
    %3885 = vmatpush.bf16.msra.mxu0 %v2728
    %3886 = vmatpush.bf16.msra.mxu0 %v2720
    %3887 = vmatpush.bf16.msra.mxu0 %v2712
    %3888 = vmatpush.bf16.msra.mxu0 %v2704
    %3889 = vmatpush.bf16.msra.mxu0 %v2696
    %3890 = vmatmul.bf16.gmra.mxu0 %v3202
    %v3891 = vpop.f32.mrf.mxu0
    %v3892 = vadd.f32 0.0, %v3891
    %v3893 = vpop.f32.mrf.mxu0
    %v3894 = vadd.f32 0.0, %v3893
    %3895 = vdwg.mxu0
    %3896 = vmatpush.bf16.msra.mxu0 %v2816
    %3897 = vmatpush.bf16.msra.mxu0 %v2808
    %3898 = vmatpush.bf16.msra.mxu0 %v2800
    %3899 = vmatpush.bf16.msra.mxu0 %v2792
    %3900 = vmatpush.bf16.msra.mxu0 %v2784
    %3901 = vmatpush.bf16.msra.mxu0 %v2776
    %3902 = vmatpush.bf16.msra.mxu0 %v2768
    %3903 = vmatpush.bf16.msra.mxu0 %v2760
    %3904 = vmatmul.bf16.gmra.mxu0 %v3203
    %v3905 = vpop.f32.mrf.mxu0
    %v3906 = vadd.f32 %v3892, %v3905
    %v3907 = vpop.f32.mrf.mxu0
    %v3908 = vadd.f32 %v3894, %v3907
    %3909 = vdwg.mxu0
    %3910 = vmatpush.bf16.msra.mxu0 %v2880
    %3911 = vmatpush.bf16.msra.mxu0 %v2872
    %3912 = vmatpush.bf16.msra.mxu0 %v2864
    %3913 = vmatpush.bf16.msra.mxu0 %v2856
    %3914 = vmatpush.bf16.msra.mxu0 %v2848
    %3915 = vmatpush.bf16.msra.mxu0 %v2840
    %3916 = vmatpush.bf16.msra.mxu0 %v2832
    %3917 = vmatpush.bf16.msra.mxu0 %v2824
    %3918 = vmatmul.bf16.gmra.mxu0 %v3204
    %v3919 = vpop.f32.mrf.mxu0
    %v3920 = vadd.f32 %v3906, %v3919
    %v3921 = vpop.f32.mrf.mxu0
    %v3922 = vadd.f32 %v3908, %v3921
    %3923 = vdwg.mxu0
    %3924 = vmatpush.bf16.msra.mxu0 %v2944
    %3925 = vmatpush.bf16.msra.mxu0 %v2936
    %3926 = vmatpush.bf16.msra.mxu0 %v2928
    %3927 = vmatpush.bf16.msra.mxu0 %v2920
    %3928 = vmatpush.bf16.msra.mxu0 %v2912
    %3929 = vmatpush.bf16.msra.mxu0 %v2904
    %3930 = vmatpush.bf16.msra.mxu0 %v2896
    %3931 = vmatpush.bf16.msra.mxu0 %v2888
    %3932 = vmatmul.bf16.gmra.mxu0 %v3205
    %v3933 = vpop.f32.mrf.mxu0
    %v3934 = vadd.f32 %v3920, %v3933
    %v3935 = vpop.f32.mrf.mxu0
    %v3936 = vadd.f32 %v3922, %v3935
    %3937 = vdwg.mxu0
    %3938 = vmatpush.bf16.msra.mxu0 %v3008
    %3939 = vmatpush.bf16.msra.mxu0 %v3000
    %3940 = vmatpush.bf16.msra.mxu0 %v2992
    %3941 = vmatpush.bf16.msra.mxu0 %v2984
    %3942 = vmatpush.bf16.msra.mxu0 %v2976
    %3943 = vmatpush.bf16.msra.mxu0 %v2968
    %3944 = vmatpush.bf16.msra.mxu0 %v2960
    %3945 = vmatpush.bf16.msra.mxu0 %v2952
    %3946 = vmatmul.bf16.gmra.mxu0 %v3206
    %v3947 = vpop.f32.mrf.mxu0
    %v3948 = vadd.f32 %v3934, %v3947
    %v3949 = vpop.f32.mrf.mxu0
    %v3950 = vadd.f32 %v3936, %v3949
    %3951 = vdwg.mxu0
    %3952 = vmatpush.bf16.msra.mxu0 %v3072
    %3953 = vmatpush.bf16.msra.mxu0 %v3064
    %3954 = vmatpush.bf16.msra.mxu0 %v3056
    %3955 = vmatpush.bf16.msra.mxu0 %v3048
    %3956 = vmatpush.bf16.msra.mxu0 %v3040
    %3957 = vmatpush.bf16.msra.mxu0 %v3032
    %3958 = vmatpush.bf16.msra.mxu0 %v3024
    %3959 = vmatpush.bf16.msra.mxu0 %v3016
    %3960 = vmatmul.bf16.gmra.mxu0 %v3207
    %v3961 = vpop.f32.mrf.mxu0
    %v3962 = vadd.f32 %v3948, %v3961
    %v3963 = vpop.f32.mrf.mxu0
    %v3964 = vadd.f32 %v3950, %v3963
    %3965 = vdwg.mxu0
    %3966 = vmatpush.bf16.msra.mxu0 %v3136
    %3967 = vmatpush.bf16.msra.mxu0 %v3128
    %3968 = vmatpush.bf16.msra.mxu0 %v3120
    %3969 = vmatpush.bf16.msra.mxu0 %v3112
    %3970 = vmatpush.bf16.msra.mxu0 %v3104
    %3971 = vmatpush.bf16.msra.mxu0 %v3096
    %3972 = vmatpush.bf16.msra.mxu0 %v3088
    %3973 = vmatpush.bf16.msra.mxu0 %v3080
    %3974 = vmatmul.bf16.gmra.mxu0 %v3208
    %v3975 = vpop.f32.mrf.mxu0
    %v3976 = vadd.f32 %v3962, %v3975
    %v3977 = vpop.f32.mrf.mxu0
    %v3978 = vadd.f32 %v3964, %v3977
    %3979 = vdwg.mxu0
    %3980 = vmatpush.bf16.msra.mxu0 %v3200
    %3981 = vmatpush.bf16.msra.mxu0 %v3192
    %3982 = vmatpush.bf16.msra.mxu0 %v3184
    %3983 = vmatpush.bf16.msra.mxu0 %v3176
    %3984 = vmatpush.bf16.msra.mxu0 %v3168
    %3985 = vmatpush.bf16.msra.mxu0 %v3160
    %3986 = vmatpush.bf16.msra.mxu0 %v3152
    %3987 = vmatpush.bf16.msra.mxu0 %v3144
    %3988 = vmatmul.bf16.gmra.mxu0 %v3209
    %v3989 = vpop.f32.mrf.mxu0
    %v3990 = vadd.f32 %v3976, %v3989
    %v3991 = vpop.f32.mrf.mxu0
    %v3992 = vadd.f32 %v3978, %v3991
    %3993 = vdwg.mxu0
    %3994 = vmatpush.bf16.msra.mxu0 %v2753
    %3995 = vmatpush.bf16.msra.mxu0 %v2745
    %3996 = vmatpush.bf16.msra.mxu0 %v2737
    %3997 = vmatpush.bf16.msra.mxu0 %v2729
    %3998 = vmatpush.bf16.msra.mxu0 %v2721
    %3999 = vmatpush.bf16.msra.mxu0 %v2713
    %4000 = vmatpush.bf16.msra.mxu0 %v2705
    %4001 = vmatpush.bf16.msra.mxu0 %v2697
    %4002 = vmatmul.bf16.gmra.mxu0 %v3202
    %v4003 = vpop.f32.mrf.mxu0
    %v4004 = vadd.f32 0.0, %v4003
    %v4005 = vpop.f32.mrf.mxu0
    %v4006 = vadd.f32 0.0, %v4005
    %4007 = vdwg.mxu0
    %4008 = vmatpush.bf16.msra.mxu0 %v2817
    %4009 = vmatpush.bf16.msra.mxu0 %v2809
    %4010 = vmatpush.bf16.msra.mxu0 %v2801
    %4011 = vmatpush.bf16.msra.mxu0 %v2793
    %4012 = vmatpush.bf16.msra.mxu0 %v2785
    %4013 = vmatpush.bf16.msra.mxu0 %v2777
    %4014 = vmatpush.bf16.msra.mxu0 %v2769
    %4015 = vmatpush.bf16.msra.mxu0 %v2761
    %4016 = vmatmul.bf16.gmra.mxu0 %v3203
    %v4017 = vpop.f32.mrf.mxu0
    %v4018 = vadd.f32 %v4004, %v4017
    %v4019 = vpop.f32.mrf.mxu0
    %v4020 = vadd.f32 %v4006, %v4019
    %4021 = vdwg.mxu0
    %4022 = vmatpush.bf16.msra.mxu0 %v2881
    %4023 = vmatpush.bf16.msra.mxu0 %v2873
    %4024 = vmatpush.bf16.msra.mxu0 %v2865
    %4025 = vmatpush.bf16.msra.mxu0 %v2857
    %4026 = vmatpush.bf16.msra.mxu0 %v2849
    %4027 = vmatpush.bf16.msra.mxu0 %v2841
    %4028 = vmatpush.bf16.msra.mxu0 %v2833
    %4029 = vmatpush.bf16.msra.mxu0 %v2825
    %4030 = vmatmul.bf16.gmra.mxu0 %v3204
    %v4031 = vpop.f32.mrf.mxu0
    %v4032 = vadd.f32 %v4018, %v4031
    %v4033 = vpop.f32.mrf.mxu0
    %v4034 = vadd.f32 %v4020, %v4033
    %4035 = vdwg.mxu0
    %4036 = vmatpush.bf16.msra.mxu0 %v2945
    %4037 = vmatpush.bf16.msra.mxu0 %v2937
    %4038 = vmatpush.bf16.msra.mxu0 %v2929
    %4039 = vmatpush.bf16.msra.mxu0 %v2921
    %4040 = vmatpush.bf16.msra.mxu0 %v2913
    %4041 = vmatpush.bf16.msra.mxu0 %v2905
    %4042 = vmatpush.bf16.msra.mxu0 %v2897
    %4043 = vmatpush.bf16.msra.mxu0 %v2889
    %4044 = vmatmul.bf16.gmra.mxu0 %v3205
    %v4045 = vpop.f32.mrf.mxu0
    %v4046 = vadd.f32 %v4032, %v4045
    %v4047 = vpop.f32.mrf.mxu0
    %v4048 = vadd.f32 %v4034, %v4047
    %4049 = vdwg.mxu0
    %4050 = vmatpush.bf16.msra.mxu0 %v3009
    %4051 = vmatpush.bf16.msra.mxu0 %v3001
    %4052 = vmatpush.bf16.msra.mxu0 %v2993
    %4053 = vmatpush.bf16.msra.mxu0 %v2985
    %4054 = vmatpush.bf16.msra.mxu0 %v2977
    %4055 = vmatpush.bf16.msra.mxu0 %v2969
    %4056 = vmatpush.bf16.msra.mxu0 %v2961
    %4057 = vmatpush.bf16.msra.mxu0 %v2953
    %4058 = vmatmul.bf16.gmra.mxu0 %v3206
    %v4059 = vpop.f32.mrf.mxu0
    %v4060 = vadd.f32 %v4046, %v4059
    %v4061 = vpop.f32.mrf.mxu0
    %v4062 = vadd.f32 %v4048, %v4061
    %4063 = vdwg.mxu0
    %4064 = vmatpush.bf16.msra.mxu0 %v3073
    %4065 = vmatpush.bf16.msra.mxu0 %v3065
    %4066 = vmatpush.bf16.msra.mxu0 %v3057
    %4067 = vmatpush.bf16.msra.mxu0 %v3049
    %4068 = vmatpush.bf16.msra.mxu0 %v3041
    %4069 = vmatpush.bf16.msra.mxu0 %v3033
    %4070 = vmatpush.bf16.msra.mxu0 %v3025
    %4071 = vmatpush.bf16.msra.mxu0 %v3017
    %4072 = vmatmul.bf16.gmra.mxu0 %v3207
    %v4073 = vpop.f32.mrf.mxu0
    %v4074 = vadd.f32 %v4060, %v4073
    %v4075 = vpop.f32.mrf.mxu0
    %v4076 = vadd.f32 %v4062, %v4075
    %4077 = vdwg.mxu0
    %4078 = vmatpush.bf16.msra.mxu0 %v3137
    %4079 = vmatpush.bf16.msra.mxu0 %v3129
    %4080 = vmatpush.bf16.msra.mxu0 %v3121
    %4081 = vmatpush.bf16.msra.mxu0 %v3113
    %4082 = vmatpush.bf16.msra.mxu0 %v3105
    %4083 = vmatpush.bf16.msra.mxu0 %v3097
    %4084 = vmatpush.bf16.msra.mxu0 %v3089
    %4085 = vmatpush.bf16.msra.mxu0 %v3081
    %4086 = vmatmul.bf16.gmra.mxu0 %v3208
    %v4087 = vpop.f32.mrf.mxu0
    %v4088 = vadd.f32 %v4074, %v4087
    %v4089 = vpop.f32.mrf.mxu0
    %v4090 = vadd.f32 %v4076, %v4089
    %4091 = vdwg.mxu0
    %4092 = vmatpush.bf16.msra.mxu0 %v3201
    %4093 = vmatpush.bf16.msra.mxu0 %v3193
    %4094 = vmatpush.bf16.msra.mxu0 %v3185
    %4095 = vmatpush.bf16.msra.mxu0 %v3177
    %4096 = vmatpush.bf16.msra.mxu0 %v3169
    %4097 = vmatpush.bf16.msra.mxu0 %v3161
    %4098 = vmatpush.bf16.msra.mxu0 %v3153
    %4099 = vmatpush.bf16.msra.mxu0 %v3145
    %4100 = vmatmul.bf16.gmra.mxu0 %v3209
    %v4101 = vpop.f32.mrf.mxu0
    %v4102 = vadd.f32 %v4088, %v4101
    %v4103 = vpop.f32.mrf.mxu0
    %v4104 = vadd.f32 %v4090, %v4103
    %4105 = vdwg.mxu0
    %v4106 = vld [vmem:[#allocation10] sm:$0xff]
    %v4108 = vperm.slane %v4106, 0
    %v4109 = vperm.slane %v4106, 1
    %v4110 = vperm.slane %v4106, 2
    %v4111 = vperm.slane %v4106, 3
    %v4112 = vperm.slane %v4106, 4
    %v4113 = vperm.slane %v4106, 5
    %v4114 = vperm.slane %v4106, 6
    %v4115 = vperm.slane %v4106, 7
    %v4124 = vmul.f32 %v3318, %v4108
    %v4125 = vmul.f32 %v3430, %v4109
    %v4126 = vmul.f32 %v3542, %v4110
    %v4127 = vmul.f32 %v3654, %v4111
    %v4128 = vmul.f32 %v3766, %v4112
    %v4129 = vmul.f32 %v3878, %v4113
    %v4130 = vmul.f32 %v3990, %v4114
    %v4131 = vmul.f32 %v4102, %v4115
    %v4132 = vmul.f32 %v3320, %v4108
    %v4133 = vmul.f32 %v3432, %v4109
    %v4134 = vmul.f32 %v3544, %v4110
    %v4135 = vmul.f32 %v3656, %v4111
    %v4136 = vmul.f32 %v3768, %v4112
    %v4137 = vmul.f32 %v3880, %v4113
    %v4138 = vmul.f32 %v3992, %v4114
    %v4139 = vmul.f32 %v4104, %v4115
    %v4140 = vld [vmem:[#allocation11] sm:$0xff]
    %v4142 = vperm.slane %v4140, 0
    %v4143 = vperm.slane %v4140, 1
    %v4144 = vperm.slane %v4140, 2
    %v4145 = vperm.slane %v4140, 3
    %v4146 = vperm.slane %v4140, 4
    %v4147 = vperm.slane %v4140, 5
    %v4148 = vperm.slane %v4140, 6
    %v4149 = vperm.slane %v4140, 7
    %v4158 = vadd.f32 %v4124, %v4142
    %v4159 = vadd.f32 %v4125, %v4143
    %v4160 = vadd.f32 %v4126, %v4144
    %v4161 = vadd.f32 %v4127, %v4145
    %v4162 = vadd.f32 %v4128, %v4146
    %v4163 = vadd.f32 %v4129, %v4147
    %v4164 = vadd.f32 %v4130, %v4148
    %v4165 = vadd.f32 %v4131, %v4149
    %v4166 = vadd.f32 %v4132, %v4142
    %v4167 = vadd.f32 %v4133, %v4143
    %v4168 = vadd.f32 %v4134, %v4144
    %v4169 = vadd.f32 %v4135, %v4145
    %v4170 = vadd.f32 %v4136, %v4146
    %v4171 = vadd.f32 %v4137, %v4147
    %v4172 = vadd.f32 %v4138, %v4148
    %v4173 = vadd.f32 %v4139, %v4149
    %v4174 = vmax.f32 %v4158, 0.0
    %v4175 = vmax.f32 %v4159, 0.0
    %v4176 = vmax.f32 %v4160, 0.0
    %v4177 = vmax.f32 %v4161, 0.0
    %v4178 = vmax.f32 %v4162, 0.0
    %v4179 = vmax.f32 %v4163, 0.0
    %v4180 = vmax.f32 %v4164, 0.0
    %v4181 = vmax.f32 %v4165, 0.0
    %v4182 = vmax.f32 %v4166, 0.0
    %v4183 = vmax.f32 %v4167, 0.0
    %v4184 = vmax.f32 %v4168, 0.0
    %v4185 = vmax.f32 %v4169, 0.0
    %v4186 = vmax.f32 %v4170, 0.0
    %v4187 = vmax.f32 %v4171, 0.0
    %v4188 = vmax.f32 %v4172, 0.0
    %v4189 = vmax.f32 %v4173, 0.0
    %v4190 = vpack.c.bf16 %v4182, %v4174
    %v4191 = vpack.c.bf16 %v4183, %v4175
    %v4192 = vpack.c.bf16 %v4184, %v4176
    %v4193 = vpack.c.bf16 %v4185, %v4177
    %v4194 = vpack.c.bf16 %v4186, %v4178
    %v4195 = vpack.c.bf16 %v4187, %v4179
    %v4196 = vpack.c.bf16 %v4188, %v4180
    %v4197 = vpack.c.bf16 %v4189, %v4181
    %4198 = vmatpush.bf16.msra.mxu0 %v2746
    %4199 = vmatpush.bf16.msra.mxu0 %v2738
    %4200 = vmatpush.bf16.msra.mxu0 %v2730
    %4201 = vmatpush.bf16.msra.mxu0 %v2722
    %4202 = vmatpush.bf16.msra.mxu0 %v2714
    %4203 = vmatpush.bf16.msra.mxu0 %v2706
    %4204 = vmatpush.bf16.msra.mxu0 %v2698
    %4205 = vmatpush.bf16.msra.mxu0 %v2690
    %4206 = vmatmul.bf16.gmra.mxu0 %v4190
    %v4207 = vpop.f32.mrf.mxu0
    %v4208 = vadd.f32 0.0, %v4207
    %v4209 = vpop.f32.mrf.mxu0
    %v4210 = vadd.f32 0.0, %v4209
    %4211 = vdwg.mxu0
    %4212 = vmatpush.bf16.msra.mxu0 %v2810
    %4213 = vmatpush.bf16.msra.mxu0 %v2802
    %4214 = vmatpush.bf16.msra.mxu0 %v2794
    %4215 = vmatpush.bf16.msra.mxu0 %v2786
    %4216 = vmatpush.bf16.msra.mxu0 %v2778
    %4217 = vmatpush.bf16.msra.mxu0 %v2770
    %4218 = vmatpush.bf16.msra.mxu0 %v2762
    %4219 = vmatpush.bf16.msra.mxu0 %v2754
    %4220 = vmatmul.bf16.gmra.mxu0 %v4191
    %v4221 = vpop.f32.mrf.mxu0
    %v4222 = vadd.f32 %v4208, %v4221
    %v4223 = vpop.f32.mrf.mxu0
    %v4224 = vadd.f32 %v4210, %v4223
    %4225 = vdwg.mxu0
    %4226 = vmatpush.bf16.msra.mxu0 %v2874
    %4227 = vmatpush.bf16.msra.mxu0 %v2866
    %4228 = vmatpush.bf16.msra.mxu0 %v2858
    %4229 = vmatpush.bf16.msra.mxu0 %v2850
    %4230 = vmatpush.bf16.msra.mxu0 %v2842
    %4231 = vmatpush.bf16.msra.mxu0 %v2834
    %4232 = vmatpush.bf16.msra.mxu0 %v2826
    %4233 = vmatpush.bf16.msra.mxu0 %v2818
    %4234 = vmatmul.bf16.gmra.mxu0 %v4192
    %v4235 = vpop.f32.mrf.mxu0
    %v4236 = vadd.f32 %v4222, %v4235
    %v4237 = vpop.f32.mrf.mxu0
    %v4238 = vadd.f32 %v4224, %v4237
    %4239 = vdwg.mxu0
    %4240 = vmatpush.bf16.msra.mxu0 %v2938
    %4241 = vmatpush.bf16.msra.mxu0 %v2930
    %4242 = vmatpush.bf16.msra.mxu0 %v2922
    %4243 = vmatpush.bf16.msra.mxu0 %v2914
    %4244 = vmatpush.bf16.msra.mxu0 %v2906
    %4245 = vmatpush.bf16.msra.mxu0 %v2898
    %4246 = vmatpush.bf16.msra.mxu0 %v2890
    %4247 = vmatpush.bf16.msra.mxu0 %v2882
    %4248 = vmatmul.bf16.gmra.mxu0 %v4193
    %v4249 = vpop.f32.mrf.mxu0
    %v4250 = vadd.f32 %v4236, %v4249
    %v4251 = vpop.f32.mrf.mxu0
    %v4252 = vadd.f32 %v4238, %v4251
    %4253 = vdwg.mxu0
    %4254 = vmatpush.bf16.msra.mxu0 %v3002
    %4255 = vmatpush.bf16.msra.mxu0 %v2994
    %4256 = vmatpush.bf16.msra.mxu0 %v2986
    %4257 = vmatpush.bf16.msra.mxu0 %v2978
    %4258 = vmatpush.bf16.msra.mxu0 %v2970
    %4259 = vmatpush.bf16.msra.mxu0 %v2962
    %4260 = vmatpush.bf16.msra.mxu0 %v2954
    %4261 = vmatpush.bf16.msra.mxu0 %v2946
    %4262 = vmatmul.bf16.gmra.mxu0 %v4194
    %v4263 = vpop.f32.mrf.mxu0
    %v4264 = vadd.f32 %v4250, %v4263
    %v4265 = vpop.f32.mrf.mxu0
    %v4266 = vadd.f32 %v4252, %v4265
    %4267 = vdwg.mxu0
    %4268 = vmatpush.bf16.msra.mxu0 %v3066
    %4269 = vmatpush.bf16.msra.mxu0 %v3058
    %4270 = vmatpush.bf16.msra.mxu0 %v3050
    %4271 = vmatpush.bf16.msra.mxu0 %v3042
    %4272 = vmatpush.bf16.msra.mxu0 %v3034
    %4273 = vmatpush.bf16.msra.mxu0 %v3026
    %4274 = vmatpush.bf16.msra.mxu0 %v3018
    %4275 = vmatpush.bf16.msra.mxu0 %v3010
    %4276 = vmatmul.bf16.gmra.mxu0 %v4195
    %v4277 = vpop.f32.mrf.mxu0
    %v4278 = vadd.f32 %v4264, %v4277
    %v4279 = vpop.f32.mrf.mxu0
    %v4280 = vadd.f32 %v4266, %v4279
    %4281 = vdwg.mxu0
    %4282 = vmatpush.bf16.msra.mxu0 %v3130
    %4283 = vmatpush.bf16.msra.mxu0 %v3122
    %4284 = vmatpush.bf16.msra.mxu0 %v3114
    %4285 = vmatpush.bf16.msra.mxu0 %v3106
    %4286 = vmatpush.bf16.msra.mxu0 %v3098
    %4287 = vmatpush.bf16.msra.mxu0 %v3090
    %4288 = vmatpush.bf16.msra.mxu0 %v3082
    %4289 = vmatpush.bf16.msra.mxu0 %v3074
    %4290 = vmatmul.bf16.gmra.mxu0 %v4196
    %v4291 = vpop.f32.mrf.mxu0
    %v4292 = vadd.f32 %v4278, %v4291
    %v4293 = vpop.f32.mrf.mxu0
    %v4294 = vadd.f32 %v4280, %v4293
    %4295 = vdwg.mxu0
    %4296 = vmatpush.bf16.msra.mxu0 %v3194
    %4297 = vmatpush.bf16.msra.mxu0 %v3186
    %4298 = vmatpush.bf16.msra.mxu0 %v3178
    %4299 = vmatpush.bf16.msra.mxu0 %v3170
    %4300 = vmatpush.bf16.msra.mxu0 %v3162
    %4301 = vmatpush.bf16.msra.mxu0 %v3154
    %4302 = vmatpush.bf16.msra.mxu0 %v3146
    %4303 = vmatpush.bf16.msra.mxu0 %v3138
    %4304 = vmatmul.bf16.gmra.mxu0 %v4197
    %v4305 = vpop.f32.mrf.mxu0
    %v4306 = vadd.f32 %v4292, %v4305
    %v4307 = vpop.f32.mrf.mxu0
    %v4308 = vadd.f32 %v4294, %v4307
    %4309 = vdwg.mxu0
    %4310 = vmatpush.bf16.msra.mxu0 %v2747
    %4311 = vmatpush.bf16.msra.mxu0 %v2739
    %4312 = vmatpush.bf16.msra.mxu0 %v2731
    %4313 = vmatpush.bf16.msra.mxu0 %v2723
    %4314 = vmatpush.bf16.msra.mxu0 %v2715
    %4315 = vmatpush.bf16.msra.mxu0 %v2707
    %4316 = vmatpush.bf16.msra.mxu0 %v2699
    %4317 = vmatpush.bf16.msra.mxu0 %v2691
    %4318 = vmatmul.bf16.gmra.mxu0 %v4190
    %v4319 = vpop.f32.mrf.mxu0
    %v4320 = vadd.f32 0.0, %v4319
    %v4321 = vpop.f32.mrf.mxu0
    %v4322 = vadd.f32 0.0, %v4321
    %4323 = vdwg.mxu0
    %4324 = vmatpush.bf16.msra.mxu0 %v2811
    %4325 = vmatpush.bf16.msra.mxu0 %v2803
    %4326 = vmatpush.bf16.msra.mxu0 %v2795
    %4327 = vmatpush.bf16.msra.mxu0 %v2787
    %4328 = vmatpush.bf16.msra.mxu0 %v2779
    %4329 = vmatpush.bf16.msra.mxu0 %v2771
    %4330 = vmatpush.bf16.msra.mxu0 %v2763
    %4331 = vmatpush.bf16.msra.mxu0 %v2755
    %4332 = vmatmul.bf16.gmra.mxu0 %v4191
    %v4333 = vpop.f32.mrf.mxu0
    %v4334 = vadd.f32 %v4320, %v4333
    %v4335 = vpop.f32.mrf.mxu0
    %v4336 = vadd.f32 %v4322, %v4335
    %4337 = vdwg.mxu0
    %4338 = vmatpush.bf16.msra.mxu0 %v2875
    %4339 = vmatpush.bf16.msra.mxu0 %v2867
    %4340 = vmatpush.bf16.msra.mxu0 %v2859
    %4341 = vmatpush.bf16.msra.mxu0 %v2851
    %4342 = vmatpush.bf16.msra.mxu0 %v2843
    %4343 = vmatpush.bf16.msra.mxu0 %v2835
    %4344 = vmatpush.bf16.msra.mxu0 %v2827
    %4345 = vmatpush.bf16.msra.mxu0 %v2819
    %4346 = vmatmul.bf16.gmra.mxu0 %v4192
    %v4347 = vpop.f32.mrf.mxu0
    %v4348 = vadd.f32 %v4334, %v4347
    %v4349 = vpop.f32.mrf.mxu0
    %v4350 = vadd.f32 %v4336, %v4349
    %4351 = vdwg.mxu0
    %4352 = vmatpush.bf16.msra.mxu0 %v2939
    %4353 = vmatpush.bf16.msra.mxu0 %v2931
    %4354 = vmatpush.bf16.msra.mxu0 %v2923
    %4355 = vmatpush.bf16.msra.mxu0 %v2915
    %4356 = vmatpush.bf16.msra.mxu0 %v2907
    %4357 = vmatpush.bf16.msra.mxu0 %v2899
    %4358 = vmatpush.bf16.msra.mxu0 %v2891
    %4359 = vmatpush.bf16.msra.mxu0 %v2883
    %4360 = vmatmul.bf16.gmra.mxu0 %v4193
    %v4361 = vpop.f32.mrf.mxu0
    %v4362 = vadd.f32 %v4348, %v4361
    %v4363 = vpop.f32.mrf.mxu0
    %v4364 = vadd.f32 %v4350, %v4363
    %4365 = vdwg.mxu0
    %4366 = vmatpush.bf16.msra.mxu0 %v3003
    %4367 = vmatpush.bf16.msra.mxu0 %v2995
    %4368 = vmatpush.bf16.msra.mxu0 %v2987
    %4369 = vmatpush.bf16.msra.mxu0 %v2979
    %4370 = vmatpush.bf16.msra.mxu0 %v2971
    %4371 = vmatpush.bf16.msra.mxu0 %v2963
    %4372 = vmatpush.bf16.msra.mxu0 %v2955
    %4373 = vmatpush.bf16.msra.mxu0 %v2947
    %4374 = vmatmul.bf16.gmra.mxu0 %v4194
    %v4375 = vpop.f32.mrf.mxu0
    %v4376 = vadd.f32 %v4362, %v4375
    %v4377 = vpop.f32.mrf.mxu0
    %v4378 = vadd.f32 %v4364, %v4377
    %4379 = vdwg.mxu0
    %4380 = vmatpush.bf16.msra.mxu0 %v3067
    %4381 = vmatpush.bf16.msra.mxu0 %v3059
    %4382 = vmatpush.bf16.msra.mxu0 %v3051
    %4383 = vmatpush.bf16.msra.mxu0 %v3043
    %4384 = vmatpush.bf16.msra.mxu0 %v3035
    %4385 = vmatpush.bf16.msra.mxu0 %v3027
    %4386 = vmatpush.bf16.msra.mxu0 %v3019
    %4387 = vmatpush.bf16.msra.mxu0 %v3011
    %4388 = vmatmul.bf16.gmra.mxu0 %v4195
    %v4389 = vpop.f32.mrf.mxu0
    %v4390 = vadd.f32 %v4376, %v4389
    %v4391 = vpop.f32.mrf.mxu0
    %v4392 = vadd.f32 %v4378, %v4391
    %4393 = vdwg.mxu0
    %4394 = vmatpush.bf16.msra.mxu0 %v3131
    %4395 = vmatpush.bf16.msra.mxu0 %v3123
    %4396 = vmatpush.bf16.msra.mxu0 %v3115
    %4397 = vmatpush.bf16.msra.mxu0 %v3107
    %4398 = vmatpush.bf16.msra.mxu0 %v3099
    %4399 = vmatpush.bf16.msra.mxu0 %v3091
    %4400 = vmatpush.bf16.msra.mxu0 %v3083
    %4401 = vmatpush.bf16.msra.mxu0 %v3075
    %4402 = vmatmul.bf16.gmra.mxu0 %v4196
    %v4403 = vpop.f32.mrf.mxu0
    %v4404 = vadd.f32 %v4390, %v4403
    %v4405 = vpop.f32.mrf.mxu0
    %v4406 = vadd.f32 %v4392, %v4405
    %4407 = vdwg.mxu0
    %4408 = vmatpush.bf16.msra.mxu0 %v3195
    %4409 = vmatpush.bf16.msra.mxu0 %v3187
    %4410 = vmatpush.bf16.msra.mxu0 %v3179
    %4411 = vmatpush.bf16.msra.mxu0 %v3171
    %4412 = vmatpush.bf16.msra.mxu0 %v3163
    %4413 = vmatpush.bf16.msra.mxu0 %v3155
    %4414 = vmatpush.bf16.msra.mxu0 %v3147
    %4415 = vmatpush.bf16.msra.mxu0 %v3139
    %4416 = vmatmul.bf16.gmra.mxu0 %v4197
    %v4417 = vpop.f32.mrf.mxu0
    %v4418 = vadd.f32 %v4404, %v4417
    %v4419 = vpop.f32.mrf.mxu0
    %v4420 = vadd.f32 %v4406, %v4419
    %4421 = vdwg.mxu0
    %4422 = vmatpush.bf16.msra.mxu0 %v2748
    %4423 = vmatpush.bf16.msra.mxu0 %v2740
    %4424 = vmatpush.bf16.msra.mxu0 %v2732
    %4425 = vmatpush.bf16.msra.mxu0 %v2724
    %4426 = vmatpush.bf16.msra.mxu0 %v2716
    %4427 = vmatpush.bf16.msra.mxu0 %v2708
    %4428 = vmatpush.bf16.msra.mxu0 %v2700
    %4429 = vmatpush.bf16.msra.mxu0 %v2692
    %4430 = vmatmul.bf16.gmra.mxu0 %v4190
    %v4431 = vpop.f32.mrf.mxu0
    %v4432 = vadd.f32 0.0, %v4431
    %v4433 = vpop.f32.mrf.mxu0
    %v4434 = vadd.f32 0.0, %v4433
    %4435 = vdwg.mxu0
    %4436 = vmatpush.bf16.msra.mxu0 %v2812
    %4437 = vmatpush.bf16.msra.mxu0 %v2804
    %4438 = vmatpush.bf16.msra.mxu0 %v2796
    %4439 = vmatpush.bf16.msra.mxu0 %v2788
    %4440 = vmatpush.bf16.msra.mxu0 %v2780
    %4441 = vmatpush.bf16.msra.mxu0 %v2772
    %4442 = vmatpush.bf16.msra.mxu0 %v2764
    %4443 = vmatpush.bf16.msra.mxu0 %v2756
    %4444 = vmatmul.bf16.gmra.mxu0 %v4191
    %v4445 = vpop.f32.mrf.mxu0
    %v4446 = vadd.f32 %v4432, %v4445
    %v4447 = vpop.f32.mrf.mxu0
    %v4448 = vadd.f32 %v4434, %v4447
    %4449 = vdwg.mxu0
    %4450 = vmatpush.bf16.msra.mxu0 %v2876
    %4451 = vmatpush.bf16.msra.mxu0 %v2868
    %4452 = vmatpush.bf16.msra.mxu0 %v2860
    %4453 = vmatpush.bf16.msra.mxu0 %v2852
    %4454 = vmatpush.bf16.msra.mxu0 %v2844
    %4455 = vmatpush.bf16.msra.mxu0 %v2836
    %4456 = vmatpush.bf16.msra.mxu0 %v2828
    %4457 = vmatpush.bf16.msra.mxu0 %v2820
    %4458 = vmatmul.bf16.gmra.mxu0 %v4192
    %v4459 = vpop.f32.mrf.mxu0
    %v4460 = vadd.f32 %v4446, %v4459
    %v4461 = vpop.f32.mrf.mxu0
    %v4462 = vadd.f32 %v4448, %v4461
    %4463 = vdwg.mxu0
    %4464 = vmatpush.bf16.msra.mxu0 %v2940
    %4465 = vmatpush.bf16.msra.mxu0 %v2932
    %4466 = vmatpush.bf16.msra.mxu0 %v2924
    %4467 = vmatpush.bf16.msra.mxu0 %v2916
    %4468 = vmatpush.bf16.msra.mxu0 %v2908
    %4469 = vmatpush.bf16.msra.mxu0 %v2900
    %4470 = vmatpush.bf16.msra.mxu0 %v2892
    %4471 = vmatpush.bf16.msra.mxu0 %v2884
    %4472 = vmatmul.bf16.gmra.mxu0 %v4193
    %v4473 = vpop.f32.mrf.mxu0
    %v4474 = vadd.f32 %v4460, %v4473
    %v4475 = vpop.f32.mrf.mxu0
    %v4476 = vadd.f32 %v4462, %v4475
    %4477 = vdwg.mxu0
    %4478 = vmatpush.bf16.msra.mxu0 %v3004
    %4479 = vmatpush.bf16.msra.mxu0 %v2996
    %4480 = vmatpush.bf16.msra.mxu0 %v2988
    %4481 = vmatpush.bf16.msra.mxu0 %v2980
    %4482 = vmatpush.bf16.msra.mxu0 %v2972
    %4483 = vmatpush.bf16.msra.mxu0 %v2964
    %4484 = vmatpush.bf16.msra.mxu0 %v2956
    %4485 = vmatpush.bf16.msra.mxu0 %v2948
    %4486 = vmatmul.bf16.gmra.mxu0 %v4194
    %v4487 = vpop.f32.mrf.mxu0
    %v4488 = vadd.f32 %v4474, %v4487
    %v4489 = vpop.f32.mrf.mxu0
    %v4490 = vadd.f32 %v4476, %v4489
    %4491 = vdwg.mxu0
    %4492 = vmatpush.bf16.msra.mxu0 %v3068
    %4493 = vmatpush.bf16.msra.mxu0 %v3060
    %4494 = vmatpush.bf16.msra.mxu0 %v3052
    %4495 = vmatpush.bf16.msra.mxu0 %v3044
    %4496 = vmatpush.bf16.msra.mxu0 %v3036
    %4497 = vmatpush.bf16.msra.mxu0 %v3028
    %4498 = vmatpush.bf16.msra.mxu0 %v3020
    %4499 = vmatpush.bf16.msra.mxu0 %v3012
    %4500 = vmatmul.bf16.gmra.mxu0 %v4195
    %v4501 = vpop.f32.mrf.mxu0
    %v4502 = vadd.f32 %v4488, %v4501
    %v4503 = vpop.f32.mrf.mxu0
    %v4504 = vadd.f32 %v4490, %v4503
    %4505 = vdwg.mxu0
    %4506 = vmatpush.bf16.msra.mxu0 %v3132
    %4507 = vmatpush.bf16.msra.mxu0 %v3124
    %4508 = vmatpush.bf16.msra.mxu0 %v3116
    %4509 = vmatpush.bf16.msra.mxu0 %v3108
    %4510 = vmatpush.bf16.msra.mxu0 %v3100
    %4511 = vmatpush.bf16.msra.mxu0 %v3092
    %4512 = vmatpush.bf16.msra.mxu0 %v3084
    %4513 = vmatpush.bf16.msra.mxu0 %v3076
    %4514 = vmatmul.bf16.gmra.mxu0 %v4196
    %v4515 = vpop.f32.mrf.mxu0
    %v4516 = vadd.f32 %v4502, %v4515
    %v4517 = vpop.f32.mrf.mxu0
    %v4518 = vadd.f32 %v4504, %v4517
    %4519 = vdwg.mxu0
    %4520 = vmatpush.bf16.msra.mxu0 %v3196
    %4521 = vmatpush.bf16.msra.mxu0 %v3188
    %4522 = vmatpush.bf16.msra.mxu0 %v3180
    %4523 = vmatpush.bf16.msra.mxu0 %v3172
    %4524 = vmatpush.bf16.msra.mxu0 %v3164
    %4525 = vmatpush.bf16.msra.mxu0 %v3156
    %4526 = vmatpush.bf16.msra.mxu0 %v3148
    %4527 = vmatpush.bf16.msra.mxu0 %v3140
    %4528 = vmatmul.bf16.gmra.mxu0 %v4197
    %v4529 = vpop.f32.mrf.mxu0
    %v4530 = vadd.f32 %v4516, %v4529
    %v4531 = vpop.f32.mrf.mxu0
    %v4532 = vadd.f32 %v4518, %v4531
    %4533 = vdwg.mxu0
    %4534 = vmatpush.bf16.msra.mxu0 %v2749
    %4535 = vmatpush.bf16.msra.mxu0 %v2741
    %4536 = vmatpush.bf16.msra.mxu0 %v2733
    %4537 = vmatpush.bf16.msra.mxu0 %v2725
    %4538 = vmatpush.bf16.msra.mxu0 %v2717
    %4539 = vmatpush.bf16.msra.mxu0 %v2709
    %4540 = vmatpush.bf16.msra.mxu0 %v2701
    %4541 = vmatpush.bf16.msra.mxu0 %v2693
    %4542 = vmatmul.bf16.gmra.mxu0 %v4190
    %v4543 = vpop.f32.mrf.mxu0
    %v4544 = vadd.f32 0.0, %v4543
    %v4545 = vpop.f32.mrf.mxu0
    %v4546 = vadd.f32 0.0, %v4545
    %4547 = vdwg.mxu0
    %4548 = vmatpush.bf16.msra.mxu0 %v2813
    %4549 = vmatpush.bf16.msra.mxu0 %v2805
    %4550 = vmatpush.bf16.msra.mxu0 %v2797
    %4551 = vmatpush.bf16.msra.mxu0 %v2789
    %4552 = vmatpush.bf16.msra.mxu0 %v2781
    %4553 = vmatpush.bf16.msra.mxu0 %v2773
    %4554 = vmatpush.bf16.msra.mxu0 %v2765
    %4555 = vmatpush.bf16.msra.mxu0 %v2757
    %4556 = vmatmul.bf16.gmra.mxu0 %v4191
    %v4557 = vpop.f32.mrf.mxu0
    %v4558 = vadd.f32 %v4544, %v4557
    %v4559 = vpop.f32.mrf.mxu0
    %v4560 = vadd.f32 %v4546, %v4559
    %4561 = vdwg.mxu0
    %4562 = vmatpush.bf16.msra.mxu0 %v2877
    %4563 = vmatpush.bf16.msra.mxu0 %v2869
    %4564 = vmatpush.bf16.msra.mxu0 %v2861
    %4565 = vmatpush.bf16.msra.mxu0 %v2853
    %4566 = vmatpush.bf16.msra.mxu0 %v2845
    %4567 = vmatpush.bf16.msra.mxu0 %v2837
    %4568 = vmatpush.bf16.msra.mxu0 %v2829
    %4569 = vmatpush.bf16.msra.mxu0 %v2821
    %4570 = vmatmul.bf16.gmra.mxu0 %v4192
    %v4571 = vpop.f32.mrf.mxu0
    %v4572 = vadd.f32 %v4558, %v4571
    %v4573 = vpop.f32.mrf.mxu0
    %v4574 = vadd.f32 %v4560, %v4573
    %4575 = vdwg.mxu0
    %4576 = vmatpush.bf16.msra.mxu0 %v2941
    %4577 = vmatpush.bf16.msra.mxu0 %v2933
    %4578 = vmatpush.bf16.msra.mxu0 %v2925
    %4579 = vmatpush.bf16.msra.mxu0 %v2917
    %4580 = vmatpush.bf16.msra.mxu0 %v2909
    %4581 = vmatpush.bf16.msra.mxu0 %v2901
    %4582 = vmatpush.bf16.msra.mxu0 %v2893
    %4583 = vmatpush.bf16.msra.mxu0 %v2885
    %4584 = vmatmul.bf16.gmra.mxu0 %v4193
    %v4585 = vpop.f32.mrf.mxu0
    %v4586 = vadd.f32 %v4572, %v4585
    %v4587 = vpop.f32.mrf.mxu0
    %v4588 = vadd.f32 %v4574, %v4587
    %4589 = vdwg.mxu0
    %4590 = vmatpush.bf16.msra.mxu0 %v3005
    %4591 = vmatpush.bf16.msra.mxu0 %v2997
    %4592 = vmatpush.bf16.msra.mxu0 %v2989
    %4593 = vmatpush.bf16.msra.mxu0 %v2981
    %4594 = vmatpush.bf16.msra.mxu0 %v2973
    %4595 = vmatpush.bf16.msra.mxu0 %v2965
    %4596 = vmatpush.bf16.msra.mxu0 %v2957
    %4597 = vmatpush.bf16.msra.mxu0 %v2949
    %4598 = vmatmul.bf16.gmra.mxu0 %v4194
    %v4599 = vpop.f32.mrf.mxu0
    %v4600 = vadd.f32 %v4586, %v4599
    %v4601 = vpop.f32.mrf.mxu0
    %v4602 = vadd.f32 %v4588, %v4601
    %4603 = vdwg.mxu0
    %4604 = vmatpush.bf16.msra.mxu0 %v3069
    %4605 = vmatpush.bf16.msra.mxu0 %v3061
    %4606 = vmatpush.bf16.msra.mxu0 %v3053
    %4607 = vmatpush.bf16.msra.mxu0 %v3045
    %4608 = vmatpush.bf16.msra.mxu0 %v3037
    %4609 = vmatpush.bf16.msra.mxu0 %v3029
    %4610 = vmatpush.bf16.msra.mxu0 %v3021
    %4611 = vmatpush.bf16.msra.mxu0 %v3013
    %4612 = vmatmul.bf16.gmra.mxu0 %v4195
    %v4613 = vpop.f32.mrf.mxu0
    %v4614 = vadd.f32 %v4600, %v4613
    %v4615 = vpop.f32.mrf.mxu0
    %v4616 = vadd.f32 %v4602, %v4615
    %4617 = vdwg.mxu0
    %4618 = vmatpush.bf16.msra.mxu0 %v3133
    %4619 = vmatpush.bf16.msra.mxu0 %v3125
    %4620 = vmatpush.bf16.msra.mxu0 %v3117
    %4621 = vmatpush.bf16.msra.mxu0 %v3109
    %4622 = vmatpush.bf16.msra.mxu0 %v3101
    %4623 = vmatpush.bf16.msra.mxu0 %v3093
    %4624 = vmatpush.bf16.msra.mxu0 %v3085
    %4625 = vmatpush.bf16.msra.mxu0 %v3077
    %4626 = vmatmul.bf16.gmra.mxu0 %v4196
    %v4627 = vpop.f32.mrf.mxu0
    %v4628 = vadd.f32 %v4614, %v4627
    %v4629 = vpop.f32.mrf.mxu0
    %v4630 = vadd.f32 %v4616, %v4629
    %4631 = vdwg.mxu0
    %4632 = vmatpush.bf16.msra.mxu0 %v3197
    %4633 = vmatpush.bf16.msra.mxu0 %v3189
    %4634 = vmatpush.bf16.msra.mxu0 %v3181
    %4635 = vmatpush.bf16.msra.mxu0 %v3173
    %4636 = vmatpush.bf16.msra.mxu0 %v3165
    %4637 = vmatpush.bf16.msra.mxu0 %v3157
    %4638 = vmatpush.bf16.msra.mxu0 %v3149
    %4639 = vmatpush.bf16.msra.mxu0 %v3141
    %4640 = vmatmul.bf16.gmra.mxu0 %v4197
    %v4641 = vpop.f32.mrf.mxu0
    %v4642 = vadd.f32 %v4628, %v4641
    %v4643 = vpop.f32.mrf.mxu0
    %v4644 = vadd.f32 %v4630, %v4643
    %4645 = vdwg.mxu0
    %4646 = vmatpush.bf16.msra.mxu0 %v2750
    %4647 = vmatpush.bf16.msra.mxu0 %v2742
    %4648 = vmatpush.bf16.msra.mxu0 %v2734
    %4649 = vmatpush.bf16.msra.mxu0 %v2726
    %4650 = vmatpush.bf16.msra.mxu0 %v2718
    %4651 = vmatpush.bf16.msra.mxu0 %v2710
    %4652 = vmatpush.bf16.msra.mxu0 %v2702
    %4653 = vmatpush.bf16.msra.mxu0 %v2694
    %4654 = vmatmul.bf16.gmra.mxu0 %v4190
    %v4655 = vpop.f32.mrf.mxu0
    %v4656 = vadd.f32 0.0, %v4655
    %v4657 = vpop.f32.mrf.mxu0
    %v4658 = vadd.f32 0.0, %v4657
    %4659 = vdwg.mxu0
    %4660 = vmatpush.bf16.msra.mxu0 %v2814
    %4661 = vmatpush.bf16.msra.mxu0 %v2806
    %4662 = vmatpush.bf16.msra.mxu0 %v2798
    %4663 = vmatpush.bf16.msra.mxu0 %v2790
    %4664 = vmatpush.bf16.msra.mxu0 %v2782
    %4665 = vmatpush.bf16.msra.mxu0 %v2774
    %4666 = vmatpush.bf16.msra.mxu0 %v2766
    %4667 = vmatpush.bf16.msra.mxu0 %v2758
    %4668 = vmatmul.bf16.gmra.mxu0 %v4191
    %v4669 = vpop.f32.mrf.mxu0
    %v4670 = vadd.f32 %v4656, %v4669
    %v4671 = vpop.f32.mrf.mxu0
    %v4672 = vadd.f32 %v4658, %v4671
    %4673 = vdwg.mxu0
    %4674 = vmatpush.bf16.msra.mxu0 %v2878
    %4675 = vmatpush.bf16.msra.mxu0 %v2870
    %4676 = vmatpush.bf16.msra.mxu0 %v2862
    %4677 = vmatpush.bf16.msra.mxu0 %v2854
    %4678 = vmatpush.bf16.msra.mxu0 %v2846
    %4679 = vmatpush.bf16.msra.mxu0 %v2838
    %4680 = vmatpush.bf16.msra.mxu0 %v2830
    %4681 = vmatpush.bf16.msra.mxu0 %v2822
    %4682 = vmatmul.bf16.gmra.mxu0 %v4192
    %v4683 = vpop.f32.mrf.mxu0
    %v4684 = vadd.f32 %v4670, %v4683
    %v4685 = vpop.f32.mrf.mxu0
    %v4686 = vadd.f32 %v4672, %v4685
    %4687 = vdwg.mxu0
    %4688 = vmatpush.bf16.msra.mxu0 %v2942
    %4689 = vmatpush.bf16.msra.mxu0 %v2934
    %4690 = vmatpush.bf16.msra.mxu0 %v2926
    %4691 = vmatpush.bf16.msra.mxu0 %v2918
    %4692 = vmatpush.bf16.msra.mxu0 %v2910
    %4693 = vmatpush.bf16.msra.mxu0 %v2902
    %4694 = vmatpush.bf16.msra.mxu0 %v2894
    %4695 = vmatpush.bf16.msra.mxu0 %v2886
    %4696 = vmatmul.bf16.gmra.mxu0 %v4193
    %v4697 = vpop.f32.mrf.mxu0
    %v4698 = vadd.f32 %v4684, %v4697
    %v4699 = vpop.f32.mrf.mxu0
    %v4700 = vadd.f32 %v4686, %v4699
    %4701 = vdwg.mxu0
    %4702 = vmatpush.bf16.msra.mxu0 %v3006
    %4703 = vmatpush.bf16.msra.mxu0 %v2998
    %4704 = vmatpush.bf16.msra.mxu0 %v2990
    %4705 = vmatpush.bf16.msra.mxu0 %v2982
    %4706 = vmatpush.bf16.msra.mxu0 %v2974
    %4707 = vmatpush.bf16.msra.mxu0 %v2966
    %4708 = vmatpush.bf16.msra.mxu0 %v2958
    %4709 = vmatpush.bf16.msra.mxu0 %v2950
    %4710 = vmatmul.bf16.gmra.mxu0 %v4194
    %v4711 = vpop.f32.mrf.mxu0
    %v4712 = vadd.f32 %v4698, %v4711
    %v4713 = vpop.f32.mrf.mxu0
    %v4714 = vadd.f32 %v4700, %v4713
    %4715 = vdwg.mxu0
    %4716 = vmatpush.bf16.msra.mxu0 %v3070
    %4717 = vmatpush.bf16.msra.mxu0 %v3062
    %4718 = vmatpush.bf16.msra.mxu0 %v3054
    %4719 = vmatpush.bf16.msra.mxu0 %v3046
    %4720 = vmatpush.bf16.msra.mxu0 %v3038
    %4721 = vmatpush.bf16.msra.mxu0 %v3030
    %4722 = vmatpush.bf16.msra.mxu0 %v3022
    %4723 = vmatpush.bf16.msra.mxu0 %v3014
    %4724 = vmatmul.bf16.gmra.mxu0 %v4195
    %v4725 = vpop.f32.mrf.mxu0
    %v4726 = vadd.f32 %v4712, %v4725
    %v4727 = vpop.f32.mrf.mxu0
    %v4728 = vadd.f32 %v4714, %v4727
    %4729 = vdwg.mxu0
    %4730 = vmatpush.bf16.msra.mxu0 %v3134
    %4731 = vmatpush.bf16.msra.mxu0 %v3126
    %4732 = vmatpush.bf16.msra.mxu0 %v3118
    %4733 = vmatpush.bf16.msra.mxu0 %v3110
    %4734 = vmatpush.bf16.msra.mxu0 %v3102
    %4735 = vmatpush.bf16.msra.mxu0 %v3094
    %4736 = vmatpush.bf16.msra.mxu0 %v3086
    %4737 = vmatpush.bf16.msra.mxu0 %v3078
    %4738 = vmatmul.bf16.gmra.mxu0 %v4196
    %v4739 = vpop.f32.mrf.mxu0
    %v4740 = vadd.f32 %v4726, %v4739
    %v4741 = vpop.f32.mrf.mxu0
    %v4742 = vadd.f32 %v4728, %v4741
    %4743 = vdwg.mxu0
    %4744 = vmatpush.bf16.msra.mxu0 %v3198
    %4745 = vmatpush.bf16.msra.mxu0 %v3190
    %4746 = vmatpush.bf16.msra.mxu0 %v3182
    %4747 = vmatpush.bf16.msra.mxu0 %v3174
    %4748 = vmatpush.bf16.msra.mxu0 %v3166
    %4749 = vmatpush.bf16.msra.mxu0 %v3158
    %4750 = vmatpush.bf16.msra.mxu0 %v3150
    %4751 = vmatpush.bf16.msra.mxu0 %v3142
    %4752 = vmatmul.bf16.gmra.mxu0 %v4197
    %v4753 = vpop.f32.mrf.mxu0
    %v4754 = vadd.f32 %v4740, %v4753
    %v4755 = vpop.f32.mrf.mxu0
    %v4756 = vadd.f32 %v4742, %v4755
    %4757 = vdwg.mxu0
    %4758 = vmatpush.bf16.msra.mxu0 %v2751
    %4759 = vmatpush.bf16.msra.mxu0 %v2743
    %4760 = vmatpush.bf16.msra.mxu0 %v2735
    %4761 = vmatpush.bf16.msra.mxu0 %v2727
    %4762 = vmatpush.bf16.msra.mxu0 %v2719
    %4763 = vmatpush.bf16.msra.mxu0 %v2711
    %4764 = vmatpush.bf16.msra.mxu0 %v2703
    %4765 = vmatpush.bf16.msra.mxu0 %v2695
    %4766 = vmatmul.bf16.gmra.mxu0 %v4190
    %v4767 = vpop.f32.mrf.mxu0
    %v4768 = vadd.f32 0.0, %v4767
    %v4769 = vpop.f32.mrf.mxu0
    %v4770 = vadd.f32 0.0, %v4769
    %4771 = vdwg.mxu0
    %4772 = vmatpush.bf16.msra.mxu0 %v2815
    %4773 = vmatpush.bf16.msra.mxu0 %v2807
    %4774 = vmatpush.bf16.msra.mxu0 %v2799
    %4775 = vmatpush.bf16.msra.mxu0 %v2791
    %4776 = vmatpush.bf16.msra.mxu0 %v2783
    %4777 = vmatpush.bf16.msra.mxu0 %v2775
    %4778 = vmatpush.bf16.msra.mxu0 %v2767
    %4779 = vmatpush.bf16.msra.mxu0 %v2759
    %4780 = vmatmul.bf16.gmra.mxu0 %v4191
    %v4781 = vpop.f32.mrf.mxu0
    %v4782 = vadd.f32 %v4768, %v4781
    %v4783 = vpop.f32.mrf.mxu0
    %v4784 = vadd.f32 %v4770, %v4783
    %4785 = vdwg.mxu0
    %4786 = vmatpush.bf16.msra.mxu0 %v2879
    %4787 = vmatpush.bf16.msra.mxu0 %v2871
    %4788 = vmatpush.bf16.msra.mxu0 %v2863
    %4789 = vmatpush.bf16.msra.mxu0 %v2855
    %4790 = vmatpush.bf16.msra.mxu0 %v2847
    %4791 = vmatpush.bf16.msra.mxu0 %v2839
    %4792 = vmatpush.bf16.msra.mxu0 %v2831
    %4793 = vmatpush.bf16.msra.mxu0 %v2823
    %4794 = vmatmul.bf16.gmra.mxu0 %v4192
    %v4795 = vpop.f32.mrf.mxu0
    %v4796 = vadd.f32 %v4782, %v4795
    %v4797 = vpop.f32.mrf.mxu0
    %v4798 = vadd.f32 %v4784, %v4797
    %4799 = vdwg.mxu0
    %4800 = vmatpush.bf16.msra.mxu0 %v2943
    %4801 = vmatpush.bf16.msra.mxu0 %v2935
    %4802 = vmatpush.bf16.msra.mxu0 %v2927
    %4803 = vmatpush.bf16.msra.mxu0 %v2919
    %4804 = vmatpush.bf16.msra.mxu0 %v2911
    %4805 = vmatpush.bf16.msra.mxu0 %v2903
    %4806 = vmatpush.bf16.msra.mxu0 %v2895
    %4807 = vmatpush.bf16.msra.mxu0 %v2887
    %4808 = vmatmul.bf16.gmra.mxu0 %v4193
    %v4809 = vpop.f32.mrf.mxu0
    %v4810 = vadd.f32 %v4796, %v4809
    %v4811 = vpop.f32.mrf.mxu0
    %v4812 = vadd.f32 %v4798, %v4811
    %4813 = vdwg.mxu0
    %4814 = vmatpush.bf16.msra.mxu0 %v3007
    %4815 = vmatpush.bf16.msra.mxu0 %v2999
    %4816 = vmatpush.bf16.msra.mxu0 %v2991
    %4817 = vmatpush.bf16.msra.mxu0 %v2983
    %4818 = vmatpush.bf16.msra.mxu0 %v2975
    %4819 = vmatpush.bf16.msra.mxu0 %v2967
    %4820 = vmatpush.bf16.msra.mxu0 %v2959
    %4821 = vmatpush.bf16.msra.mxu0 %v2951
    %4822 = vmatmul.bf16.gmra.mxu0 %v4194
    %v4823 = vpop.f32.mrf.mxu0
    %v4824 = vadd.f32 %v4810, %v4823
    %v4825 = vpop.f32.mrf.mxu0
    %v4826 = vadd.f32 %v4812, %v4825
    %4827 = vdwg.mxu0
    %4828 = vmatpush.bf16.msra.mxu0 %v3071
    %4829 = vmatpush.bf16.msra.mxu0 %v3063
    %4830 = vmatpush.bf16.msra.mxu0 %v3055
    %4831 = vmatpush.bf16.msra.mxu0 %v3047
    %4832 = vmatpush.bf16.msra.mxu0 %v3039
    %4833 = vmatpush.bf16.msra.mxu0 %v3031
    %4834 = vmatpush.bf16.msra.mxu0 %v3023
    %4835 = vmatpush.bf16.msra.mxu0 %v3015
    %4836 = vmatmul.bf16.gmra.mxu0 %v4195
    %v4837 = vpop.f32.mrf.mxu0
    %v4838 = vadd.f32 %v4824, %v4837
    %v4839 = vpop.f32.mrf.mxu0
    %v4840 = vadd.f32 %v4826, %v4839
    %4841 = vdwg.mxu0
    %4842 = vmatpush.bf16.msra.mxu0 %v3135
    %4843 = vmatpush.bf16.msra.mxu0 %v3127
    %4844 = vmatpush.bf16.msra.mxu0 %v3119
    %4845 = vmatpush.bf16.msra.mxu0 %v3111
    %4846 = vmatpush.bf16.msra.mxu0 %v3103
    %4847 = vmatpush.bf16.msra.mxu0 %v3095
    %4848 = vmatpush.bf16.msra.mxu0 %v3087
    %4849 = vmatpush.bf16.msra.mxu0 %v3079
    %4850 = vmatmul.bf16.gmra.mxu0 %v4196
    %v4851 = vpop.f32.mrf.mxu0
    %v4852 = vadd.f32 %v4838, %v4851
    %v4853 = vpop.f32.mrf.mxu0
    %v4854 = vadd.f32 %v4840, %v4853
    %4855 = vdwg.mxu0
    %4856 = vmatpush.bf16.msra.mxu0 %v3199
    %4857 = vmatpush.bf16.msra.mxu0 %v3191
    %4858 = vmatpush.bf16.msra.mxu0 %v3183
    %4859 = vmatpush.bf16.msra.mxu0 %v3175
    %4860 = vmatpush.bf16.msra.mxu0 %v3167
    %4861 = vmatpush.bf16.msra.mxu0 %v3159
    %4862 = vmatpush.bf16.msra.mxu0 %v3151
    %4863 = vmatpush.bf16.msra.mxu0 %v3143
    %4864 = vmatmul.bf16.gmra.mxu0 %v4197
    %v4865 = vpop.f32.mrf.mxu0
    %v4866 = vadd.f32 %v4852, %v4865
    %v4867 = vpop.f32.mrf.mxu0
    %v4868 = vadd.f32 %v4854, %v4867
    %4869 = vdwg.mxu0
    %4870 = vmatpush.bf16.msra.mxu0 %v2752
    %4871 = vmatpush.bf16.msra.mxu0 %v2744
    %4872 = vmatpush.bf16.msra.mxu0 %v2736
    %4873 = vmatpush.bf16.msra.mxu0 %v2728
    %4874 = vmatpush.bf16.msra.mxu0 %v2720
    %4875 = vmatpush.bf16.msra.mxu0 %v2712
    %4876 = vmatpush.bf16.msra.mxu0 %v2704
    %4877 = vmatpush.bf16.msra.mxu0 %v2696
    %4878 = vmatmul.bf16.gmra.mxu0 %v4190
    %v4879 = vpop.f32.mrf.mxu0
    %v4880 = vadd.f32 0.0, %v4879
    %v4881 = vpop.f32.mrf.mxu0
    %v4882 = vadd.f32 0.0, %v4881
    %4883 = vdwg.mxu0
    %4884 = vmatpush.bf16.msra.mxu0 %v2816
    %4885 = vmatpush.bf16.msra.mxu0 %v2808
    %4886 = vmatpush.bf16.msra.mxu0 %v2800
    %4887 = vmatpush.bf16.msra.mxu0 %v2792
    %4888 = vmatpush.bf16.msra.mxu0 %v2784
    %4889 = vmatpush.bf16.msra.mxu0 %v2776
    %4890 = vmatpush.bf16.msra.mxu0 %v2768
    %4891 = vmatpush.bf16.msra.mxu0 %v2760
    %4892 = vmatmul.bf16.gmra.mxu0 %v4191
    %v4893 = vpop.f32.mrf.mxu0
    %v4894 = vadd.f32 %v4880, %v4893
    %v4895 = vpop.f32.mrf.mxu0
    %v4896 = vadd.f32 %v4882, %v4895
    %4897 = vdwg.mxu0
    %4898 = vmatpush.bf16.msra.mxu0 %v2880
    %4899 = vmatpush.bf16.msra.mxu0 %v2872
    %4900 = vmatpush.bf16.msra.mxu0 %v2864
    %4901 = vmatpush.bf16.msra.mxu0 %v2856
    %4902 = vmatpush.bf16.msra.mxu0 %v2848
    %4903 = vmatpush.bf16.msra.mxu0 %v2840
    %4904 = vmatpush.bf16.msra.mxu0 %v2832
    %4905 = vmatpush.bf16.msra.mxu0 %v2824
    %4906 = vmatmul.bf16.gmra.mxu0 %v4192
    %v4907 = vpop.f32.mrf.mxu0
    %v4908 = vadd.f32 %v4894, %v4907
    %v4909 = vpop.f32.mrf.mxu0
    %v4910 = vadd.f32 %v4896, %v4909
    %4911 = vdwg.mxu0
    %4912 = vmatpush.bf16.msra.mxu0 %v2944
    %4913 = vmatpush.bf16.msra.mxu0 %v2936
    %4914 = vmatpush.bf16.msra.mxu0 %v2928
    %4915 = vmatpush.bf16.msra.mxu0 %v2920
    %4916 = vmatpush.bf16.msra.mxu0 %v2912
    %4917 = vmatpush.bf16.msra.mxu0 %v2904
    %4918 = vmatpush.bf16.msra.mxu0 %v2896
    %4919 = vmatpush.bf16.msra.mxu0 %v2888
    %4920 = vmatmul.bf16.gmra.mxu0 %v4193
    %v4921 = vpop.f32.mrf.mxu0
    %v4922 = vadd.f32 %v4908, %v4921
    %v4923 = vpop.f32.mrf.mxu0
    %v4924 = vadd.f32 %v4910, %v4923
    %4925 = vdwg.mxu0
    %4926 = vmatpush.bf16.msra.mxu0 %v3008
    %4927 = vmatpush.bf16.msra.mxu0 %v3000
    %4928 = vmatpush.bf16.msra.mxu0 %v2992
    %4929 = vmatpush.bf16.msra.mxu0 %v2984
    %4930 = vmatpush.bf16.msra.mxu0 %v2976
    %4931 = vmatpush.bf16.msra.mxu0 %v2968
    %4932 = vmatpush.bf16.msra.mxu0 %v2960
    %4933 = vmatpush.bf16.msra.mxu0 %v2952
    %4934 = vmatmul.bf16.gmra.mxu0 %v4194
    %v4935 = vpop.f32.mrf.mxu0
    %v4936 = vadd.f32 %v4922, %v4935
    %v4937 = vpop.f32.mrf.mxu0
    %v4938 = vadd.f32 %v4924, %v4937
    %4939 = vdwg.mxu0
    %4940 = vmatpush.bf16.msra.mxu0 %v3072
    %4941 = vmatpush.bf16.msra.mxu0 %v3064
    %4942 = vmatpush.bf16.msra.mxu0 %v3056
    %4943 = vmatpush.bf16.msra.mxu0 %v3048
    %4944 = vmatpush.bf16.msra.mxu0 %v3040
    %4945 = vmatpush.bf16.msra.mxu0 %v3032
    %4946 = vmatpush.bf16.msra.mxu0 %v3024
    %4947 = vmatpush.bf16.msra.mxu0 %v3016
    %4948 = vmatmul.bf16.gmra.mxu0 %v4195
    %v4949 = vpop.f32.mrf.mxu0
    %v4950 = vadd.f32 %v4936, %v4949
    %v4951 = vpop.f32.mrf.mxu0
    %v4952 = vadd.f32 %v4938, %v4951
    %4953 = vdwg.mxu0
    %4954 = vmatpush.bf16.msra.mxu0 %v3136
    %4955 = vmatpush.bf16.msra.mxu0 %v3128
    %4956 = vmatpush.bf16.msra.mxu0 %v3120
    %4957 = vmatpush.bf16.msra.mxu0 %v3112
    %4958 = vmatpush.bf16.msra.mxu0 %v3104
    %4959 = vmatpush.bf16.msra.mxu0 %v3096
    %4960 = vmatpush.bf16.msra.mxu0 %v3088
    %4961 = vmatpush.bf16.msra.mxu0 %v3080
    %4962 = vmatmul.bf16.gmra.mxu0 %v4196
    %v4963 = vpop.f32.mrf.mxu0
    %v4964 = vadd.f32 %v4950, %v4963
    %v4965 = vpop.f32.mrf.mxu0
    %v4966 = vadd.f32 %v4952, %v4965
    %4967 = vdwg.mxu0
    %4968 = vmatpush.bf16.msra.mxu0 %v3200
    %4969 = vmatpush.bf16.msra.mxu0 %v3192
    %4970 = vmatpush.bf16.msra.mxu0 %v3184
    %4971 = vmatpush.bf16.msra.mxu0 %v3176
    %4972 = vmatpush.bf16.msra.mxu0 %v3168
    %4973 = vmatpush.bf16.msra.mxu0 %v3160
    %4974 = vmatpush.bf16.msra.mxu0 %v3152
    %4975 = vmatpush.bf16.msra.mxu0 %v3144
    %4976 = vmatmul.bf16.gmra.mxu0 %v4197
    %v4977 = vpop.f32.mrf.mxu0
    %v4978 = vadd.f32 %v4964, %v4977
    %v4979 = vpop.f32.mrf.mxu0
    %v4980 = vadd.f32 %v4966, %v4979
    %4981 = vdwg.mxu0
    %4982 = vmatpush.bf16.msra.mxu0 %v2753
    %4983 = vmatpush.bf16.msra.mxu0 %v2745
    %4984 = vmatpush.bf16.msra.mxu0 %v2737
    %4985 = vmatpush.bf16.msra.mxu0 %v2729
    %4986 = vmatpush.bf16.msra.mxu0 %v2721
    %4987 = vmatpush.bf16.msra.mxu0 %v2713
    %4988 = vmatpush.bf16.msra.mxu0 %v2705
    %4989 = vmatpush.bf16.msra.mxu0 %v2697
    %4990 = vmatmul.bf16.gmra.mxu0 %v4190
    %v4991 = vpop.f32.mrf.mxu0
    %v4992 = vadd.f32 0.0, %v4991
    %v4993 = vpop.f32.mrf.mxu0
    %v4994 = vadd.f32 0.0, %v4993
    %4995 = vdwg.mxu0
    %4996 = vmatpush.bf16.msra.mxu0 %v2817
    %4997 = vmatpush.bf16.msra.mxu0 %v2809
    %4998 = vmatpush.bf16.msra.mxu0 %v2801
    %4999 = vmatpush.bf16.msra.mxu0 %v2793
    %5000 = vmatpush.bf16.msra.mxu0 %v2785
    %5001 = vmatpush.bf16.msra.mxu0 %v2777
    %5002 = vmatpush.bf16.msra.mxu0 %v2769
    %5003 = vmatpush.bf16.msra.mxu0 %v2761
    %5004 = vmatmul.bf16.gmra.mxu0 %v4191
    %v5005 = vpop.f32.mrf.mxu0
    %v5006 = vadd.f32 %v4992, %v5005
    %v5007 = vpop.f32.mrf.mxu0
    %v5008 = vadd.f32 %v4994, %v5007
    %5009 = vdwg.mxu0
    %5010 = vmatpush.bf16.msra.mxu0 %v2881
    %5011 = vmatpush.bf16.msra.mxu0 %v2873
    %5012 = vmatpush.bf16.msra.mxu0 %v2865
    %5013 = vmatpush.bf16.msra.mxu0 %v2857
    %5014 = vmatpush.bf16.msra.mxu0 %v2849
    %5015 = vmatpush.bf16.msra.mxu0 %v2841
    %5016 = vmatpush.bf16.msra.mxu0 %v2833
    %5017 = vmatpush.bf16.msra.mxu0 %v2825
    %5018 = vmatmul.bf16.gmra.mxu0 %v4192
    %v5019 = vpop.f32.mrf.mxu0
    %v5020 = vadd.f32 %v5006, %v5019
    %v5021 = vpop.f32.mrf.mxu0
    %v5022 = vadd.f32 %v5008, %v5021
    %5023 = vdwg.mxu0
    %5024 = vmatpush.bf16.msra.mxu0 %v2945
    %5025 = vmatpush.bf16.msra.mxu0 %v2937
    %5026 = vmatpush.bf16.msra.mxu0 %v2929
    %5027 = vmatpush.bf16.msra.mxu0 %v2921
    %5028 = vmatpush.bf16.msra.mxu0 %v2913
    %5029 = vmatpush.bf16.msra.mxu0 %v2905
    %5030 = vmatpush.bf16.msra.mxu0 %v2897
    %5031 = vmatpush.bf16.msra.mxu0 %v2889
    %5032 = vmatmul.bf16.gmra.mxu0 %v4193
    %v5033 = vpop.f32.mrf.mxu0
    %v5034 = vadd.f32 %v5020, %v5033
    %v5035 = vpop.f32.mrf.mxu0
    %v5036 = vadd.f32 %v5022, %v5035
    %5037 = vdwg.mxu0
    %5038 = vmatpush.bf16.msra.mxu0 %v3009
    %5039 = vmatpush.bf16.msra.mxu0 %v3001
    %5040 = vmatpush.bf16.msra.mxu0 %v2993
    %5041 = vmatpush.bf16.msra.mxu0 %v2985
    %5042 = vmatpush.bf16.msra.mxu0 %v2977
    %5043 = vmatpush.bf16.msra.mxu0 %v2969
    %5044 = vmatpush.bf16.msra.mxu0 %v2961
    %5045 = vmatpush.bf16.msra.mxu0 %v2953
    %5046 = vmatmul.bf16.gmra.mxu0 %v4194
    %v5047 = vpop.f32.mrf.mxu0
    %v5048 = vadd.f32 %v5034, %v5047
    %v5049 = vpop.f32.mrf.mxu0
    %v5050 = vadd.f32 %v5036, %v5049
    %5051 = vdwg.mxu0
    %5052 = vmatpush.bf16.msra.mxu0 %v3073
    %5053 = vmatpush.bf16.msra.mxu0 %v3065
    %5054 = vmatpush.bf16.msra.mxu0 %v3057
    %5055 = vmatpush.bf16.msra.mxu0 %v3049
    %5056 = vmatpush.bf16.msra.mxu0 %v3041
    %5057 = vmatpush.bf16.msra.mxu0 %v3033
    %5058 = vmatpush.bf16.msra.mxu0 %v3025
    %5059 = vmatpush.bf16.msra.mxu0 %v3017
    %5060 = vmatmul.bf16.gmra.mxu0 %v4195
    %v5061 = vpop.f32.mrf.mxu0
    %v5062 = vadd.f32 %v5048, %v5061
    %v5063 = vpop.f32.mrf.mxu0
    %v5064 = vadd.f32 %v5050, %v5063
    %5065 = vdwg.mxu0
    %5066 = vmatpush.bf16.msra.mxu0 %v3137
    %5067 = vmatpush.bf16.msra.mxu0 %v3129
    %5068 = vmatpush.bf16.msra.mxu0 %v3121
    %5069 = vmatpush.bf16.msra.mxu0 %v3113
    %5070 = vmatpush.bf16.msra.mxu0 %v3105
    %5071 = vmatpush.bf16.msra.mxu0 %v3097
    %5072 = vmatpush.bf16.msra.mxu0 %v3089
    %5073 = vmatpush.bf16.msra.mxu0 %v3081
    %5074 = vmatmul.bf16.gmra.mxu0 %v4196
    %v5075 = vpop.f32.mrf.mxu0
    %v5076 = vadd.f32 %v5062, %v5075
    %v5077 = vpop.f32.mrf.mxu0
    %v5078 = vadd.f32 %v5064, %v5077
    %5079 = vdwg.mxu0
    %5080 = vmatpush.bf16.msra.mxu0 %v3201
    %5081 = vmatpush.bf16.msra.mxu0 %v3193
    %5082 = vmatpush.bf16.msra.mxu0 %v3185
    %5083 = vmatpush.bf16.msra.mxu0 %v3177
    %5084 = vmatpush.bf16.msra.mxu0 %v3169
    %5085 = vmatpush.bf16.msra.mxu0 %v3161
    %5086 = vmatpush.bf16.msra.mxu0 %v3153
    %5087 = vmatpush.bf16.msra.mxu0 %v3145
    %5088 = vmatmul.bf16.gmra.mxu0 %v4197
    %v5089 = vpop.f32.mrf.mxu0
    %v5090 = vadd.f32 %v5076, %v5089
    %v5091 = vpop.f32.mrf.mxu0
    %v5092 = vadd.f32 %v5078, %v5091
    %5093 = vdwg.mxu0
    %v5094 = vmul.f32 %v4306, %v4108
    %v5095 = vmul.f32 %v4418, %v4109
    %v5096 = vmul.f32 %v4530, %v4110
    %v5097 = vmul.f32 %v4642, %v4111
    %v5098 = vmul.f32 %v4754, %v4112
    %v5099 = vmul.f32 %v4866, %v4113
    %v5100 = vmul.f32 %v4978, %v4114
    %v5101 = vmul.f32 %v5090, %v4115
    %v5102 = vmul.f32 %v4308, %v4108
    %v5103 = vmul.f32 %v4420, %v4109
    %v5104 = vmul.f32 %v4532, %v4110
    %v5105 = vmul.f32 %v4644, %v4111
    %v5106 = vmul.f32 %v4756, %v4112
    %v5107 = vmul.f32 %v4868, %v4113
    %v5108 = vmul.f32 %v4980, %v4114
    %v5109 = vmul.f32 %v5092, %v4115
    %v5110 = vadd.f32 %v5094, %v4142
    %v5111 = vadd.f32 %v5095, %v4143
    %v5112 = vadd.f32 %v5096, %v4144
    %v5113 = vadd.f32 %v5097, %v4145
    %v5114 = vadd.f32 %v5098, %v4146
    %v5115 = vadd.f32 %v5099, %v4147
    %v5116 = vadd.f32 %v5100, %v4148
    %v5117 = vadd.f32 %v5101, %v4149
    %v5118 = vadd.f32 %v5102, %v4142
    %v5119 = vadd.f32 %v5103, %v4143
    %v5120 = vadd.f32 %v5104, %v4144
    %v5121 = vadd.f32 %v5105, %v4145
    %v5122 = vadd.f32 %v5106, %v4146
    %v5123 = vadd.f32 %v5107, %v4147
    %v5124 = vadd.f32 %v5108, %v4148
    %v5125 = vadd.f32 %v5109, %v4149
    %v5126 = vmax.f32 %v5110, 0.0
    %v5127 = vmax.f32 %v5111, 0.0
    %v5128 = vmax.f32 %v5112, 0.0
    %v5129 = vmax.f32 %v5113, 0.0
    %v5130 = vmax.f32 %v5114, 0.0
    %v5131 = vmax.f32 %v5115, 0.0
    %v5132 = vmax.f32 %v5116, 0.0
    %v5133 = vmax.f32 %v5117, 0.0
    %v5134 = vmax.f32 %v5118, 0.0
    %v5135 = vmax.f32 %v5119, 0.0
    %v5136 = vmax.f32 %v5120, 0.0
    %v5137 = vmax.f32 %v5121, 0.0
    %v5138 = vmax.f32 %v5122, 0.0
    %v5139 = vmax.f32 %v5123, 0.0
    %v5140 = vmax.f32 %v5124, 0.0
    %v5141 = vmax.f32 %v5125, 0.0
    %v5142 = vld [vmem:[#allocation13] sm:$0xff]
    %v5143 = vld [vmem:[#allocation13 + $0x8] sm:$0xff]
    %v5144 = vld [vmem:[#allocation13 + $0x10] sm:$0xff]
    %v5145 = vld [vmem:[#allocation13 + $0x18] sm:$0xff]
    %v5146 = vld [vmem:[#allocation13 + $0x20] sm:$0xff]
    %v5147 = vld [vmem:[#allocation13 + $0x28] sm:$0xff]
    %v5148 = vld [vmem:[#allocation13 + $0x30] sm:$0xff]
    %v5149 = vld [vmem:[#allocation13 + $0x38] sm:$0xff]
    %v5150 = vld [vmem:[#allocation13 + $0x40] sm:$0xff]
    %v5151 = vld [vmem:[#allocation13 + $0x48] sm:$0xff]
    %v5152 = vld [vmem:[#allocation13 + $0x50] sm:$0xff]
    %v5153 = vld [vmem:[#allocation13 + $0x58] sm:$0xff]
    %v5154 = vld [vmem:[#allocation13 + $0x60] sm:$0xff]
    %v5155 = vld [vmem:[#allocation13 + $0x68] sm:$0xff]
    %v5156 = vld [vmem:[#allocation13 + $0x70] sm:$0xff]
    %v5157 = vld [vmem:[#allocation13 + $0x78] sm:$0xff]
    %v5158 = vld [vmem:[#allocation13 + $0x80] sm:$0xff]
    %v5159 = vld [vmem:[#allocation13 + $0x88] sm:$0xff]
    %v5160 = vld [vmem:[#allocation13 + $0x90] sm:$0xff]
    %v5161 = vld [vmem:[#allocation13 + $0x98] sm:$0xff]
    %v5162 = vld [vmem:[#allocation13 + $0xa0] sm:$0xff]
    %v5163 = vld [vmem:[#allocation13 + $0xa8] sm:$0xff]
    %v5164 = vld [vmem:[#allocation13 + $0xb0] sm:$0xff]
    %v5165 = vld [vmem:[#allocation13 + $0xb8] sm:$0xff]
    %v5166 = vld [vmem:[#allocation13 + $0xc0] sm:$0xff]
    %v5167 = vld [vmem:[#allocation13 + $0xc8] sm:$0xff]
    %v5168 = vld [vmem:[#allocation13 + $0xd0] sm:$0xff]
    %v5169 = vld [vmem:[#allocation13 + $0xd8] sm:$0xff]
    %v5170 = vld [vmem:[#allocation13 + $0xe0] sm:$0xff]
    %v5171 = vld [vmem:[#allocation13 + $0xe8] sm:$0xff]
    %v5172 = vld [vmem:[#allocation13 + $0xf0] sm:$0xff]
    %v5173 = vld [vmem:[#allocation13 + $0xf8] sm:$0xff]
    %v5174 = vunpack.c.0.s8 %v5142
    %v5175 = vunpack.c.1.s8 %v5142
    %v5176 = vunpack.c.2.s8 %v5142
    %v5177 = vunpack.c.3.s8 %v5142
    %v5178 = vunpack.c.0.s8 %v5143
    %v5179 = vunpack.c.1.s8 %v5143
    %v5180 = vunpack.c.2.s8 %v5143
    %v5181 = vunpack.c.3.s8 %v5143
    %v5182 = vunpack.c.0.s8 %v5144
    %v5183 = vunpack.c.1.s8 %v5144
    %v5184 = vunpack.c.2.s8 %v5144
    %v5185 = vunpack.c.3.s8 %v5144
    %v5186 = vunpack.c.0.s8 %v5145
    %v5187 = vunpack.c.1.s8 %v5145
    %v5188 = vunpack.c.2.s8 %v5145
    %v5189 = vunpack.c.3.s8 %v5145
    %v5190 = vunpack.c.0.s8 %v5146
    %v5191 = vunpack.c.1.s8 %v5146
    %v5192 = vunpack.c.2.s8 %v5146
    %v5193 = vunpack.c.3.s8 %v5146
    %v5194 = vunpack.c.0.s8 %v5147
    %v5195 = vunpack.c.1.s8 %v5147
    %v5196 = vunpack.c.2.s8 %v5147
    %v5197 = vunpack.c.3.s8 %v5147
    %v5198 = vunpack.c.0.s8 %v5148
    %v5199 = vunpack.c.1.s8 %v5148
    %v5200 = vunpack.c.2.s8 %v5148
    %v5201 = vunpack.c.3.s8 %v5148
    %v5202 = vunpack.c.0.s8 %v5149
    %v5203 = vunpack.c.1.s8 %v5149
    %v5204 = vunpack.c.2.s8 %v5149
    %v5205 = vunpack.c.3.s8 %v5149
    %v5206 = vunpack.c.0.s8 %v5150
    %v5207 = vunpack.c.1.s8 %v5150
    %v5208 = vunpack.c.2.s8 %v5150
    %v5209 = vunpack.c.3.s8 %v5150
    %v5210 = vunpack.c.0.s8 %v5151
    %v5211 = vunpack.c.1.s8 %v5151
    %v5212 = vunpack.c.2.s8 %v5151
    %v5213 = vunpack.c.3.s8 %v5151
    %v5214 = vunpack.c.0.s8 %v5152
    %v5215 = vunpack.c.1.s8 %v5152
    %v5216 = vunpack.c.2.s8 %v5152
    %v5217 = vunpack.c.3.s8 %v5152
    %v5218 = vunpack.c.0.s8 %v5153
    %v5219 = vunpack.c.1.s8 %v5153
    %v5220 = vunpack.c.2.s8 %v5153
    %v5221 = vunpack.c.3.s8 %v5153
    %v5222 = vunpack.c.0.s8 %v5154
    %v5223 = vunpack.c.1.s8 %v5154
    %v5224 = vunpack.c.2.s8 %v5154
    %v5225 = vunpack.c.3.s8 %v5154
    %v5226 = vunpack.c.0.s8 %v5155
    %v5227 = vunpack.c.1.s8 %v5155
    %v5228 = vunpack.c.2.s8 %v5155
    %v5229 = vunpack.c.3.s8 %v5155
    %v5230 = vunpack.c.0.s8 %v5156
    %v5231 = vunpack.c.1.s8 %v5156
    %v5232 = vunpack.c.2.s8 %v5156
    %v5233 = vunpack.c.3.s8 %v5156
    %v5234 = vunpack.c.0.s8 %v5157
    %v5235 = vunpack.c.1.s8 %v5157
    %v5236 = vunpack.c.2.s8 %v5157
    %v5237 = vunpack.c.3.s8 %v5157
    %v5238 = vunpack.c.0.s8 %v5158
    %v5239 = vunpack.c.1.s8 %v5158
    %v5240 = vunpack.c.2.s8 %v5158
    %v5241 = vunpack.c.3.s8 %v5158
    %v5242 = vunpack.c.0.s8 %v5159
    %v5243 = vunpack.c.1.s8 %v5159
    %v5244 = vunpack.c.2.s8 %v5159
    %v5245 = vunpack.c.3.s8 %v5159
    %v5246 = vunpack.c.0.s8 %v5160
    %v5247 = vunpack.c.1.s8 %v5160
    %v5248 = vunpack.c.2.s8 %v5160
    %v5249 = vunpack.c.3.s8 %v5160
    %v5250 = vunpack.c.0.s8 %v5161
    %v5251 = vunpack.c.1.s8 %v5161
    %v5252 = vunpack.c.2.s8 %v5161
    %v5253 = vunpack.c.3.s8 %v5161
    %v5254 = vunpack.c.0.s8 %v5162
    %v5255 = vunpack.c.1.s8 %v5162
    %v5256 = vunpack.c.2.s8 %v5162
    %v5257 = vunpack.c.3.s8 %v5162
    %v5258 = vunpack.c.0.s8 %v5163
    %v5259 = vunpack.c.1.s8 %v5163
    %v5260 = vunpack.c.2.s8 %v5163
    %v5261 = vunpack.c.3.s8 %v5163
    %v5262 = vunpack.c.0.s8 %v5164
    %v5263 = vunpack.c.1.s8 %v5164
    %v5264 = vunpack.c.2.s8 %v5164
    %v5265 = vunpack.c.3.s8 %v5164
    %v5266 = vunpack.c.0.s8 %v5165
    %v5267 = vunpack.c.1.s8 %v5165
    %v5268 = vunpack.c.2.s8 %v5165
    %v5269 = vunpack.c.3.s8 %v5165
    %v5270 = vunpack.c.0.s8 %v5166
    %v5271 = vunpack.c.1.s8 %v5166
    %v5272 = vunpack.c.2.s8 %v5166
    %v5273 = vunpack.c.3.s8 %v5166
    %v5274 = vunpack.c.0.s8 %v5167
    %v5275 = vunpack.c.1.s8 %v5167
    %v5276 = vunpack.c.2.s8 %v5167
    %v5277 = vunpack.c.3.s8 %v5167
    %v5278 = vunpack.c.0.s8 %v5168
    %v5279 = vunpack.c.1.s8 %v5168
    %v5280 = vunpack.c.2.s8 %v5168
    %v5281 = vunpack.c.3.s8 %v5168
    %v5282 = vunpack.c.0.s8 %v5169
    %v5283 = vunpack.c.1.s8 %v5169
    %v5284 = vunpack.c.2.s8 %v5169
    %v5285 = vunpack.c.3.s8 %v5169
    %v5286 = vunpack.c.0.s8 %v5170
    %v5287 = vunpack.c.1.s8 %v5170
    %v5288 = vunpack.c.2.s8 %v5170
    %v5289 = vunpack.c.3.s8 %v5170
    %v5290 = vunpack.c.0.s8 %v5171
    %v5291 = vunpack.c.1.s8 %v5171
    %v5292 = vunpack.c.2.s8 %v5171
    %v5293 = vunpack.c.3.s8 %v5171
    %v5294 = vunpack.c.0.s8 %v5172
    %v5295 = vunpack.c.1.s8 %v5172
    %v5296 = vunpack.c.2.s8 %v5172
    %v5297 = vunpack.c.3.s8 %v5172
    %v5298 = vunpack.c.0.s8 %v5173
    %v5299 = vunpack.c.1.s8 %v5173
    %v5300 = vunpack.c.2.s8 %v5173
    %v5301 = vunpack.c.3.s8 %v5173
    %v5302 = vcvt.s32.f32 %v5174
    %v5303 = vcvt.s32.f32 %v5175
    %v5304 = vcvt.s32.f32 %v5176
    %v5305 = vcvt.s32.f32 %v5177
    %v5306 = vcvt.s32.f32 %v5178
    %v5307 = vcvt.s32.f32 %v5179
    %v5308 = vcvt.s32.f32 %v5180
    %v5309 = vcvt.s32.f32 %v5181
    %v5310 = vcvt.s32.f32 %v5182
    %v5311 = vcvt.s32.f32 %v5183
    %v5312 = vcvt.s32.f32 %v5184
    %v5313 = vcvt.s32.f32 %v5185
    %v5314 = vcvt.s32.f32 %v5186
    %v5315 = vcvt.s32.f32 %v5187
    %v5316 = vcvt.s32.f32 %v5188
    %v5317 = vcvt.s32.f32 %v5189
    %v5318 = vcvt.s32.f32 %v5190
    %v5319 = vcvt.s32.f32 %v5191
    %v5320 = vcvt.s32.f32 %v5192
    %v5321 = vcvt.s32.f32 %v5193
    %v5322 = vcvt.s32.f32 %v5194
    %v5323 = vcvt.s32.f32 %v5195
    %v5324 = vcvt.s32.f32 %v5196
    %v5325 = vcvt.s32.f32 %v5197
    %v5326 = vcvt.s32.f32 %v5198
    %v5327 = vcvt.s32.f32 %v5199
    %v5328 = vcvt.s32.f32 %v5200
    %v5329 = vcvt.s32.f32 %v5201
    %v5330 = vcvt.s32.f32 %v5202
    %v5331 = vcvt.s32.f32 %v5203
    %v5332 = vcvt.s32.f32 %v5204
    %v5333 = vcvt.s32.f32 %v5205
    %v5334 = vcvt.s32.f32 %v5206
    %v5335 = vcvt.s32.f32 %v5207
    %v5336 = vcvt.s32.f32 %v5208
    %v5337 = vcvt.s32.f32 %v5209
    %v5338 = vcvt.s32.f32 %v5210
    %v5339 = vcvt.s32.f32 %v5211
    %v5340 = vcvt.s32.f32 %v5212
    %v5341 = vcvt.s32.f32 %v5213
    %v5342 = vcvt.s32.f32 %v5214
    %v5343 = vcvt.s32.f32 %v5215
    %v5344 = vcvt.s32.f32 %v5216
    %v5345 = vcvt.s32.f32 %v5217
    %v5346 = vcvt.s32.f32 %v5218
    %v5347 = vcvt.s32.f32 %v5219
    %v5348 = vcvt.s32.f32 %v5220
    %v5349 = vcvt.s32.f32 %v5221
    %v5350 = vcvt.s32.f32 %v5222
    %v5351 = vcvt.s32.f32 %v5223
    %v5352 = vcvt.s32.f32 %v5224
    %v5353 = vcvt.s32.f32 %v5225
    %v5354 = vcvt.s32.f32 %v5226
    %v5355 = vcvt.s32.f32 %v5227
    %v5356 = vcvt.s32.f32 %v5228
    %v5357 = vcvt.s32.f32 %v5229
    %v5358 = vcvt.s32.f32 %v5230
    %v5359 = vcvt.s32.f32 %v5231
    %v5360 = vcvt.s32.f32 %v5232
    %v5361 = vcvt.s32.f32 %v5233
    %v5362 = vcvt.s32.f32 %v5234
    %v5363 = vcvt.s32.f32 %v5235
    %v5364 = vcvt.s32.f32 %v5236
    %v5365 = vcvt.s32.f32 %v5237
    %v5366 = vcvt.s32.f32 %v5238
    %v5367 = vcvt.s32.f32 %v5239
    %v5368 = vcvt.s32.f32 %v5240
    %v5369 = vcvt.s32.f32 %v5241
    %v5370 = vcvt.s32.f32 %v5242
    %v5371 = vcvt.s32.f32 %v5243
    %v5372 = vcvt.s32.f32 %v5244
    %v5373 = vcvt.s32.f32 %v5245
    %v5374 = vcvt.s32.f32 %v5246
    %v5375 = vcvt.s32.f32 %v5247
    %v5376 = vcvt.s32.f32 %v5248
    %v5377 = vcvt.s32.f32 %v5249
    %v5378 = vcvt.s32.f32 %v5250
    %v5379 = vcvt.s32.f32 %v5251
    %v5380 = vcvt.s32.f32 %v5252
    %v5381 = vcvt.s32.f32 %v5253
    %v5382 = vcvt.s32.f32 %v5254
    %v5383 = vcvt.s32.f32 %v5255
    %v5384 = vcvt.s32.f32 %v5256
    %v5385 = vcvt.s32.f32 %v5257
    %v5386 = vcvt.s32.f32 %v5258
    %v5387 = vcvt.s32.f32 %v5259
    %v5388 = vcvt.s32.f32 %v5260
    %v5389 = vcvt.s32.f32 %v5261
    %v5390 = vcvt.s32.f32 %v5262
    %v5391 = vcvt.s32.f32 %v5263
    %v5392 = vcvt.s32.f32 %v5264
    %v5393 = vcvt.s32.f32 %v5265
    %v5394 = vcvt.s32.f32 %v5266
    %v5395 = vcvt.s32.f32 %v5267
    %v5396 = vcvt.s32.f32 %v5268
    %v5397 = vcvt.s32.f32 %v5269
    %v5398 = vcvt.s32.f32 %v5270
    %v5399 = vcvt.s32.f32 %v5271
    %v5400 = vcvt.s32.f32 %v5272
    %v5401 = vcvt.s32.f32 %v5273
    %v5402 = vcvt.s32.f32 %v5274
    %v5403 = vcvt.s32.f32 %v5275
    %v5404 = vcvt.s32.f32 %v5276
    %v5405 = vcvt.s32.f32 %v5277
    %v5406 = vcvt.s32.f32 %v5278
    %v5407 = vcvt.s32.f32 %v5279
    %v5408 = vcvt.s32.f32 %v5280
    %v5409 = vcvt.s32.f32 %v5281
    %v5410 = vcvt.s32.f32 %v5282
    %v5411 = vcvt.s32.f32 %v5283
    %v5412 = vcvt.s32.f32 %v5284
    %v5413 = vcvt.s32.f32 %v5285
    %v5414 = vcvt.s32.f32 %v5286
    %v5415 = vcvt.s32.f32 %v5287
    %v5416 = vcvt.s32.f32 %v5288
    %v5417 = vcvt.s32.f32 %v5289
    %v5418 = vcvt.s32.f32 %v5290
    %v5419 = vcvt.s32.f32 %v5291
    %v5420 = vcvt.s32.f32 %v5292
    %v5421 = vcvt.s32.f32 %v5293
    %v5422 = vcvt.s32.f32 %v5294
    %v5423 = vcvt.s32.f32 %v5295
    %v5424 = vcvt.s32.f32 %v5296
    %v5425 = vcvt.s32.f32 %v5297
    %v5426 = vcvt.s32.f32 %v5298
    %v5427 = vcvt.s32.f32 %v5299
    %v5428 = vcvt.s32.f32 %v5300
    %v5429 = vcvt.s32.f32 %v5301
    %v5430 = vpack.c.bf16 %v5303, %v5302
    %v5431 = vpack.c.bf16 %v5305, %v5304
    %v5432 = vpack.c.bf16 %v5307, %v5306
    %v5433 = vpack.c.bf16 %v5309, %v5308
    %v5434 = vpack.c.bf16 %v5311, %v5310
    %v5435 = vpack.c.bf16 %v5313, %v5312
    %v5436 = vpack.c.bf16 %v5315, %v5314
    %v5437 = vpack.c.bf16 %v5317, %v5316
    %v5438 = vpack.c.bf16 %v5319, %v5318
    %v5439 = vpack.c.bf16 %v5321, %v5320
    %v5440 = vpack.c.bf16 %v5323, %v5322
    %v5441 = vpack.c.bf16 %v5325, %v5324
    %v5442 = vpack.c.bf16 %v5327, %v5326
    %v5443 = vpack.c.bf16 %v5329, %v5328
    %v5444 = vpack.c.bf16 %v5331, %v5330
    %v5445 = vpack.c.bf16 %v5333, %v5332
    %v5446 = vpack.c.bf16 %v5335, %v5334
    %v5447 = vpack.c.bf16 %v5337, %v5336
    %v5448 = vpack.c.bf16 %v5339, %v5338
    %v5449 = vpack.c.bf16 %v5341, %v5340
    %v5450 = vpack.c.bf16 %v5343, %v5342
    %v5451 = vpack.c.bf16 %v5345, %v5344
    %v5452 = vpack.c.bf16 %v5347, %v5346
    %v5453 = vpack.c.bf16 %v5349, %v5348
    %v5454 = vpack.c.bf16 %v5351, %v5350
    %v5455 = vpack.c.bf16 %v5353, %v5352
    %v5456 = vpack.c.bf16 %v5355, %v5354
    %v5457 = vpack.c.bf16 %v5357, %v5356
    %v5458 = vpack.c.bf16 %v5359, %v5358
    %v5459 = vpack.c.bf16 %v5361, %v5360
    %v5460 = vpack.c.bf16 %v5363, %v5362
    %v5461 = vpack.c.bf16 %v5365, %v5364
    %v5462 = vpack.c.bf16 %v5367, %v5366
    %v5463 = vpack.c.bf16 %v5369, %v5368
    %v5464 = vpack.c.bf16 %v5371, %v5370
    %v5465 = vpack.c.bf16 %v5373, %v5372
    %v5466 = vpack.c.bf16 %v5375, %v5374
    %v5467 = vpack.c.bf16 %v5377, %v5376
    %v5468 = vpack.c.bf16 %v5379, %v5378
    %v5469 = vpack.c.bf16 %v5381, %v5380
    %v5470 = vpack.c.bf16 %v5383, %v5382
    %v5471 = vpack.c.bf16 %v5385, %v5384
    %v5472 = vpack.c.bf16 %v5387, %v5386
    %v5473 = vpack.c.bf16 %v5389, %v5388
    %v5474 = vpack.c.bf16 %v5391, %v5390
    %v5475 = vpack.c.bf16 %v5393, %v5392
    %v5476 = vpack.c.bf16 %v5395, %v5394
    %v5477 = vpack.c.bf16 %v5397, %v5396
    %v5478 = vpack.c.bf16 %v5399, %v5398
    %v5479 = vpack.c.bf16 %v5401, %v5400
    %v5480 = vpack.c.bf16 %v5403, %v5402
    %v5481 = vpack.c.bf16 %v5405, %v5404
    %v5482 = vpack.c.bf16 %v5407, %v5406
    %v5483 = vpack.c.bf16 %v5409, %v5408
    %v5484 = vpack.c.bf16 %v5411, %v5410
    %v5485 = vpack.c.bf16 %v5413, %v5412
    %v5486 = vpack.c.bf16 %v5415, %v5414
    %v5487 = vpack.c.bf16 %v5417, %v5416
    %v5488 = vpack.c.bf16 %v5419, %v5418
    %v5489 = vpack.c.bf16 %v5421, %v5420
    %v5490 = vpack.c.bf16 %v5423, %v5422
    %v5491 = vpack.c.bf16 %v5425, %v5424
    %v5492 = vpack.c.bf16 %v5427, %v5426
    %v5493 = vpack.c.bf16 %v5429, %v5428
    %v5494 = vpack.c.bf16 %v5134, %v5126
    %v5495 = vpack.c.bf16 %v5135, %v5127
    %v5496 = vpack.c.bf16 %v5136, %v5128
    %v5497 = vpack.c.bf16 %v5137, %v5129
    %v5498 = vpack.c.bf16 %v5138, %v5130
    %v5499 = vpack.c.bf16 %v5139, %v5131
    %v5500 = vpack.c.bf16 %v5140, %v5132
    %v5501 = vpack.c.bf16 %v5141, %v5133
    %5502 = vmatpush.bf16.msra.mxu0 %v5437
    %5503 = vmatpush.bf16.msra.mxu0 %v5436
    %5504 = vmatpush.bf16.msra.mxu0 %v5435
    %5505 = vmatpush.bf16.msra.mxu0 %v5434
    %5506 = vmatpush.bf16.msra.mxu0 %v5433
    %5507 = vmatpush.bf16.msra.mxu0 %v5432
    %5508 = vmatpush.bf16.msra.mxu0 %v5431
    %5509 = vmatpush.bf16.msra.mxu0 %v5430
    %5510 = vmatmul.bf16.gmra.mxu0 %v5494
    %v5511 = vpop.f32.mrf.mxu0
    %v5512 = vadd.f32 0.0, %v5511
    %v5513 = vpop.f32.mrf.mxu0
    %v5514 = vadd.f32 0.0, %v5513
    %5515 = vdwg.mxu0
    %5516 = vmatpush.bf16.msra.mxu0 %v5445
    %5517 = vmatpush.bf16.msra.mxu0 %v5444
    %5518 = vmatpush.bf16.msra.mxu0 %v5443
    %5519 = vmatpush.bf16.msra.mxu0 %v5442
    %5520 = vmatpush.bf16.msra.mxu0 %v5441
    %5521 = vmatpush.bf16.msra.mxu0 %v5440
    %5522 = vmatpush.bf16.msra.mxu0 %v5439
    %5523 = vmatpush.bf16.msra.mxu0 %v5438
    %5524 = vmatmul.bf16.gmra.mxu0 %v5495
    %v5525 = vpop.f32.mrf.mxu0
    %v5526 = vadd.f32 %v5512, %v5525
    %v5527 = vpop.f32.mrf.mxu0
    %v5528 = vadd.f32 %v5514, %v5527
    %5529 = vdwg.mxu0
    %5530 = vmatpush.bf16.msra.mxu0 %v5453
    %5531 = vmatpush.bf16.msra.mxu0 %v5452
    %5532 = vmatpush.bf16.msra.mxu0 %v5451
    %5533 = vmatpush.bf16.msra.mxu0 %v5450
    %5534 = vmatpush.bf16.msra.mxu0 %v5449
    %5535 = vmatpush.bf16.msra.mxu0 %v5448
    %5536 = vmatpush.bf16.msra.mxu0 %v5447
    %5537 = vmatpush.bf16.msra.mxu0 %v5446
    %5538 = vmatmul.bf16.gmra.mxu0 %v5496
    %v5539 = vpop.f32.mrf.mxu0
    %v5540 = vadd.f32 %v5526, %v5539
    %v5541 = vpop.f32.mrf.mxu0
    %v5542 = vadd.f32 %v5528, %v5541
    %5543 = vdwg.mxu0
    %5544 = vmatpush.bf16.msra.mxu0 %v5461
    %5545 = vmatpush.bf16.msra.mxu0 %v5460
    %5546 = vmatpush.bf16.msra.mxu0 %v5459
    %5547 = vmatpush.bf16.msra.mxu0 %v5458
    %5548 = vmatpush.bf16.msra.mxu0 %v5457
    %5549 = vmatpush.bf16.msra.mxu0 %v5456
    %5550 = vmatpush.bf16.msra.mxu0 %v5455
    %5551 = vmatpush.bf16.msra.mxu0 %v5454
    %5552 = vmatmul.bf16.gmra.mxu0 %v5497
    %v5553 = vpop.f32.mrf.mxu0
    %v5554 = vadd.f32 %v5540, %v5553
    %v5555 = vpop.f32.mrf.mxu0
    %v5556 = vadd.f32 %v5542, %v5555
    %5557 = vdwg.mxu0
    %5558 = vmatpush.bf16.msra.mxu0 %v5469
    %5559 = vmatpush.bf16.msra.mxu0 %v5468
    %5560 = vmatpush.bf16.msra.mxu0 %v5467
    %5561 = vmatpush.bf16.msra.mxu0 %v5466
    %5562 = vmatpush.bf16.msra.mxu0 %v5465
    %5563 = vmatpush.bf16.msra.mxu0 %v5464
    %5564 = vmatpush.bf16.msra.mxu0 %v5463
    %5565 = vmatpush.bf16.msra.mxu0 %v5462
    %5566 = vmatmul.bf16.gmra.mxu0 %v5498
    %v5567 = vpop.f32.mrf.mxu0
    %v5568 = vadd.f32 %v5554, %v5567
    %v5569 = vpop.f32.mrf.mxu0
    %v5570 = vadd.f32 %v5556, %v5569
    %5571 = vdwg.mxu0
    %5572 = vmatpush.bf16.msra.mxu0 %v5477
    %5573 = vmatpush.bf16.msra.mxu0 %v5476
    %5574 = vmatpush.bf16.msra.mxu0 %v5475
    %5575 = vmatpush.bf16.msra.mxu0 %v5474
    %5576 = vmatpush.bf16.msra.mxu0 %v5473
    %5577 = vmatpush.bf16.msra.mxu0 %v5472
    %5578 = vmatpush.bf16.msra.mxu0 %v5471
    %5579 = vmatpush.bf16.msra.mxu0 %v5470
    %5580 = vmatmul.bf16.gmra.mxu0 %v5499
    %v5581 = vpop.f32.mrf.mxu0
    %v5582 = vadd.f32 %v5568, %v5581
    %v5583 = vpop.f32.mrf.mxu0
    %v5584 = vadd.f32 %v5570, %v5583
    %5585 = vdwg.mxu0
    %5586 = vmatpush.bf16.msra.mxu0 %v5485
    %5587 = vmatpush.bf16.msra.mxu0 %v5484
    %5588 = vmatpush.bf16.msra.mxu0 %v5483
    %5589 = vmatpush.bf16.msra.mxu0 %v5482
    %5590 = vmatpush.bf16.msra.mxu0 %v5481
    %5591 = vmatpush.bf16.msra.mxu0 %v5480
    %5592 = vmatpush.bf16.msra.mxu0 %v5479
    %5593 = vmatpush.bf16.msra.mxu0 %v5478
    %5594 = vmatmul.bf16.gmra.mxu0 %v5500
    %v5595 = vpop.f32.mrf.mxu0
    %v5596 = vadd.f32 %v5582, %v5595
    %v5597 = vpop.f32.mrf.mxu0
    %v5598 = vadd.f32 %v5584, %v5597
    %5599 = vdwg.mxu0
    %5600 = vmatpush.bf16.msra.mxu0 %v5493
    %5601 = vmatpush.bf16.msra.mxu0 %v5492
    %5602 = vmatpush.bf16.msra.mxu0 %v5491
    %5603 = vmatpush.bf16.msra.mxu0 %v5490
    %5604 = vmatpush.bf16.msra.mxu0 %v5489
    %5605 = vmatpush.bf16.msra.mxu0 %v5488
    %5606 = vmatpush.bf16.msra.mxu0 %v5487
    %5607 = vmatpush.bf16.msra.mxu0 %v5486
    %5608 = vmatmul.bf16.gmra.mxu0 %v5501
    %v5609 = vpop.f32.mrf.mxu0
    %v5610 = vadd.f32 %v5596, %v5609
    %v5611 = vpop.f32.mrf.mxu0
    %v5612 = vadd.f32 %v5598, %v5611
    %5613 = vdwg.mxu0
    %v5614 = vld [vmem:[%s7] sm:$0x1]
    %v5616 = vperm.slane %v5614, 0
    %v5618 = vmul.f32 %v5610, %v5616
    %v5619 = vmul.f32 %v5612, %v5616
    %v5620 = vld [vmem:[%s8] sm:$0x1]
    %v5622 = vperm.slane %v5620, 0
    %v5624 = vadd.f32 %v5618, %v5622
    %v5625 = vadd.f32 %v5619, %v5622
    %5626 = vst [vmem:[#allocation14] sm:$0xff] %v5624
    %5627 = vst [vmem:[#allocation14 + $0x8] sm:$0xff] %v5625
    // Predicated region
    $region66: #{tpu_custom_call.1} parent=1 // pred_check
      _
    $region67: #{tpu_custom_call.1} parent=1 // pred_check_branch
      %5629 = sbr.rel (0) target = $region69
    $region68: #{tpu_custom_call.1} parent=1 // pred_region
      %5631 = vsyncadd [#allocation4], 0
      %s5632 = sshll.u32 [#allocation14], 4
      %s5633 = int_to_ptr.vmem [resolvable:$true] %s5632
      %s5634 = sshll.u32 %s9, 4
      %s5635 = int_to_ptr.hbm [resolvable:$true] %s5634
      %5640 = dma.vmem_to_hbm [thread:$0]  %s5633, 256, %s5635, [#allocation4], 128, 128, 8
    $region69: #{tpu_custom_call.1} parent=1 // pred_fallthru
      _
    // Predicated region
    $region70: #{tpu_custom_call.1} parent=1 // pred_check
      _
    $region71: #{tpu_custom_call.1} parent=1 // pred_check_branch
      %5642 = sbr.rel (0) target = $region73
    $region72: #{tpu_custom_call.1} parent=1 // pred_region
      %5644 = dma.done [#allocation4], 256
    $region73: #{tpu_custom_call.1} parent=1 // pred_fallthru
      _
    %5645 = vsyncpa [#allocation3], 1
    %5646 = vsyncpa [#allocation6], 1
    %5647 = vsyncpa [#allocation9], 1
    %5648 = vsyncpa [#allocation12], 1
    %5649 = vsyncpa [#allocation4], 1

</llo_original>
